<compile_context>
chip_gen: v5e
topology: v5e:2x2
jax: 0.10.0
libtpu: 0.0.40
codegen_flags: <defaults>
</compile_context>

<pallas_src>
import math
from functools import partial

import jax
import jax.numpy as jnp
from jax import lax
from jax.experimental import pallas as pl
from jax.experimental.pallas import tpu as pltpu

# ----------------------- config (small synthetic sizes) -----------------------
B, S, D, H, F, V = 2, 8, 32, 4, 64, 128
DH = D // H
PAD = 1
EPS = 1e-5
NEG = -1e9
EMB_SCALE = math.sqrt(D)

# -------- packed-slab layout: (D, ·) weights, lane-padded to 128 --------------
W_ENC_QKV, W_ENC_WO, W_ENC_W1 = 0, 1, 2
W_DEC_SQKV, W_DEC_SWO = 3, 4
W_DEC_CWQ, W_DEC_CWKV, W_DEC_CWO = 5, 6, 7
W_DEC_W1, W_EMB_T = 8, 9
N_WD = 10

# -------- packed-slab layout: bias / LN / pos rows, lane-padded to 128 --------
R_ENC_LNG, R_ENC_LNB = 0, 4          # 4 rows each: emb, attn, ffn, final
R_DEC_LNG, R_DEC_LNB = 8, 13         # 5 rows each: emb, self, cross, ffn, final
R_ENC_BQKV, R_ENC_BO, R_ENC_B1, R_ENC_B2 = 18, 19, 20, 21
R_DEC_SBQKV, R_DEC_SBO = 22, 23
R_DEC_CBQ, R_DEC_CBKV, R_DEC_CBO = 24, 25, 26
R_DEC_B1, R_DEC_B2 = 27, 28
R_FLB = 29                           # final_logits_bias (width V)
R_POS = 30                           # S positional rows (width D)
N_VEC = R_POS + S                    # 38


# ------------------------------- fused kernel ---------------------------------
def _fused_kernel(src_ref, dec_ref, lab_ref, pmask_ref,
                  emb_ref, wd_ref, wf_ref, vec_ref,
                  logits_ref, preds_ref, lsum_ref, lcnt_ref):
    vec = vec_ref[...]                               # (N_VEC, 128)
    pos = vec[R_POS:R_POS + S, :D]                   # (S, D) positional emb
    pad_add = pmask_ref[...].reshape(1, S)           # additive key-pad mask

    def ln(x, rg, rb):
        g = vec[rg:rg + 1, :D]
        bb = vec[rb:rb + 1, :D]
        mu = jnp.mean(x, axis=-1, keepdims=True)
        xc = x - mu
        var = jnp.mean(xc * xc, axis=-1, keepdims=True)
        return xc * lax.rsqrt(var + EPS) * g + bb

    def mha(q_all, k_all, v_all, add_mask, wo):
        # 1/sqrt(DH) pre-folded into the Q weights; single Wo matmul at the end.
        ctx = []
        for hh in range(H):                          # H=4, unrolled at trace time
            lo = hh * DH
            s = lax.dot_general(q_all[:, lo:lo + DH], k_all[:, lo:lo + DH],
                                dimension_numbers=(((1,), (1,)), ((), ())),
                                preferred_element_type=jnp.float32) + add_mask
            m = jnp.max(s, axis=-1, keepdims=True)
            p = jnp.exp(s - m)
            p = p * pl.reciprocal(jnp.sum(p, axis=-1, keepdims=True), approx=True)
            ctx.append(jnp.dot(p, v_all[:, lo:lo + DH],
                               preferred_element_type=jnp.float32))
        ctx = jnp.concatenate(ctx, axis=-1)          # (Sq, D)
        return jnp.dot(ctx, wo, preferred_element_type=jnp.float32)

    iota_v = lax.broadcasted_iota(jnp.int32, (S, V), 1)
    emb_tab = emb_ref[...]                           # (V, D) tied embedding

    # ------------------------------ encoder ----------------------------------
    onehot = jnp.where(iota_v == src_ref[...], EMB_SCALE, 0.0)
    x = jnp.dot(onehot, emb_tab, preferred_element_type=jnp.float32) + pos
    x = ln(x, R_ENC_LNG + 0, R_ENC_LNB + 0)          # post-embedding LN
    # pre-LN self-attention (fused (D,3D) QKV)
    h = ln(x, R_ENC_LNG + 1, R_ENC_LNB + 1)
    qkv = jnp.dot(h, wd_ref[W_ENC_QKV, :, :3 * D],
                  preferred_element_type=jnp.float32) \
        + vec[R_ENC_BQKV:R_ENC_BQKV + 1, :3 * D]
    x = x + mha(qkv[:, :D], qkv[:, D:2 * D], qkv[:, 2 * D:], pad_add,
                wd_ref[W_ENC_WO, :, :D]) + vec[R_ENC_BO:R_ENC_BO + 1, :D]
    # pre-LN FFN
    h = ln(x, R_ENC_LNG + 2, R_ENC_LNB + 2)
    # TODO(synk): MBart uses exact (erf) GELU; tanh approximation used here.
    ff = jax.nn.gelu(jnp.dot(h, wd_ref[W_ENC_W1, :, :F],
                             preferred_element_type=jnp.float32)
                     + vec[R_ENC_B1:R_ENC_B1 + 1, :F], approximate=True)
    x = x + jnp.dot(ff, wf_ref[0], preferred_element_type=jnp.float32) \
          + vec[R_ENC_B2:R_ENC_B2 + 1, :D]
    enc = ln(x, R_ENC_LNG + 3, R_ENC_LNB + 3)        # encoder final LN

    # ------------------------------ decoder ----------------------------------
    row = lax.broadcasted_iota(jnp.int32, (S, S), 0)
    col = lax.broadcasted_iota(jnp.int32, (S, S), 1)
    causal = jnp.where(col <= row, 0.0, NEG)

    onehot = jnp.where(iota_v == dec_ref[...], EMB_SCALE, 0.0)
    y = jnp.dot(onehot, emb_tab, preferred_element_type=jnp.float32) + pos
    y = ln(y, R_DEC_LNG + 0, R_DEC_LNB + 0)          # post-embedding LN
    # causal self-attention
    h = ln(y, R_DEC_LNG + 1, R_DEC_LNB + 1)
    qkv = jnp.dot(h, wd_ref[W_DEC_SQKV, :, :3 * D],
                  preferred_element_type=jnp.float32) \
        + vec[R_DEC_SBQKV:R_DEC_SBQKV + 1, :3 * D]
    y = y + mha(qkv[:, :D], qkv[:, D:2 * D], qkv[:, 2 * D:], causal,
                wd_ref[W_DEC_SWO, :, :D]) + vec[R_DEC_SBO:R_DEC_SBO + 1, :D]
    # cross-attention (K/V from encoder output, fused (D,2D) KV matmul)
    h = ln(y, R_DEC_LNG + 2, R_DEC_LNB + 2)
    q = jnp.dot(h, wd_ref[W_DEC_CWQ, :, :D],
                preferred_element_type=jnp.float32) + vec[R_DEC_CBQ:R_DEC_CBQ + 1, :D]
    kv = jnp.dot(enc, wd_ref[W_DEC_CWKV, :, :2 * D],
                 preferred_element_type=jnp.float32) \
        + vec[R_DEC_CBKV:R_DEC_CBKV + 1, :2 * D]
    y = y + mha(q, kv[:, :D], kv[:, D:], pad_add,
                wd_ref[W_DEC_CWO, :, :D]) + vec[R_DEC_CBO:R_DEC_CBO + 1, :D]
    # pre-LN FFN
    h = ln(y, R_DEC_LNG + 3, R_DEC_LNB + 3)
    ff = jax.nn.gelu(jnp.dot(h, wd_ref[W_DEC_W1, :, :F],
                             preferred_element_type=jnp.float32)
                     + vec[R_DEC_B1:R_DEC_B1 + 1, :F], approximate=True)
    y = y + jnp.dot(ff, wf_ref[1], preferred_element_type=jnp.float32) \
          + vec[R_DEC_B2:R_DEC_B2 + 1, :D]
    dec = ln(y, R_DEC_LNG + 4, R_DEC_LNB + 4)        # decoder final LN

    # ---------------- LM head + softmax/argmax preds + masked CE -------------
    logits = jnp.dot(dec, wd_ref[W_EMB_T], preferred_element_type=jnp.float32) \
           + vec[R_FLB:R_FLB + 1, :]                 # (S, V), lane-dense output
    logits_ref[...] = logits

    mx = jnp.max(logits, axis=-1, keepdims=True)
    # argmax(softmax(logits)) == argmax(logits); first-max tie-break.
    preds_ref[...] = jnp.min(jnp.where(logits == mx, iota_v, V),
                             axis=-1, keepdims=True)

    lab = lab_ref[...]                               # (S, 1) int32
    lse = mx + jnp.log(jnp.sum(jnp.exp(logits - mx), axis=-1, keepdims=True))
    valid = lab != -100
    safe = jnp.where(valid, lab, 0)
    tgt = jnp.sum(jnp.where(iota_v == safe, logits, 0.0), axis=-1, keepdims=True)
    nll = jnp.where(valid, lse - tgt, 0.0)
    lsum_ref[0] = jnp.sum(nll, axis=0, keepdims=True)
    lcnt_ref[0] = jnp.sum(valid.astype(jnp.float32), axis=0, keepdims=True)


# ------------------------------ pallas_call wrapper ----------------------------
def fused_forward(p, src_col, dec_col, lab_col, pmask):
    return pl.pallas_call(
        _fused_kernel,
        out_shape=(jax.ShapeDtypeStruct((B * S, V), jnp.float32),   # logits
                   jax.ShapeDtypeStruct((B * S, 1), jnp.int32),     # preds
                   jax.ShapeDtypeStruct((B, 1, 1), jnp.float32),    # nll sum / batch
                   jax.ShapeDtypeStruct((B, 1, 1), jnp.float32)),   # valid cnt / batch
        grid=(B,),
        in_specs=[
            pl.BlockSpec((S, 1), lambda b: (b, 0)),                 # src ids
            pl.BlockSpec((S, 1), lambda b: (b, 0)),                 # decoder ids
            pl.BlockSpec((S, 1), lambda b: (b, 0)),                 # labels
            pl.BlockSpec((1, 1, S), lambda b: (b, 0, 0)),           # additive pad mask
            pl.BlockSpec((V, D), lambda b: (0, 0)),                 # embedding table
            pl.BlockSpec((N_WD, D, 128), lambda b: (0, 0, 0)),      # packed (D,·) weights
            pl.BlockSpec((2, F, D), lambda b: (0, 0, 0)),           # packed FFN-out weights
            pl.BlockSpec((N_VEC, 128), lambda b: (0, 0)),           # biases/LN/pos/flb
        ],
        out_specs=(pl.BlockSpec((S, V), lambda b: (b, 0)),
                   pl.BlockSpec((S, 1), lambda b: (b, 0)),
                   pl.BlockSpec((1, 1, 1), lambda b: (b, 0, 0)),
                   pl.BlockSpec((1, 1, 1), lambda b: (b, 0, 0))),
        compiler_params=pltpu.CompilerParams(dimension_semantics=("parallel",)),
    )(src_col, dec_col, lab_col, pmask, p["emb"], p["wd"], p["wf"], p["vec"])


# -------------------------------- parameters -----------------------------------
def init_params(key):
    k = [key]

    def nk():
        k[0], sub = jax.random.split(k[0])
        return sub

    def normal(shape):
        return 0.02 * jax.random.normal(nk(), shape, dtype=jnp.float32)

    attn_scale = 1.0 / math.sqrt(DH)

    emb = normal((V, D))
    pos = normal((S, D))

    enc_wqkv = normal((D, 3 * D)).at[:, :D].multiply(attn_scale)  # fold 1/sqrt(DH)
    enc_wo = normal((D, D))
    enc_w1 = normal((D, F))
    enc_w2 = normal((F, D))

    dec_s_wqkv = normal((D, 3 * D)).at[:, :D].multiply(attn_scale)
    dec_s_wo = normal((D, D))
    dec_c_wq = normal((D, D)) * attn_scale
    dec_c_wkv = normal((D, 2 * D))
    dec_c_wo = normal((D, D))
    dec_w1 = normal((D, F))
    dec_w2 = normal((F, D))

    # pack all (D, ·) weights (incl. tied LM head emb.T) into one lane-padded slab
    wd = jnp.zeros((N_WD, D, 128), jnp.float32)

    def put(slab, i, w):
        return slab.at[i, :, :w.shape[1]].set(w)

    wd = put(wd, W_ENC_QKV, enc_wqkv)
    wd = put(wd, W_ENC_WO, enc_wo)
    wd = put(wd, W_ENC_W1, enc_w1)
    wd = put(wd, W_DEC_SQKV, dec_s_wqkv)
    wd = put(wd, W_DEC_SWO, dec_s_wo)
    wd = put(wd, W_DEC_CWQ, dec_c_wq)
    wd = put(wd, W_DEC_CWKV, dec_c_wkv)
    wd = put(wd, W_DEC_CWO, dec_c_wo)
    wd = put(wd, W_DEC_W1, dec_w1)
    wd = put(wd, W_EMB_T, emb.T)                    # (D, V), V on lane axis

    wf = jnp.stack([enc_w2, dec_w2], axis=0)        # (2, F, D)

    # biases (zero), LN gamma/beta, final_logits_bias, positional rows
    vec = jnp.zeros((N_VEC, 128), jnp.float32)
    vec = vec.at[R_ENC_LNG:R_ENC_LNG + 4, :D].set(1.0)
    vec = vec.at[R_DEC_LNG:R_DEC_LNG + 5, :D].set(1.0)
    vec = vec.at[R_POS:R_POS + S, :D].set(pos)

    return {"emb": emb, "wd": wd, "wf": wf, "vec": vec}


# --------------------------------- forward (glue) --------------------------------
def transformer_with_tr_forward(params, src_ids, attn_masks, labels):
    # labels[labels == pad_token_id] = -100
    labels = jnp.where(labels == PAD, -100, labels)

    # MBart shift_tokens_right: move the last non-pad token to position 0.
    lab_pad = jnp.where(labels == -100, PAD, labels)
    eos_idx = jnp.sum((lab_pad != PAD).astype(jnp.int32), axis=1) - 1
    start_tok = jnp.take_along_axis(lab_pad, eos_idx[:, None], axis=1)
    dec_ids = jnp.concatenate([start_tok, lab_pad[:, :-1]], axis=1)

    src_col = src_ids.reshape(B * S, 1).astype(jnp.int32)
    dec_col = dec_ids.reshape(B * S, 1).astype(jnp.int32)
    lab_col = labels.reshape(B * S, 1).astype(jnp.int32)
    # additive key-padding mask: 0 where attended, -1e9 where padded
    pmask = ((attn_masks.astype(jnp.float32) - 1.0) * 1e9).reshape(B, 1, S)

    logits_flat, preds_flat, lsum, lcnt = fused_forward(
        params, src_col, dec_col, lab_col, pmask)

    loss = jnp.sum(lsum) / jnp.maximum(jnp.sum(lcnt), 1.0)
    return {"loss": loss,
            "logits": logits_flat.reshape(B, S, V),
            "preds": preds_flat.reshape(B, S)}


# -------------------------------------- main --------------------------------------
if __name__ == "__main__":
    root = jax.random.PRNGKey(0)
    kp, k1, k2 = jax.random.split(root, 3)
    params = init_params(kp)
    src_ids = jax.random.randint(k1, (B, S), 2, V, dtype=jnp.int32)
    labels = jax.random.randint(k2, (B, S), 2, V, dtype=jnp.int32)
    labels = labels.at[:, -2:].set(PAD)                 # exercise pad -> -100 path
    attn_masks = jnp.ones((B, S), jnp.int32).at[:, -1].set(0)

    fwd = jax.jit(partial(transformer_with_tr_forward, params))
    out = jax.block_until_ready(fwd(src_ids, attn_masks, labels))
    preds_np = jax.device_get(out["preds"])             # mirrors .cpu().numpy()
    assert out["logits"].shape == (B, S, V) and preds_np.shape == (B, S)
    assert bool(jnp.isfinite(out["loss"]))
    print("KERNEL_OK")
</pallas_src>

<mosaic_0001>
module attributes {stable_mosaic.version = 11 : i64} {
  func.func @_fused_kernel(%arg0: i32, %arg1: memref<8x1xi32, #tpu.memory_space<vmem>>, %arg2: memref<8x1xi32, #tpu.memory_space<vmem>>, %arg3: memref<8x1xi32, #tpu.memory_space<vmem>>, %arg4: memref<1x1x8xf32, #tpu.memory_space<vmem>>, %arg5: memref<128x32xf32, #tpu.memory_space<vmem>>, %arg6: memref<10x32x128xf32, #tpu.memory_space<vmem>>, %arg7: memref<2x64x32xf32, #tpu.memory_space<vmem>>, %arg8: memref<38x128xf32, #tpu.memory_space<vmem>>, %arg9: memref<8x128xf32, #tpu.memory_space<vmem>>, %arg10: memref<8x1xi32, #tpu.memory_space<vmem>>, %arg11: memref<1x1x1xf32, #tpu.memory_space<vmem>>, %arg12: memref<1x1x1xf32, #tpu.memory_space<vmem>>) attributes {dimension_semantics = [#tpu.dimension_semantics<parallel>], iteration_bounds = array<i64: 2>, scalar_prefetch = 0 : i64, scratch_operands = 0 : i64, tpu.core_type = #tpu.core_type<tc>, window_params = [{transform_indices = @transform_0, window_bounds = array<i64: 8, 1>}, {transform_indices = @transform_1, window_bounds = array<i64: 8, 1>}, {transform_indices = @transform_2, window_bounds = array<i64: 8, 1>}, {transform_indices = @transform_3, window_bounds = array<i64: 1, 1, 8>}, {pipeline_mode = #tpu.pipeline_mode<synchronous>, transform_indices = @transform_4, window_bounds = array<i64: 128, 32>}, {pipeline_mode = #tpu.pipeline_mode<synchronous>, transform_indices = @transform_5, window_bounds = array<i64: 10, 32, 128>}, {pipeline_mode = #tpu.pipeline_mode<synchronous>, transform_indices = @transform_6, window_bounds = array<i64: 2, 64, 32>}, {pipeline_mode = #tpu.pipeline_mode<synchronous>, transform_indices = @transform_7, window_bounds = array<i64: 38, 128>}, {transform_indices = @transform_8, window_bounds = array<i64: 8, 128>}, {transform_indices = @transform_9, window_bounds = array<i64: 8, 1>}, {transform_indices = @transform_10, window_bounds = array<i64: 1, 1, 1>}, {transform_indices = @transform_11, window_bounds = array<i64: 1, 1, 1>}]} {
    %c0 = arith.constant 0 : index
    %c0_0 = arith.constant 0 : index
    %0 = vector.load %arg8[%c0, %c0_0] : memref<38x128xf32, #tpu.memory_space<vmem>>, vector<38x128xf32>
    %1 = vector.extract_strided_slice %0 {offsets = [30, 0], sizes = [8, 32], strides = [1, 1]} : vector<38x128xf32> to vector<8x32xf32>
    %c0_1 = arith.constant 0 : index
    %c0_2 = arith.constant 0 : index
    %c0_3 = arith.constant 0 : index
    %2 = vector.load %arg4[%c0_1, %c0_2, %c0_3] : memref<1x1x8xf32, #tpu.memory_space<vmem>>, vector<1x1x8xf32>
    %3 = vector.shape_cast %2 : vector<1x1x8xf32> to vector<1x8xf32>
    %4 = tpu.iota {dimensions = array<i32: 1>} : vector<8x128xi32>
    %c0_4 = arith.constant 0 : index
    %c0_5 = arith.constant 0 : index
    %5 = vector.load %arg5[%c0_4, %c0_5] : memref<128x32xf32, #tpu.memory_space<vmem>>, vector<128x32xf32>
    %c0_6 = arith.constant 0 : index
    %c0_7 = arith.constant 0 : index
    %6 = vector.load %arg1[%c0_6, %c0_7] : memref<8x1xi32, #tpu.memory_space<vmem>>, vector<8x1xi32>
    %7 = vector.broadcast %6 : vector<8x1xi32> to vector<8x128xi32>
    %8 = arith.cmpi eq, %4, %7 : vector<8x128xi32>
    %cst = arith.constant 5.65685415 : f32
    %cst_8 = arith.constant 0.000000e+00 : f32
    %9 = vector.broadcast %cst : f32 to vector<8x128xf32>
    %10 = vector.broadcast %cst_8 : f32 to vector<8x128xf32>
    %11 = arith.select %8, %9, %10 : vector<8x128xi1>, vector<8x128xf32>
    %cst_9 = arith.constant dense<0.000000e+00> : vector<8x32xf32>
    %12 = tpu.matmul %11, %5, %cst_9 {dimension_numbers = #tpu.dot_dimension_numbers<[1], [0], [0], [1], [0, 0, 1, 1], [], []>} : vector<8x128xf32>, vector<128x32xf32>, vector<8x32xf32> -> vector<8x32xf32>
    %13 = arith.addf %12, %1 : vector<8x32xf32>
    %14 = vector.extract_strided_slice %0 {offsets = [0, 0], sizes = [1, 32], strides = [1, 1]} : vector<38x128xf32> to vector<1x32xf32>
    %15 = vector.extract_strided_slice %0 {offsets = [4, 0], sizes = [1, 32], strides = [1, 1]} : vector<38x128xf32> to vector<1x32xf32>
    %cst_10 = arith.constant dense<0.000000e+00> : vector<8xf32>
    %16 = vector.multi_reduction <add>, %13, %cst_10 [1] : vector<8x32xf32> to vector<8xf32>
    %17 = vector.shape_cast %16 : vector<8xf32> to vector<8x1xf32>
    %cst_11 = arith.constant 3.200000e+01 : f32
    %18 = vector.broadcast %cst_11 : f32 to vector<8x1xf32>
    %19 = arith.divf %17, %18 : vector<8x1xf32>
    %20 = vector.broadcast %19 : vector<8x1xf32> to vector<8x32xf32>
    %21 = arith.subf %13, %20 : vector<8x32xf32>
    %22 = arith.mulf %21, %21 : vector<8x32xf32>
    %cst_12 = arith.constant dense<0.000000e+00> : vector<8xf32>
    %23 = vector.multi_reduction <add>, %22, %cst_12 [1] : vector<8x32xf32> to vector<8xf32>
    %24 = vector.shape_cast %23 : vector<8xf32> to vector<8x1xf32>
    %cst_13 = arith.constant 3.200000e+01 : f32
    %25 = vector.broadcast %cst_13 : f32 to vector<8x1xf32>
    %26 = arith.divf %24, %25 : vector<8x1xf32>
    %cst_14 = arith.constant 9.99999974E-6 : f32
    %27 = vector.broadcast %cst_14 : f32 to vector<8x1xf32>
    %28 = arith.addf %26, %27 : vector<8x1xf32>
    %29 = math.rsqrt %28 : vector<8x1xf32>
    %30 = vector.broadcast %29 : vector<8x1xf32> to vector<8x32xf32>
    %31 = arith.mulf %21, %30 : vector<8x32xf32>
    %32 = vector.broadcast %14 : vector<1x32xf32> to vector<8x32xf32>
    %33 = arith.mulf %31, %32 : vector<8x32xf32>
    %34 = vector.broadcast %15 : vector<1x32xf32> to vector<8x32xf32>
    %35 = arith.addf %33, %34 : vector<8x32xf32>
    %36 = vector.extract_strided_slice %0 {offsets = [1, 0], sizes = [1, 32], strides = [1, 1]} : vector<38x128xf32> to vector<1x32xf32>
    %37 = vector.extract_strided_slice %0 {offsets = [5, 0], sizes = [1, 32], strides = [1, 1]} : vector<38x128xf32> to vector<1x32xf32>
    %cst_15 = arith.constant dense<0.000000e+00> : vector<8xf32>
    %38 = vector.multi_reduction <add>, %35, %cst_15 [1] : vector<8x32xf32> to vector<8xf32>
    %39 = vector.shape_cast %38 : vector<8xf32> to vector<8x1xf32>
    %cst_16 = arith.constant 3.200000e+01 : f32
    %40 = vector.broadcast %cst_16 : f32 to vector<8x1xf32>
    %41 = arith.divf %39, %40 : vector<8x1xf32>
    %42 = vector.broadcast %41 : vector<8x1xf32> to vector<8x32xf32>
    %43 = arith.subf %35, %42 : vector<8x32xf32>
    %44 = arith.mulf %43, %43 : vector<8x32xf32>
    %cst_17 = arith.constant dense<0.000000e+00> : vector<8xf32>
    %45 = vector.multi_reduction <add>, %44, %cst_17 [1] : vector<8x32xf32> to vector<8xf32>
    %46 = vector.shape_cast %45 : vector<8xf32> to vector<8x1xf32>
    %cst_18 = arith.constant 3.200000e+01 : f32
    %47 = vector.broadcast %cst_18 : f32 to vector<8x1xf32>
    %48 = arith.divf %46, %47 : vector<8x1xf32>
    %cst_19 = arith.constant 9.99999974E-6 : f32
    %49 = vector.broadcast %cst_19 : f32 to vector<8x1xf32>
    %50 = arith.addf %48, %49 : vector<8x1xf32>
    %51 = math.rsqrt %50 : vector<8x1xf32>
    %52 = vector.broadcast %51 : vector<8x1xf32> to vector<8x32xf32>
    %53 = arith.mulf %43, %52 : vector<8x32xf32>
    %54 = vector.broadcast %36 : vector<1x32xf32> to vector<8x32xf32>
    %55 = arith.mulf %53, %54 : vector<8x32xf32>
    %56 = vector.broadcast %37 : vector<1x32xf32> to vector<8x32xf32>
    %57 = arith.addf %55, %56 : vector<8x32xf32>
    %c0_20 = arith.constant 0 : index
    %c0_21 = arith.constant 0 : index
    %c0_22 = arith.constant 0 : index
    %58 = vector.load %arg6[%c0_20, %c0_21, %c0_22] : memref<10x32x128xf32, #tpu.memory_space<vmem>>, vector<1x32x96xf32>
    %59 = vector.shape_cast %58 : vector<1x32x96xf32> to vector<32x96xf32>
    %cst_23 = arith.constant dense<0.000000e+00> : vector<8x96xf32>
    %60 = tpu.matmul %57, %59, %cst_23 {dimension_numbers = #tpu.dot_dimension_numbers<[1], [0], [0], [1], [0, 0, 1, 1], [], []>} : vector<8x32xf32>, vector<32x96xf32>, vector<8x96xf32> -> vector<8x96xf32>
    %61 = vector.extract_strided_slice %0 {offsets = [18, 0], sizes = [1, 96], strides = [1, 1]} : vector<38x128xf32> to vector<1x96xf32>
    %62 = vector.broadcast %61 : vector<1x96xf32> to vector<8x96xf32>
    %63 = arith.addf %60, %62 : vector<8x96xf32>
    %64 = vector.extract_strided_slice %63 {offsets = [0, 0], sizes = [8, 32], strides = [1, 1]} : vector<8x96xf32> to vector<8x32xf32>
    %65 = vector.extract_strided_slice %63 {offsets = [0, 32], sizes = [8, 32], strides = [1, 1]} : vector<8x96xf32> to vector<8x32xf32>
    %66 = vector.extract_strided_slice %63 {offsets = [0, 64], sizes = [8, 32], strides = [1, 1]} : vector<8x96xf32> to vector<8x32xf32>
    %c1 = arith.constant 1 : index
    %c0_24 = arith.constant 0 : index
    %c0_25 = arith.constant 0 : index
    %67 = vector.load %arg6[%c1, %c0_24, %c0_25] : memref<10x32x128xf32, #tpu.memory_space<vmem>>, vector<1x32x32xf32>
    %68 = vector.shape_cast %67 : vector<1x32x32xf32> to vector<32x32xf32>
    %69 = vector.extract_strided_slice %64 {offsets = [0, 0], sizes = [8, 8], strides = [1, 1]} : vector<8x32xf32> to vector<8x8xf32>
    %70 = vector.extract_strided_slice %65 {offsets = [0, 0], sizes = [8, 8], strides = [1, 1]} : vector<8x32xf32> to vector<8x8xf32>
    %cst_26 = arith.constant dense<0.000000e+00> : vector<8x8xf32>
    %71 = tpu.matmul %69, %70, %cst_26 {dimension_numbers = #tpu.dot_dimension_numbers<[1], [1], [0], [0], [0, 0, 1, 0], [], []>} : vector<8x8xf32>, vector<8x8xf32>, vector<8x8xf32> -> vector<8x8xf32>
    %72 = vector.broadcast %3 : vector<1x8xf32> to vector<8x8xf32>
    %73 = arith.addf %71, %72 : vector<8x8xf32>
    %cst_27 = arith.constant dense<0xFF800000> : vector<8xf32>
    %74 = vector.multi_reduction <maximumf>, %73, %cst_27 [1] : vector<8x8xf32> to vector<8xf32>
    %75 = vector.shape_cast %74 : vector<8xf32> to vector<8x1xf32>
    %76 = vector.broadcast %75 : vector<8x1xf32> to vector<8x8xf32>
    %77 = arith.subf %73, %76 : vector<8x8xf32>
    %78 = math.exp %77 : vector<8x8xf32>
    %cst_28 = arith.constant dense<0.000000e+00> : vector<8xf32>
    %79 = vector.multi_reduction <add>, %78, %cst_28 [1] : vector<8x8xf32> to vector<8xf32>
    %80 = vector.shape_cast %79 : vector<8xf32> to vector<8x1xf32>
    %81 = tpu.reciprocal %80 {approx = true} : vector<8x1xf32> -> vector<8x1xf32>
    %82 = vector.broadcast %81 : vector<8x1xf32> to vector<8x8xf32>
    %83 = arith.mulf %78, %82 : vector<8x8xf32>
    %84 = vector.extract_strided_slice %66 {offsets = [0, 0], sizes = [8, 8], strides = [1, 1]} : vector<8x32xf32> to vector<8x8xf32>
    %cst_29 = arith.constant dense<0.000000e+00> : vector<8x8xf32>
    %85 = tpu.matmul %83, %84, %cst_29 {dimension_numbers = #tpu.dot_dimension_numbers<[1], [0], [0], [1], [0, 0, 1, 1], [], []>} : vector<8x8xf32>, vector<8x8xf32>, vector<8x8xf32> -> vector<8x8xf32>
    %86 = vector.extract_strided_slice %64 {offsets = [0, 8], sizes = [8, 8], strides = [1, 1]} : vector<8x32xf32> to vector<8x8xf32>
    %87 = vector.extract_strided_slice %65 {offsets = [0, 8], sizes = [8, 8], strides = [1, 1]} : vector<8x32xf32> to vector<8x8xf32>
    %cst_30 = arith.constant dense<0.000000e+00> : vector<8x8xf32>
    %88 = tpu.matmul %86, %87, %cst_30 {dimension_numbers = #tpu.dot_dimension_numbers<[1], [1], [0], [0], [0, 0, 1, 0], [], []>} : vector<8x8xf32>, vector<8x8xf32>, vector<8x8xf32> -> vector<8x8xf32>
    %89 = vector.broadcast %3 : vector<1x8xf32> to vector<8x8xf32>
    %90 = arith.addf %88, %89 : vector<8x8xf32>
    %cst_31 = arith.constant dense<0xFF800000> : vector<8xf32>
    %91 = vector.multi_reduction <maximumf>, %90, %cst_31 [1] : vector<8x8xf32> to vector<8xf32>
    %92 = vector.shape_cast %91 : vector<8xf32> to vector<8x1xf32>
    %93 = vector.broadcast %92 : vector<8x1xf32> to vector<8x8xf32>
    %94 = arith.subf %90, %93 : vector<8x8xf32>
    %95 = math.exp %94 : vector<8x8xf32>
    %cst_32 = arith.constant dense<0.000000e+00> : vector<8xf32>
    %96 = vector.multi_reduction <add>, %95, %cst_32 [1] : vector<8x8xf32> to vector<8xf32>
    %97 = vector.shape_cast %96 : vector<8xf32> to vector<8x1xf32>
    %98 = tpu.reciprocal %97 {approx = true} : vector<8x1xf32> -> vector<8x1xf32>
    %99 = vector.broadcast %98 : vector<8x1xf32> to vector<8x8xf32>
    %100 = arith.mulf %95, %99 : vector<8x8xf32>
    %101 = vector.extract_strided_slice %66 {offsets = [0, 8], sizes = [8, 8], strides = [1, 1]} : vector<8x32xf32> to vector<8x8xf32>
    %cst_33 = arith.constant dense<0.000000e+00> : vector<8x8xf32>
    %102 = tpu.matmul %100, %101, %cst_33 {dimension_numbers = #tpu.dot_dimension_numbers<[1], [0], [0], [1], [0, 0, 1, 1], [], []>} : vector<8x8xf32>, vector<8x8xf32>, vector<8x8xf32> -> vector<8x8xf32>
    %103 = vector.extract_strided_slice %64 {offsets = [0, 16], sizes = [8, 8], strides = [1, 1]} : vector<8x32xf32> to vector<8x8xf32>
    %104 = vector.extract_strided_slice %65 {offsets = [0, 16], sizes = [8, 8], strides = [1, 1]} : vector<8x32xf32> to vector<8x8xf32>
    %cst_34 = arith.constant dense<0.000000e+00> : vector<8x8xf32>
    %105 = tpu.matmul %103, %104, %cst_34 {dimension_numbers = #tpu.dot_dimension_numbers<[1], [1], [0], [0], [0, 0, 1, 0], [], []>} : vector<8x8xf32>, vector<8x8xf32>, vector<8x8xf32> -> vector<8x8xf32>
    %106 = vector.broadcast %3 : vector<1x8xf32> to vector<8x8xf32>
    %107 = arith.addf %105, %106 : vector<8x8xf32>
    %cst_35 = arith.constant dense<0xFF800000> : vector<8xf32>
    %108 = vector.multi_reduction <maximumf>, %107, %cst_35 [1] : vector<8x8xf32> to vector<8xf32>
    %109 = vector.shape_cast %108 : vector<8xf32> to vector<8x1xf32>
    %110 = vector.broadcast %109 : vector<8x1xf32> to vector<8x8xf32>
    %111 = arith.subf %107, %110 : vector<8x8xf32>
    %112 = math.exp %111 : vector<8x8xf32>
    %cst_36 = arith.constant dense<0.000000e+00> : vector<8xf32>
    %113 = vector.multi_reduction <add>, %112, %cst_36 [1] : vector<8x8xf32> to vector<8xf32>
    %114 = vector.shape_cast %113 : vector<8xf32> to vector<8x1xf32>
    %115 = tpu.reciprocal %114 {approx = true} : vector<8x1xf32> -> vector<8x1xf32>
    %116 = vector.broadcast %115 : vector<8x1xf32> to vector<8x8xf32>
    %117 = arith.mulf %112, %116 : vector<8x8xf32>
    %118 = vector.extract_strided_slice %66 {offsets = [0, 16], sizes = [8, 8], strides = [1, 1]} : vector<8x32xf32> to vector<8x8xf32>
    %cst_37 = arith.constant dense<0.000000e+00> : vector<8x8xf32>
    %119 = tpu.matmul %117, %118, %cst_37 {dimension_numbers = #tpu.dot_dimension_numbers<[1], [0], [0], [1], [0, 0, 1, 1], [], []>} : vector<8x8xf32>, vector<8x8xf32>, vector<8x8xf32> -> vector<8x8xf32>
    %120 = vector.extract_strided_slice %64 {offsets = [0, 24], sizes = [8, 8], strides = [1, 1]} : vector<8x32xf32> to vector<8x8xf32>
    %121 = vector.extract_strided_slice %65 {offsets = [0, 24], sizes = [8, 8], strides = [1, 1]} : vector<8x32xf32> to vector<8x8xf32>
    %cst_38 = arith.constant dense<0.000000e+00> : vector<8x8xf32>
    %122 = tpu.matmul %120, %121, %cst_38 {dimension_numbers = #tpu.dot_dimension_numbers<[1], [1], [0], [0], [0, 0, 1, 0], [], []>} : vector<8x8xf32>, vector<8x8xf32>, vector<8x8xf32> -> vector<8x8xf32>
    %123 = vector.broadcast %3 : vector<1x8xf32> to vector<8x8xf32>
    %124 = arith.addf %122, %123 : vector<8x8xf32>
    %cst_39 = arith.constant dense<0xFF800000> : vector<8xf32>
    %125 = vector.multi_reduction <maximumf>, %124, %cst_39 [1] : vector<8x8xf32> to vector<8xf32>
    %126 = vector.shape_cast %125 : vector<8xf32> to vector<8x1xf32>
    %127 = vector.broadcast %126 : vector<8x1xf32> to vector<8x8xf32>
    %128 = arith.subf %124, %127 : vector<8x8xf32>
    %129 = math.exp %128 : vector<8x8xf32>
    %cst_40 = arith.constant dense<0.000000e+00> : vector<8xf32>
    %130 = vector.multi_reduction <add>, %129, %cst_40 [1] : vector<8x8xf32> to vector<8xf32>
    %131 = vector.shape_cast %130 : vector<8xf32> to vector<8x1xf32>
    %132 = tpu.reciprocal %131 {approx = true} : vector<8x1xf32> -> vector<8x1xf32>
    %133 = vector.broadcast %132 : vector<8x1xf32> to vector<8x8xf32>
    %134 = arith.mulf %129, %133 : vector<8x8xf32>
    %135 = vector.extract_strided_slice %66 {offsets = [0, 24], sizes = [8, 8], strides = [1, 1]} : vector<8x32xf32> to vector<8x8xf32>
    %cst_41 = arith.constant dense<0.000000e+00> : vector<8x8xf32>
    %136 = tpu.matmul %134, %135, %cst_41 {dimension_numbers = #tpu.dot_dimension_numbers<[1], [0], [0], [1], [0, 0, 1, 1], [], []>} : vector<8x8xf32>, vector<8x8xf32>, vector<8x8xf32> -> vector<8x8xf32>
    %137 = tpu.concatenate %85, %102, %119, %136 in 1 : vector<8x8xf32>, vector<8x8xf32>, vector<8x8xf32>, vector<8x8xf32> -> vector<8x32xf32>
    %cst_42 = arith.constant dense<0.000000e+00> : vector<8x32xf32>
    %138 = tpu.matmul %137, %68, %cst_42 {dimension_numbers = #tpu.dot_dimension_numbers<[1], [0], [0], [1], [0, 0, 1, 1], [], []>} : vector<8x32xf32>, vector<32x32xf32>, vector<8x32xf32> -> vector<8x32xf32>
    %139 = arith.addf %35, %138 : vector<8x32xf32>
    %140 = vector.extract_strided_slice %0 {offsets = [19, 0], sizes = [1, 32], strides = [1, 1]} : vector<38x128xf32> to vector<1x32xf32>
    %141 = vector.broadcast %140 : vector<1x32xf32> to vector<8x32xf32>
    %142 = arith.addf %139, %141 : vector<8x32xf32>
    %143 = vector.extract_strided_slice %0 {offsets = [2, 0], sizes = [1, 32], strides = [1, 1]} : vector<38x128xf32> to vector<1x32xf32>
    %144 = vector.extract_strided_slice %0 {offsets = [6, 0], sizes = [1, 32], strides = [1, 1]} : vector<38x128xf32> to vector<1x32xf32>
    %cst_43 = arith.constant dense<0.000000e+00> : vector<8xf32>
    %145 = vector.multi_reduction <add>, %142, %cst_43 [1] : vector<8x32xf32> to vector<8xf32>
    %146 = vector.shape_cast %145 : vector<8xf32> to vector<8x1xf32>
    %cst_44 = arith.constant 3.200000e+01 : f32
    %147 = vector.broadcast %cst_44 : f32 to vector<8x1xf32>
    %148 = arith.divf %146, %147 : vector<8x1xf32>
    %149 = vector.broadcast %148 : vector<8x1xf32> to vector<8x32xf32>
    %150 = arith.subf %142, %149 : vector<8x32xf32>
    %151 = arith.mulf %150, %150 : vector<8x32xf32>
    %cst_45 = arith.constant dense<0.000000e+00> : vector<8xf32>
    %152 = vector.multi_reduction <add>, %151, %cst_45 [1] : vector<8x32xf32> to vector<8xf32>
    %153 = vector.shape_cast %152 : vector<8xf32> to vector<8x1xf32>
    %cst_46 = arith.constant 3.200000e+01 : f32
    %154 = vector.broadcast %cst_46 : f32 to vector<8x1xf32>
    %155 = arith.divf %153, %154 : vector<8x1xf32>
    %cst_47 = arith.constant 9.99999974E-6 : f32
    %156 = vector.broadcast %cst_47 : f32 to vector<8x1xf32>
    %157 = arith.addf %155, %156 : vector<8x1xf32>
    %158 = math.rsqrt %157 : vector<8x1xf32>
    %159 = vector.broadcast %158 : vector<8x1xf32> to vector<8x32xf32>
    %160 = arith.mulf %150, %159 : vector<8x32xf32>
    %161 = vector.broadcast %143 : vector<1x32xf32> to vector<8x32xf32>
    %162 = arith.mulf %160, %161 : vector<8x32xf32>
    %163 = vector.broadcast %144 : vector<1x32xf32> to vector<8x32xf32>
    %164 = arith.addf %162, %163 : vector<8x32xf32>
    %c2 = arith.constant 2 : index
    %c0_48 = arith.constant 0 : index
    %c0_49 = arith.constant 0 : index
    %165 = vector.load %arg6[%c2, %c0_48, %c0_49] : memref<10x32x128xf32, #tpu.memory_space<vmem>>, vector<1x32x64xf32>
    %166 = vector.shape_cast %165 : vector<1x32x64xf32> to vector<32x64xf32>
    %cst_50 = arith.constant dense<0.000000e+00> : vector<8x64xf32>
    %167 = tpu.matmul %164, %166, %cst_50 {dimension_numbers = #tpu.dot_dimension_numbers<[1], [0], [0], [1], [0, 0, 1, 1], [], []>} : vector<8x32xf32>, vector<32x64xf32>, vector<8x64xf32> -> vector<8x64xf32>
    %168 = vector.extract_strided_slice %0 {offsets = [20, 0], sizes = [1, 64], strides = [1, 1]} : vector<38x128xf32> to vector<1x64xf32>
    %169 = vector.broadcast %168 : vector<1x64xf32> to vector<8x64xf32>
    %170 = arith.addf %167, %169 : vector<8x64xf32>
    %171 = arith.mulf %170, %170 : vector<8x64xf32>
    %172 = arith.mulf %170, %171 : vector<8x64xf32>
    %cst_51 = arith.constant 4.471500e-02 : f32
    %173 = vector.broadcast %cst_51 : f32 to vector<8x64xf32>
    %174 = arith.mulf %173, %172 : vector<8x64xf32>
    %175 = arith.addf %170, %174 : vector<8x64xf32>
    %cst_52 = arith.constant 0.797884583 : f32
    %176 = vector.broadcast %cst_52 : f32 to vector<8x64xf32>
    %177 = arith.mulf %176, %175 : vector<8x64xf32>
    %178 = math.tanh %177 : vector<8x64xf32>
    %cst_53 = arith.constant 1.000000e+00 : f32
    %179 = vector.broadcast %cst_53 : f32 to vector<8x64xf32>
    %180 = arith.addf %179, %178 : vector<8x64xf32>
    %cst_54 = arith.constant 5.000000e-01 : f32
    %181 = vector.broadcast %cst_54 : f32 to vector<8x64xf32>
    %182 = arith.mulf %181, %180 : vector<8x64xf32>
    %183 = arith.mulf %170, %182 : vector<8x64xf32>
    %c0_55 = arith.constant 0 : index
    %c0_56 = arith.constant 0 : index
    %c0_57 = arith.constant 0 : index
    %184 = vector.load %arg7[%c0_55, %c0_56, %c0_57] : memref<2x64x32xf32, #tpu.memory_space<vmem>>, vector<1x64x32xf32>
    %185 = vector.shape_cast %184 : vector<1x64x32xf32> to vector<64x32xf32>
    %cst_58 = arith.constant dense<0.000000e+00> : vector<8x32xf32>
    %186 = tpu.matmul %183, %185, %cst_58 {dimension_numbers = #tpu.dot_dimension_numbers<[1], [0], [0], [1], [0, 0, 1, 1], [], []>} : vector<8x64xf32>, vector<64x32xf32>, vector<8x32xf32> -> vector<8x32xf32>
    %187 = arith.addf %142, %186 : vector<8x32xf32>
    %188 = vector.extract_strided_slice %0 {offsets = [21, 0], sizes = [1, 32], strides = [1, 1]} : vector<38x128xf32> to vector<1x32xf32>
    %189 = vector.broadcast %188 : vector<1x32xf32> to vector<8x32xf32>
    %190 = arith.addf %187, %189 : vector<8x32xf32>
    %191 = vector.extract_strided_slice %0 {offsets = [3, 0], sizes = [1, 32], strides = [1, 1]} : vector<38x128xf32> to vector<1x32xf32>
    %192 = vector.extract_strided_slice %0 {offsets = [7, 0], sizes = [1, 32], strides = [1, 1]} : vector<38x128xf32> to vector<1x32xf32>
    %cst_59 = arith.constant dense<0.000000e+00> : vector<8xf32>
    %193 = vector.multi_reduction <add>, %190, %cst_59 [1] : vector<8x32xf32> to vector<8xf32>
    %194 = vector.shape_cast %193 : vector<8xf32> to vector<8x1xf32>
    %cst_60 = arith.constant 3.200000e+01 : f32
    %195 = vector.broadcast %cst_60 : f32 to vector<8x1xf32>
    %196 = arith.divf %194, %195 : vector<8x1xf32>
    %197 = vector.broadcast %196 : vector<8x1xf32> to vector<8x32xf32>
    %198 = arith.subf %190, %197 : vector<8x32xf32>
    %199 = arith.mulf %198, %198 : vector<8x32xf32>
    %cst_61 = arith.constant dense<0.000000e+00> : vector<8xf32>
    %200 = vector.multi_reduction <add>, %199, %cst_61 [1] : vector<8x32xf32> to vector<8xf32>
    %201 = vector.shape_cast %200 : vector<8xf32> to vector<8x1xf32>
    %cst_62 = arith.constant 3.200000e+01 : f32
    %202 = vector.broadcast %cst_62 : f32 to vector<8x1xf32>
    %203 = arith.divf %201, %202 : vector<8x1xf32>
    %cst_63 = arith.constant 9.99999974E-6 : f32
    %204 = vector.broadcast %cst_63 : f32 to vector<8x1xf32>
    %205 = arith.addf %203, %204 : vector<8x1xf32>
    %206 = math.rsqrt %205 : vector<8x1xf32>
    %207 = vector.broadcast %206 : vector<8x1xf32> to vector<8x32xf32>
    %208 = arith.mulf %198, %207 : vector<8x32xf32>
    %209 = vector.broadcast %191 : vector<1x32xf32> to vector<8x32xf32>
    %210 = arith.mulf %208, %209 : vector<8x32xf32>
    %211 = vector.broadcast %192 : vector<1x32xf32> to vector<8x32xf32>
    %212 = arith.addf %210, %211 : vector<8x32xf32>
    %213 = tpu.iota {dimensions = array<i32: 0>} : vector<8x8xi32>
    %214 = tpu.iota {dimensions = array<i32: 1>} : vector<8x8xi32>
    %215 = arith.cmpi sle, %214, %213 : vector<8x8xi32>
    %cst_64 = arith.constant 0.000000e+00 : f32
    %cst_65 = arith.constant -1.000000e+09 : f32
    %216 = vector.broadcast %cst_64 : f32 to vector<8x8xf32>
    %217 = vector.broadcast %cst_65 : f32 to vector<8x8xf32>
    %218 = arith.select %215, %216, %217 : vector<8x8xi1>, vector<8x8xf32>
    %c0_66 = arith.constant 0 : index
    %c0_67 = arith.constant 0 : index
    %219 = vector.load %arg2[%c0_66, %c0_67] : memref<8x1xi32, #tpu.memory_space<vmem>>, vector<8x1xi32>
    %220 = vector.broadcast %219 : vector<8x1xi32> to vector<8x128xi32>
    %221 = arith.cmpi eq, %4, %220 : vector<8x128xi32>
    %cst_68 = arith.constant 5.65685415 : f32
    %cst_69 = arith.constant 0.000000e+00 : f32
    %222 = vector.broadcast %cst_68 : f32 to vector<8x128xf32>
    %223 = vector.broadcast %cst_69 : f32 to vector<8x128xf32>
    %224 = arith.select %221, %222, %223 : vector<8x128xi1>, vector<8x128xf32>
    %cst_70 = arith.constant dense<0.000000e+00> : vector<8x32xf32>
    %225 = tpu.matmul %224, %5, %cst_70 {dimension_numbers = #tpu.dot_dimension_numbers<[1], [0], [0], [1], [0, 0, 1, 1], [], []>} : vector<8x128xf32>, vector<128x32xf32>, vector<8x32xf32> -> vector<8x32xf32>
    %226 = arith.addf %225, %1 : vector<8x32xf32>
    %227 = vector.extract_strided_slice %0 {offsets = [8, 0], sizes = [1, 32], strides = [1, 1]} : vector<38x128xf32> to vector<1x32xf32>
    %228 = vector.extract_strided_slice %0 {offsets = [13, 0], sizes = [1, 32], strides = [1, 1]} : vector<38x128xf32> to vector<1x32xf32>
    %cst_71 = arith.constant dense<0.000000e+00> : vector<8xf32>
    %229 = vector.multi_reduction <add>, %226, %cst_71 [1] : vector<8x32xf32> to vector<8xf32>
    %230 = vector.shape_cast %229 : vector<8xf32> to vector<8x1xf32>
    %cst_72 = arith.constant 3.200000e+01 : f32
    %231 = vector.broadcast %cst_72 : f32 to vector<8x1xf32>
    %232 = arith.divf %230, %231 : vector<8x1xf32>
    %233 = vector.broadcast %232 : vector<8x1xf32> to vector<8x32xf32>
    %234 = arith.subf %226, %233 : vector<8x32xf32>
    %235 = arith.mulf %234, %234 : vector<8x32xf32>
    %cst_73 = arith.constant dense<0.000000e+00> : vector<8xf32>
    %236 = vector.multi_reduction <add>, %235, %cst_73 [1] : vector<8x32xf32> to vector<8xf32>
    %237 = vector.shape_cast %236 : vector<8xf32> to vector<8x1xf32>
    %cst_74 = arith.constant 3.200000e+01 : f32
    %238 = vector.broadcast %cst_74 : f32 to vector<8x1xf32>
    %239 = arith.divf %237, %238 : vector<8x1xf32>
    %cst_75 = arith.constant 9.99999974E-6 : f32
    %240 = vector.broadcast %cst_75 : f32 to vector<8x1xf32>
    %241 = arith.addf %239, %240 : vector<8x1xf32>
    %242 = math.rsqrt %241 : vector<8x1xf32>
    %243 = vector.broadcast %242 : vector<8x1xf32> to vector<8x32xf32>
    %244 = arith.mulf %234, %243 : vector<8x32xf32>
    %245 = vector.broadcast %227 : vector<1x32xf32> to vector<8x32xf32>
    %246 = arith.mulf %244, %245 : vector<8x32xf32>
    %247 = vector.broadcast %228 : vector<1x32xf32> to vector<8x32xf32>
    %248 = arith.addf %246, %247 : vector<8x32xf32>
    %249 = vector.extract_strided_slice %0 {offsets = [9, 0], sizes = [1, 32], strides = [1, 1]} : vector<38x128xf32> to vector<1x32xf32>
    %250 = vector.extract_strided_slice %0 {offsets = [14, 0], sizes = [1, 32], strides = [1, 1]} : vector<38x128xf32> to vector<1x32xf32>
    %cst_76 = arith.constant dense<0.000000e+00> : vector<8xf32>
    %251 = vector.multi_reduction <add>, %248, %cst_76 [1] : vector<8x32xf32> to vector<8xf32>
    %252 = vector.shape_cast %251 : vector<8xf32> to vector<8x1xf32>
    %cst_77 = arith.constant 3.200000e+01 : f32
    %253 = vector.broadcast %cst_77 : f32 to vector<8x1xf32>
    %254 = arith.divf %252, %253 : vector<8x1xf32>
    %255 = vector.broadcast %254 : vector<8x1xf32> to vector<8x32xf32>
    %256 = arith.subf %248, %255 : vector<8x32xf32>
    %257 = arith.mulf %256, %256 : vector<8x32xf32>
    %cst_78 = arith.constant dense<0.000000e+00> : vector<8xf32>
    %258 = vector.multi_reduction <add>, %257, %cst_78 [1] : vector<8x32xf32> to vector<8xf32>
    %259 = vector.shape_cast %258 : vector<8xf32> to vector<8x1xf32>
    %cst_79 = arith.constant 3.200000e+01 : f32
    %260 = vector.broadcast %cst_79 : f32 to vector<8x1xf32>
    %261 = arith.divf %259, %260 : vector<8x1xf32>
    %cst_80 = arith.constant 9.99999974E-6 : f32
    %262 = vector.broadcast %cst_80 : f32 to vector<8x1xf32>
    %263 = arith.addf %261, %262 : vector<8x1xf32>
    %264 = math.rsqrt %263 : vector<8x1xf32>
    %265 = vector.broadcast %264 : vector<8x1xf32> to vector<8x32xf32>
    %266 = arith.mulf %256, %265 : vector<8x32xf32>
    %267 = vector.broadcast %249 : vector<1x32xf32> to vector<8x32xf32>
    %268 = arith.mulf %266, %267 : vector<8x32xf32>
    %269 = vector.broadcast %250 : vector<1x32xf32> to vector<8x32xf32>
    %270 = arith.addf %268, %269 : vector<8x32xf32>
    %c3 = arith.constant 3 : index
    %c0_81 = arith.constant 0 : index
    %c0_82 = arith.constant 0 : index
    %271 = vector.load %arg6[%c3, %c0_81, %c0_82] : memref<10x32x128xf32, #tpu.memory_space<vmem>>, vector<1x32x96xf32>
    %272 = vector.shape_cast %271 : vector<1x32x96xf32> to vector<32x96xf32>
    %cst_83 = arith.constant dense<0.000000e+00> : vector<8x96xf32>
    %273 = tpu.matmul %270, %272, %cst_83 {dimension_numbers = #tpu.dot_dimension_numbers<[1], [0], [0], [1], [0, 0, 1, 1], [], []>} : vector<8x32xf32>, vector<32x96xf32>, vector<8x96xf32> -> vector<8x96xf32>
    %274 = vector.extract_strided_slice %0 {offsets = [22, 0], sizes = [1, 96], strides = [1, 1]} : vector<38x128xf32> to vector<1x96xf32>
    %275 = vector.broadcast %274 : vector<1x96xf32> to vector<8x96xf32>
    %276 = arith.addf %273, %275 : vector<8x96xf32>
    %277 = vector.extract_strided_slice %276 {offsets = [0, 0], sizes = [8, 32], strides = [1, 1]} : vector<8x96xf32> to vector<8x32xf32>
    %278 = vector.extract_strided_slice %276 {offsets = [0, 32], sizes = [8, 32], strides = [1, 1]} : vector<8x96xf32> to vector<8x32xf32>
    %279 = vector.extract_strided_slice %276 {offsets = [0, 64], sizes = [8, 32], strides = [1, 1]} : vector<8x96xf32> to vector<8x32xf32>
    %c4 = arith.constant 4 : index
    %c0_84 = arith.constant 0 : index
    %c0_85 = arith.constant 0 : index
    %280 = vector.load %arg6[%c4, %c0_84, %c0_85] : memref<10x32x128xf32, #tpu.memory_space<vmem>>, vector<1x32x32xf32>
    %281 = vector.shape_cast %280 : vector<1x32x32xf32> to vector<32x32xf32>
    %282 = vector.extract_strided_slice %277 {offsets = [0, 0], sizes = [8, 8], strides = [1, 1]} : vector<8x32xf32> to vector<8x8xf32>
    %283 = vector.extract_strided_slice %278 {offsets = [0, 0], sizes = [8, 8], strides = [1, 1]} : vector<8x32xf32> to vector<8x8xf32>
    %cst_86 = arith.constant dense<0.000000e+00> : vector<8x8xf32>
    %284 = tpu.matmul %282, %283, %cst_86 {dimension_numbers = #tpu.dot_dimension_numbers<[1], [1], [0], [0], [0, 0, 1, 0], [], []>} : vector<8x8xf32>, vector<8x8xf32>, vector<8x8xf32> -> vector<8x8xf32>
    %285 = arith.addf %284, %218 : vector<8x8xf32>
    %cst_87 = arith.constant dense<0xFF800000> : vector<8xf32>
    %286 = vector.multi_reduction <maximumf>, %285, %cst_87 [1] : vector<8x8xf32> to vector<8xf32>
    %287 = vector.shape_cast %286 : vector<8xf32> to vector<8x1xf32>
    %288 = vector.broadcast %287 : vector<8x1xf32> to vector<8x8xf32>
    %289 = arith.subf %285, %288 : vector<8x8xf32>
    %290 = math.exp %289 : vector<8x8xf32>
    %cst_88 = arith.constant dense<0.000000e+00> : vector<8xf32>
    %291 = vector.multi_reduction <add>, %290, %cst_88 [1] : vector<8x8xf32> to vector<8xf32>
    %292 = vector.shape_cast %291 : vector<8xf32> to vector<8x1xf32>
    %293 = tpu.reciprocal %292 {approx = true} : vector<8x1xf32> -> vector<8x1xf32>
    %294 = vector.broadcast %293 : vector<8x1xf32> to vector<8x8xf32>
    %295 = arith.mulf %290, %294 : vector<8x8xf32>
    %296 = vector.extract_strided_slice %279 {offsets = [0, 0], sizes = [8, 8], strides = [1, 1]} : vector<8x32xf32> to vector<8x8xf32>
    %cst_89 = arith.constant dense<0.000000e+00> : vector<8x8xf32>
    %297 = tpu.matmul %295, %296, %cst_89 {dimension_numbers = #tpu.dot_dimension_numbers<[1], [0], [0], [1], [0, 0, 1, 1], [], []>} : vector<8x8xf32>, vector<8x8xf32>, vector<8x8xf32> -> vector<8x8xf32>
    %298 = vector.extract_strided_slice %277 {offsets = [0, 8], sizes = [8, 8], strides = [1, 1]} : vector<8x32xf32> to vector<8x8xf32>
    %299 = vector.extract_strided_slice %278 {offsets = [0, 8], sizes = [8, 8], strides = [1, 1]} : vector<8x32xf32> to vector<8x8xf32>
    %cst_90 = arith.constant dense<0.000000e+00> : vector<8x8xf32>
    %300 = tpu.matmul %298, %299, %cst_90 {dimension_numbers = #tpu.dot_dimension_numbers<[1], [1], [0], [0], [0, 0, 1, 0], [], []>} : vector<8x8xf32>, vector<8x8xf32>, vector<8x8xf32> -> vector<8x8xf32>
    %301 = arith.addf %300, %218 : vector<8x8xf32>
    %cst_91 = arith.constant dense<0xFF800000> : vector<8xf32>
    %302 = vector.multi_reduction <maximumf>, %301, %cst_91 [1] : vector<8x8xf32> to vector<8xf32>
    %303 = vector.shape_cast %302 : vector<8xf32> to vector<8x1xf32>
    %304 = vector.broadcast %303 : vector<8x1xf32> to vector<8x8xf32>
    %305 = arith.subf %301, %304 : vector<8x8xf32>
    %306 = math.exp %305 : vector<8x8xf32>
    %cst_92 = arith.constant dense<0.000000e+00> : vector<8xf32>
    %307 = vector.multi_reduction <add>, %306, %cst_92 [1] : vector<8x8xf32> to vector<8xf32>
    %308 = vector.shape_cast %307 : vector<8xf32> to vector<8x1xf32>
    %309 = tpu.reciprocal %308 {approx = true} : vector<8x1xf32> -> vector<8x1xf32>
    %310 = vector.broadcast %309 : vector<8x1xf32> to vector<8x8xf32>
    %311 = arith.mulf %306, %310 : vector<8x8xf32>
    %312 = vector.extract_strided_slice %279 {offsets = [0, 8], sizes = [8, 8], strides = [1, 1]} : vector<8x32xf32> to vector<8x8xf32>
    %cst_93 = arith.constant dense<0.000000e+00> : vector<8x8xf32>
    %313 = tpu.matmul %311, %312, %cst_93 {dimension_numbers = #tpu.dot_dimension_numbers<[1], [0], [0], [1], [0, 0, 1, 1], [], []>} : vector<8x8xf32>, vector<8x8xf32>, vector<8x8xf32> -> vector<8x8xf32>
    %314 = vector.extract_strided_slice %277 {offsets = [0, 16], sizes = [8, 8], strides = [1, 1]} : vector<8x32xf32> to vector<8x8xf32>
    %315 = vector.extract_strided_slice %278 {offsets = [0, 16], sizes = [8, 8], strides = [1, 1]} : vector<8x32xf32> to vector<8x8xf32>
    %cst_94 = arith.constant dense<0.000000e+00> : vector<8x8xf32>
    %316 = tpu.matmul %314, %315, %cst_94 {dimension_numbers = #tpu.dot_dimension_numbers<[1], [1], [0], [0], [0, 0, 1, 0], [], []>} : vector<8x8xf32>, vector<8x8xf32>, vector<8x8xf32> -> vector<8x8xf32>
    %317 = arith.addf %316, %218 : vector<8x8xf32>
    %cst_95 = arith.constant dense<0xFF800000> : vector<8xf32>
    %318 = vector.multi_reduction <maximumf>, %317, %cst_95 [1] : vector<8x8xf32> to vector<8xf32>
    %319 = vector.shape_cast %318 : vector<8xf32> to vector<8x1xf32>
    %320 = vector.broadcast %319 : vector<8x1xf32> to vector<8x8xf32>
    %321 = arith.subf %317, %320 : vector<8x8xf32>
    %322 = math.exp %321 : vector<8x8xf32>
    %cst_96 = arith.constant dense<0.000000e+00> : vector<8xf32>
    %323 = vector.multi_reduction <add>, %322, %cst_96 [1] : vector<8x8xf32> to vector<8xf32>
    %324 = vector.shape_cast %323 : vector<8xf32> to vector<8x1xf32>
    %325 = tpu.reciprocal %324 {approx = true} : vector<8x1xf32> -> vector<8x1xf32>
    %326 = vector.broadcast %325 : vector<8x1xf32> to vector<8x8xf32>
    %327 = arith.mulf %322, %326 : vector<8x8xf32>
    %328 = vector.extract_strided_slice %279 {offsets = [0, 16], sizes = [8, 8], strides = [1, 1]} : vector<8x32xf32> to vector<8x8xf32>
    %cst_97 = arith.constant dense<0.000000e+00> : vector<8x8xf32>
    %329 = tpu.matmul %327, %328, %cst_97 {dimension_numbers = #tpu.dot_dimension_numbers<[1], [0], [0], [1], [0, 0, 1, 1], [], []>} : vector<8x8xf32>, vector<8x8xf32>, vector<8x8xf32> -> vector<8x8xf32>
    %330 = vector.extract_strided_slice %277 {offsets = [0, 24], sizes = [8, 8], strides = [1, 1]} : vector<8x32xf32> to vector<8x8xf32>
    %331 = vector.extract_strided_slice %278 {offsets = [0, 24], sizes = [8, 8], strides = [1, 1]} : vector<8x32xf32> to vector<8x8xf32>
    %cst_98 = arith.constant dense<0.000000e+00> : vector<8x8xf32>
    %332 = tpu.matmul %330, %331, %cst_98 {dimension_numbers = #tpu.dot_dimension_numbers<[1], [1], [0], [0], [0, 0, 1, 0], [], []>} : vector<8x8xf32>, vector<8x8xf32>, vector<8x8xf32> -> vector<8x8xf32>
    %333 = arith.addf %332, %218 : vector<8x8xf32>
    %cst_99 = arith.constant dense<0xFF800000> : vector<8xf32>
    %334 = vector.multi_reduction <maximumf>, %333, %cst_99 [1] : vector<8x8xf32> to vector<8xf32>
    %335 = vector.shape_cast %334 : vector<8xf32> to vector<8x1xf32>
    %336 = vector.broadcast %335 : vector<8x1xf32> to vector<8x8xf32>
    %337 = arith.subf %333, %336 : vector<8x8xf32>
    %338 = math.exp %337 : vector<8x8xf32>
    %cst_100 = arith.constant dense<0.000000e+00> : vector<8xf32>
    %339 = vector.multi_reduction <add>, %338, %cst_100 [1] : vector<8x8xf32> to vector<8xf32>
    %340 = vector.shape_cast %339 : vector<8xf32> to vector<8x1xf32>
    %341 = tpu.reciprocal %340 {approx = true} : vector<8x1xf32> -> vector<8x1xf32>
    %342 = vector.broadcast %341 : vector<8x1xf32> to vector<8x8xf32>
    %343 = arith.mulf %338, %342 : vector<8x8xf32>
    %344 = vector.extract_strided_slice %279 {offsets = [0, 24], sizes = [8, 8], strides = [1, 1]} : vector<8x32xf32> to vector<8x8xf32>
    %cst_101 = arith.constant dense<0.000000e+00> : vector<8x8xf32>
    %345 = tpu.matmul %343, %344, %cst_101 {dimension_numbers = #tpu.dot_dimension_numbers<[1], [0], [0], [1], [0, 0, 1, 1], [], []>} : vector<8x8xf32>, vector<8x8xf32>, vector<8x8xf32> -> vector<8x8xf32>
    %346 = tpu.concatenate %297, %313, %329, %345 in 1 : vector<8x8xf32>, vector<8x8xf32>, vector<8x8xf32>, vector<8x8xf32> -> vector<8x32xf32>
    %cst_102 = arith.constant dense<0.000000e+00> : vector<8x32xf32>
    %347 = tpu.matmul %346, %281, %cst_102 {dimension_numbers = #tpu.dot_dimension_numbers<[1], [0], [0], [1], [0, 0, 1, 1], [], []>} : vector<8x32xf32>, vector<32x32xf32>, vector<8x32xf32> -> vector<8x32xf32>
    %348 = arith.addf %248, %347 : vector<8x32xf32>
    %349 = vector.extract_strided_slice %0 {offsets = [23, 0], sizes = [1, 32], strides = [1, 1]} : vector<38x128xf32> to vector<1x32xf32>
    %350 = vector.broadcast %349 : vector<1x32xf32> to vector<8x32xf32>
    %351 = arith.addf %348, %350 : vector<8x32xf32>
    %352 = vector.extract_strided_slice %0 {offsets = [10, 0], sizes = [1, 32], strides = [1, 1]} : vector<38x128xf32> to vector<1x32xf32>
    %353 = vector.extract_strided_slice %0 {offsets = [15, 0], sizes = [1, 32], strides = [1, 1]} : vector<38x128xf32> to vector<1x32xf32>
    %cst_103 = arith.constant dense<0.000000e+00> : vector<8xf32>
    %354 = vector.multi_reduction <add>, %351, %cst_103 [1] : vector<8x32xf32> to vector<8xf32>
    %355 = vector.shape_cast %354 : vector<8xf32> to vector<8x1xf32>
    %cst_104 = arith.constant 3.200000e+01 : f32
    %356 = vector.broadcast %cst_104 : f32 to vector<8x1xf32>
    %357 = arith.divf %355, %356 : vector<8x1xf32>
    %358 = vector.broadcast %357 : vector<8x1xf32> to vector<8x32xf32>
    %359 = arith.subf %351, %358 : vector<8x32xf32>
    %360 = arith.mulf %359, %359 : vector<8x32xf32>
    %cst_105 = arith.constant dense<0.000000e+00> : vector<8xf32>
    %361 = vector.multi_reduction <add>, %360, %cst_105 [1] : vector<8x32xf32> to vector<8xf32>
    %362 = vector.shape_cast %361 : vector<8xf32> to vector<8x1xf32>
    %cst_106 = arith.constant 3.200000e+01 : f32
    %363 = vector.broadcast %cst_106 : f32 to vector<8x1xf32>
    %364 = arith.divf %362, %363 : vector<8x1xf32>
    %cst_107 = arith.constant 9.99999974E-6 : f32
    %365 = vector.broadcast %cst_107 : f32 to vector<8x1xf32>
    %366 = arith.addf %364, %365 : vector<8x1xf32>
    %367 = math.rsqrt %366 : vector<8x1xf32>
    %368 = vector.broadcast %367 : vector<8x1xf32> to vector<8x32xf32>
    %369 = arith.mulf %359, %368 : vector<8x32xf32>
    %370 = vector.broadcast %352 : vector<1x32xf32> to vector<8x32xf32>
    %371 = arith.mulf %369, %370 : vector<8x32xf32>
    %372 = vector.broadcast %353 : vector<1x32xf32> to vector<8x32xf32>
    %373 = arith.addf %371, %372 : vector<8x32xf32>
    %c5 = arith.constant 5 : index
    %c0_108 = arith.constant 0 : index
    %c0_109 = arith.constant 0 : index
    %374 = vector.load %arg6[%c5, %c0_108, %c0_109] : memref<10x32x128xf32, #tpu.memory_space<vmem>>, vector<1x32x32xf32>
    %375 = vector.shape_cast %374 : vector<1x32x32xf32> to vector<32x32xf32>
    %cst_110 = arith.constant dense<0.000000e+00> : vector<8x32xf32>
    %376 = tpu.matmul %373, %375, %cst_110 {dimension_numbers = #tpu.dot_dimension_numbers<[1], [0], [0], [1], [0, 0, 1, 1], [], []>} : vector<8x32xf32>, vector<32x32xf32>, vector<8x32xf32> -> vector<8x32xf32>
    %377 = vector.extract_strided_slice %0 {offsets = [24, 0], sizes = [1, 32], strides = [1, 1]} : vector<38x128xf32> to vector<1x32xf32>
    %378 = vector.broadcast %377 : vector<1x32xf32> to vector<8x32xf32>
    %379 = arith.addf %376, %378 : vector<8x32xf32>
    %c6 = arith.constant 6 : index
    %c0_111 = arith.constant 0 : index
    %c0_112 = arith.constant 0 : index
    %380 = vector.load %arg6[%c6, %c0_111, %c0_112] : memref<10x32x128xf32, #tpu.memory_space<vmem>>, vector<1x32x64xf32>
    %381 = vector.shape_cast %380 : vector<1x32x64xf32> to vector<32x64xf32>
    %cst_113 = arith.constant dense<0.000000e+00> : vector<8x64xf32>
    %382 = tpu.matmul %212, %381, %cst_113 {dimension_numbers = #tpu.dot_dimension_numbers<[1], [0], [0], [1], [0, 0, 1, 1], [], []>} : vector<8x32xf32>, vector<32x64xf32>, vector<8x64xf32> -> vector<8x64xf32>
    %383 = vector.extract_strided_slice %0 {offsets = [25, 0], sizes = [1, 64], strides = [1, 1]} : vector<38x128xf32> to vector<1x64xf32>
    %384 = vector.broadcast %383 : vector<1x64xf32> to vector<8x64xf32>
    %385 = arith.addf %382, %384 : vector<8x64xf32>
    %386 = vector.extract_strided_slice %385 {offsets = [0, 0], sizes = [8, 32], strides = [1, 1]} : vector<8x64xf32> to vector<8x32xf32>
    %387 = vector.extract_strided_slice %385 {offsets = [0, 32], sizes = [8, 32], strides = [1, 1]} : vector<8x64xf32> to vector<8x32xf32>
    %c7 = arith.constant 7 : index
    %c0_114 = arith.constant 0 : index
    %c0_115 = arith.constant 0 : index
    %388 = vector.load %arg6[%c7, %c0_114, %c0_115] : memref<10x32x128xf32, #tpu.memory_space<vmem>>, vector<1x32x32xf32>
    %389 = vector.shape_cast %388 : vector<1x32x32xf32> to vector<32x32xf32>
    %390 = vector.extract_strided_slice %379 {offsets = [0, 0], sizes = [8, 8], strides = [1, 1]} : vector<8x32xf32> to vector<8x8xf32>
    %391 = vector.extract_strided_slice %386 {offsets = [0, 0], sizes = [8, 8], strides = [1, 1]} : vector<8x32xf32> to vector<8x8xf32>
    %cst_116 = arith.constant dense<0.000000e+00> : vector<8x8xf32>
    %392 = tpu.matmul %390, %391, %cst_116 {dimension_numbers = #tpu.dot_dimension_numbers<[1], [1], [0], [0], [0, 0, 1, 0], [], []>} : vector<8x8xf32>, vector<8x8xf32>, vector<8x8xf32> -> vector<8x8xf32>
    %393 = vector.broadcast %3 : vector<1x8xf32> to vector<8x8xf32>
    %394 = arith.addf %392, %393 : vector<8x8xf32>
    %cst_117 = arith.constant dense<0xFF800000> : vector<8xf32>
    %395 = vector.multi_reduction <maximumf>, %394, %cst_117 [1] : vector<8x8xf32> to vector<8xf32>
    %396 = vector.shape_cast %395 : vector<8xf32> to vector<8x1xf32>
    %397 = vector.broadcast %396 : vector<8x1xf32> to vector<8x8xf32>
    %398 = arith.subf %394, %397 : vector<8x8xf32>
    %399 = math.exp %398 : vector<8x8xf32>
    %cst_118 = arith.constant dense<0.000000e+00> : vector<8xf32>
    %400 = vector.multi_reduction <add>, %399, %cst_118 [1] : vector<8x8xf32> to vector<8xf32>
    %401 = vector.shape_cast %400 : vector<8xf32> to vector<8x1xf32>
    %402 = tpu.reciprocal %401 {approx = true} : vector<8x1xf32> -> vector<8x1xf32>
    %403 = vector.broadcast %402 : vector<8x1xf32> to vector<8x8xf32>
    %404 = arith.mulf %399, %403 : vector<8x8xf32>
    %405 = vector.extract_strided_slice %387 {offsets = [0, 0], sizes = [8, 8], strides = [1, 1]} : vector<8x32xf32> to vector<8x8xf32>
    %cst_119 = arith.constant dense<0.000000e+00> : vector<8x8xf32>
    %406 = tpu.matmul %404, %405, %cst_119 {dimension_numbers = #tpu.dot_dimension_numbers<[1], [0], [0], [1], [0, 0, 1, 1], [], []>} : vector<8x8xf32>, vector<8x8xf32>, vector<8x8xf32> -> vector<8x8xf32>
    %407 = vector.extract_strided_slice %379 {offsets = [0, 8], sizes = [8, 8], strides = [1, 1]} : vector<8x32xf32> to vector<8x8xf32>
    %408 = vector.extract_strided_slice %386 {offsets = [0, 8], sizes = [8, 8], strides = [1, 1]} : vector<8x32xf32> to vector<8x8xf32>
    %cst_120 = arith.constant dense<0.000000e+00> : vector<8x8xf32>
    %409 = tpu.matmul %407, %408, %cst_120 {dimension_numbers = #tpu.dot_dimension_numbers<[1], [1], [0], [0], [0, 0, 1, 0], [], []>} : vector<8x8xf32>, vector<8x8xf32>, vector<8x8xf32> -> vector<8x8xf32>
    %410 = vector.broadcast %3 : vector<1x8xf32> to vector<8x8xf32>
    %411 = arith.addf %409, %410 : vector<8x8xf32>
    %cst_121 = arith.constant dense<0xFF800000> : vector<8xf32>
    %412 = vector.multi_reduction <maximumf>, %411, %cst_121 [1] : vector<8x8xf32> to vector<8xf32>
    %413 = vector.shape_cast %412 : vector<8xf32> to vector<8x1xf32>
    %414 = vector.broadcast %413 : vector<8x1xf32> to vector<8x8xf32>
    %415 = arith.subf %411, %414 : vector<8x8xf32>
    %416 = math.exp %415 : vector<8x8xf32>
    %cst_122 = arith.constant dense<0.000000e+00> : vector<8xf32>
    %417 = vector.multi_reduction <add>, %416, %cst_122 [1] : vector<8x8xf32> to vector<8xf32>
    %418 = vector.shape_cast %417 : vector<8xf32> to vector<8x1xf32>
    %419 = tpu.reciprocal %418 {approx = true} : vector<8x1xf32> -> vector<8x1xf32>
    %420 = vector.broadcast %419 : vector<8x1xf32> to vector<8x8xf32>
    %421 = arith.mulf %416, %420 : vector<8x8xf32>
    %422 = vector.extract_strided_slice %387 {offsets = [0, 8], sizes = [8, 8], strides = [1, 1]} : vector<8x32xf32> to vector<8x8xf32>
    %cst_123 = arith.constant dense<0.000000e+00> : vector<8x8xf32>
    %423 = tpu.matmul %421, %422, %cst_123 {dimension_numbers = #tpu.dot_dimension_numbers<[1], [0], [0], [1], [0, 0, 1, 1], [], []>} : vector<8x8xf32>, vector<8x8xf32>, vector<8x8xf32> -> vector<8x8xf32>
    %424 = vector.extract_strided_slice %379 {offsets = [0, 16], sizes = [8, 8], strides = [1, 1]} : vector<8x32xf32> to vector<8x8xf32>
    %425 = vector.extract_strided_slice %386 {offsets = [0, 16], sizes = [8, 8], strides = [1, 1]} : vector<8x32xf32> to vector<8x8xf32>
    %cst_124 = arith.constant dense<0.000000e+00> : vector<8x8xf32>
    %426 = tpu.matmul %424, %425, %cst_124 {dimension_numbers = #tpu.dot_dimension_numbers<[1], [1], [0], [0], [0, 0, 1, 0], [], []>} : vector<8x8xf32>, vector<8x8xf32>, vector<8x8xf32> -> vector<8x8xf32>
    %427 = vector.broadcast %3 : vector<1x8xf32> to vector<8x8xf32>
    %428 = arith.addf %426, %427 : vector<8x8xf32>
    %cst_125 = arith.constant dense<0xFF800000> : vector<8xf32>
    %429 = vector.multi_reduction <maximumf>, %428, %cst_125 [1] : vector<8x8xf32> to vector<8xf32>
    %430 = vector.shape_cast %429 : vector<8xf32> to vector<8x1xf32>
    %431 = vector.broadcast %430 : vector<8x1xf32> to vector<8x8xf32>
    %432 = arith.subf %428, %431 : vector<8x8xf32>
    %433 = math.exp %432 : vector<8x8xf32>
    %cst_126 = arith.constant dense<0.000000e+00> : vector<8xf32>
    %434 = vector.multi_reduction <add>, %433, %cst_126 [1] : vector<8x8xf32> to vector<8xf32>
    %435 = vector.shape_cast %434 : vector<8xf32> to vector<8x1xf32>
    %436 = tpu.reciprocal %435 {approx = true} : vector<8x1xf32> -> vector<8x1xf32>
    %437 = vector.broadcast %436 : vector<8x1xf32> to vector<8x8xf32>
    %438 = arith.mulf %433, %437 : vector<8x8xf32>
    %439 = vector.extract_strided_slice %387 {offsets = [0, 16], sizes = [8, 8], strides = [1, 1]} : vector<8x32xf32> to vector<8x8xf32>
    %cst_127 = arith.constant dense<0.000000e+00> : vector<8x8xf32>
    %440 = tpu.matmul %438, %439, %cst_127 {dimension_numbers = #tpu.dot_dimension_numbers<[1], [0], [0], [1], [0, 0, 1, 1], [], []>} : vector<8x8xf32>, vector<8x8xf32>, vector<8x8xf32> -> vector<8x8xf32>
    %441 = vector.extract_strided_slice %379 {offsets = [0, 24], sizes = [8, 8], strides = [1, 1]} : vector<8x32xf32> to vector<8x8xf32>
    %442 = vector.extract_strided_slice %386 {offsets = [0, 24], sizes = [8, 8], strides = [1, 1]} : vector<8x32xf32> to vector<8x8xf32>
    %cst_128 = arith.constant dense<0.000000e+00> : vector<8x8xf32>
    %443 = tpu.matmul %441, %442, %cst_128 {dimension_numbers = #tpu.dot_dimension_numbers<[1], [1], [0], [0], [0, 0, 1, 0], [], []>} : vector<8x8xf32>, vector<8x8xf32>, vector<8x8xf32> -> vector<8x8xf32>
    %444 = vector.broadcast %3 : vector<1x8xf32> to vector<8x8xf32>
    %445 = arith.addf %443, %444 : vector<8x8xf32>
    %cst_129 = arith.constant dense<0xFF800000> : vector<8xf32>
    %446 = vector.multi_reduction <maximumf>, %445, %cst_129 [1] : vector<8x8xf32> to vector<8xf32>
    %447 = vector.shape_cast %446 : vector<8xf32> to vector<8x1xf32>
    %448 = vector.broadcast %447 : vector<8x1xf32> to vector<8x8xf32>
    %449 = arith.subf %445, %448 : vector<8x8xf32>
    %450 = math.exp %449 : vector<8x8xf32>
    %cst_130 = arith.constant dense<0.000000e+00> : vector<8xf32>
    %451 = vector.multi_reduction <add>, %450, %cst_130 [1] : vector<8x8xf32> to vector<8xf32>
    %452 = vector.shape_cast %451 : vector<8xf32> to vector<8x1xf32>
    %453 = tpu.reciprocal %452 {approx = true} : vector<8x1xf32> -> vector<8x1xf32>
    %454 = vector.broadcast %453 : vector<8x1xf32> to vector<8x8xf32>
    %455 = arith.mulf %450, %454 : vector<8x8xf32>
    %456 = vector.extract_strided_slice %387 {offsets = [0, 24], sizes = [8, 8], strides = [1, 1]} : vector<8x32xf32> to vector<8x8xf32>
    %cst_131 = arith.constant dense<0.000000e+00> : vector<8x8xf32>
    %457 = tpu.matmul %455, %456, %cst_131 {dimension_numbers = #tpu.dot_dimension_numbers<[1], [0], [0], [1], [0, 0, 1, 1], [], []>} : vector<8x8xf32>, vector<8x8xf32>, vector<8x8xf32> -> vector<8x8xf32>
    %458 = tpu.concatenate %406, %423, %440, %457 in 1 : vector<8x8xf32>, vector<8x8xf32>, vector<8x8xf32>, vector<8x8xf32> -> vector<8x32xf32>
    %cst_132 = arith.constant dense<0.000000e+00> : vector<8x32xf32>
    %459 = tpu.matmul %458, %389, %cst_132 {dimension_numbers = #tpu.dot_dimension_numbers<[1], [0], [0], [1], [0, 0, 1, 1], [], []>} : vector<8x32xf32>, vector<32x32xf32>, vector<8x32xf32> -> vector<8x32xf32>
    %460 = arith.addf %351, %459 : vector<8x32xf32>
    %461 = vector.extract_strided_slice %0 {offsets = [26, 0], sizes = [1, 32], strides = [1, 1]} : vector<38x128xf32> to vector<1x32xf32>
    %462 = vector.broadcast %461 : vector<1x32xf32> to vector<8x32xf32>
    %463 = arith.addf %460, %462 : vector<8x32xf32>
    %464 = vector.extract_strided_slice %0 {offsets = [11, 0], sizes = [1, 32], strides = [1, 1]} : vector<38x128xf32> to vector<1x32xf32>
    %465 = vector.extract_strided_slice %0 {offsets = [16, 0], sizes = [1, 32], strides = [1, 1]} : vector<38x128xf32> to vector<1x32xf32>
    %cst_133 = arith.constant dense<0.000000e+00> : vector<8xf32>
    %466 = vector.multi_reduction <add>, %463, %cst_133 [1] : vector<8x32xf32> to vector<8xf32>
    %467 = vector.shape_cast %466 : vector<8xf32> to vector<8x1xf32>
    %cst_134 = arith.constant 3.200000e+01 : f32
    %468 = vector.broadcast %cst_134 : f32 to vector<8x1xf32>
    %469 = arith.divf %467, %468 : vector<8x1xf32>
    %470 = vector.broadcast %469 : vector<8x1xf32> to vector<8x32xf32>
    %471 = arith.subf %463, %470 : vector<8x32xf32>
    %472 = arith.mulf %471, %471 : vector<8x32xf32>
    %cst_135 = arith.constant dense<0.000000e+00> : vector<8xf32>
    %473 = vector.multi_reduction <add>, %472, %cst_135 [1] : vector<8x32xf32> to vector<8xf32>
    %474 = vector.shape_cast %473 : vector<8xf32> to vector<8x1xf32>
    %cst_136 = arith.constant 3.200000e+01 : f32
    %475 = vector.broadcast %cst_136 : f32 to vector<8x1xf32>
    %476 = arith.divf %474, %475 : vector<8x1xf32>
    %cst_137 = arith.constant 9.99999974E-6 : f32
    %477 = vector.broadcast %cst_137 : f32 to vector<8x1xf32>
    %478 = arith.addf %476, %477 : vector<8x1xf32>
    %479 = math.rsqrt %478 : vector<8x1xf32>
    %480 = vector.broadcast %479 : vector<8x1xf32> to vector<8x32xf32>
    %481 = arith.mulf %471, %480 : vector<8x32xf32>
    %482 = vector.broadcast %464 : vector<1x32xf32> to vector<8x32xf32>
    %483 = arith.mulf %481, %482 : vector<8x32xf32>
    %484 = vector.broadcast %465 : vector<1x32xf32> to vector<8x32xf32>
    %485 = arith.addf %483, %484 : vector<8x32xf32>
    %c8 = arith.constant 8 : index
    %c0_138 = arith.constant 0 : index
    %c0_139 = arith.constant 0 : index
    %486 = vector.load %arg6[%c8, %c0_138, %c0_139] : memref<10x32x128xf32, #tpu.memory_space<vmem>>, vector<1x32x64xf32>
    %487 = vector.shape_cast %486 : vector<1x32x64xf32> to vector<32x64xf32>
    %cst_140 = arith.constant dense<0.000000e+00> : vector<8x64xf32>
    %488 = tpu.matmul %485, %487, %cst_140 {dimension_numbers = #tpu.dot_dimension_numbers<[1], [0], [0], [1], [0, 0, 1, 1], [], []>} : vector<8x32xf32>, vector<32x64xf32>, vector<8x64xf32> -> vector<8x64xf32>
    %489 = vector.extract_strided_slice %0 {offsets = [27, 0], sizes = [1, 64], strides = [1, 1]} : vector<38x128xf32> to vector<1x64xf32>
    %490 = vector.broadcast %489 : vector<1x64xf32> to vector<8x64xf32>
    %491 = arith.addf %488, %490 : vector<8x64xf32>
    %492 = arith.mulf %491, %491 : vector<8x64xf32>
    %493 = arith.mulf %491, %492 : vector<8x64xf32>
    %cst_141 = arith.constant 4.471500e-02 : f32
    %494 = vector.broadcast %cst_141 : f32 to vector<8x64xf32>
    %495 = arith.mulf %494, %493 : vector<8x64xf32>
    %496 = arith.addf %491, %495 : vector<8x64xf32>
    %cst_142 = arith.constant 0.797884583 : f32
    %497 = vector.broadcast %cst_142 : f32 to vector<8x64xf32>
    %498 = arith.mulf %497, %496 : vector<8x64xf32>
    %499 = math.tanh %498 : vector<8x64xf32>
    %cst_143 = arith.constant 1.000000e+00 : f32
    %500 = vector.broadcast %cst_143 : f32 to vector<8x64xf32>
    %501 = arith.addf %500, %499 : vector<8x64xf32>
    %cst_144 = arith.constant 5.000000e-01 : f32
    %502 = vector.broadcast %cst_144 : f32 to vector<8x64xf32>
    %503 = arith.mulf %502, %501 : vector<8x64xf32>
    %504 = arith.mulf %491, %503 : vector<8x64xf32>
    %c1_145 = arith.constant 1 : index
    %c0_146 = arith.constant 0 : index
    %c0_147 = arith.constant 0 : index
    %505 = vector.load %arg7[%c1_145, %c0_146, %c0_147] : memref<2x64x32xf32, #tpu.memory_space<vmem>>, vector<1x64x32xf32>
    %506 = vector.shape_cast %505 : vector<1x64x32xf32> to vector<64x32xf32>
    %cst_148 = arith.constant dense<0.000000e+00> : vector<8x32xf32>
    %507 = tpu.matmul %504, %506, %cst_148 {dimension_numbers = #tpu.dot_dimension_numbers<[1], [0], [0], [1], [0, 0, 1, 1], [], []>} : vector<8x64xf32>, vector<64x32xf32>, vector<8x32xf32> -> vector<8x32xf32>
    %508 = arith.addf %463, %507 : vector<8x32xf32>
    %509 = vector.extract_strided_slice %0 {offsets = [28, 0], sizes = [1, 32], strides = [1, 1]} : vector<38x128xf32> to vector<1x32xf32>
    %510 = vector.broadcast %509 : vector<1x32xf32> to vector<8x32xf32>
    %511 = arith.addf %508, %510 : vector<8x32xf32>
    %512 = vector.extract_strided_slice %0 {offsets = [12, 0], sizes = [1, 32], strides = [1, 1]} : vector<38x128xf32> to vector<1x32xf32>
    %513 = vector.extract_strided_slice %0 {offsets = [17, 0], sizes = [1, 32], strides = [1, 1]} : vector<38x128xf32> to vector<1x32xf32>
    %cst_149 = arith.constant dense<0.000000e+00> : vector<8xf32>
    %514 = vector.multi_reduction <add>, %511, %cst_149 [1] : vector<8x32xf32> to vector<8xf32>
    %515 = vector.shape_cast %514 : vector<8xf32> to vector<8x1xf32>
    %cst_150 = arith.constant 3.200000e+01 : f32
    %516 = vector.broadcast %cst_150 : f32 to vector<8x1xf32>
    %517 = arith.divf %515, %516 : vector<8x1xf32>
    %518 = vector.broadcast %517 : vector<8x1xf32> to vector<8x32xf32>
    %519 = arith.subf %511, %518 : vector<8x32xf32>
    %520 = arith.mulf %519, %519 : vector<8x32xf32>
    %cst_151 = arith.constant dense<0.000000e+00> : vector<8xf32>
    %521 = vector.multi_reduction <add>, %520, %cst_151 [1] : vector<8x32xf32> to vector<8xf32>
    %522 = vector.shape_cast %521 : vector<8xf32> to vector<8x1xf32>
    %cst_152 = arith.constant 3.200000e+01 : f32
    %523 = vector.broadcast %cst_152 : f32 to vector<8x1xf32>
    %524 = arith.divf %522, %523 : vector<8x1xf32>
    %cst_153 = arith.constant 9.99999974E-6 : f32
    %525 = vector.broadcast %cst_153 : f32 to vector<8x1xf32>
    %526 = arith.addf %524, %525 : vector<8x1xf32>
    %527 = math.rsqrt %526 : vector<8x1xf32>
    %528 = vector.broadcast %527 : vector<8x1xf32> to vector<8x32xf32>
    %529 = arith.mulf %519, %528 : vector<8x32xf32>
    %530 = vector.broadcast %512 : vector<1x32xf32> to vector<8x32xf32>
    %531 = arith.mulf %529, %530 : vector<8x32xf32>
    %532 = vector.broadcast %513 : vector<1x32xf32> to vector<8x32xf32>
    %533 = arith.addf %531, %532 : vector<8x32xf32>
    %c9 = arith.constant 9 : index
    %c0_154 = arith.constant 0 : index
    %c0_155 = arith.constant 0 : index
    %534 = vector.load %arg6[%c9, %c0_154, %c0_155] : memref<10x32x128xf32, #tpu.memory_space<vmem>>, vector<1x32x128xf32>
    %535 = vector.shape_cast %534 : vector<1x32x128xf32> to vector<32x128xf32>
    %cst_156 = arith.constant dense<0.000000e+00> : vector<8x128xf32>
    %536 = tpu.matmul %533, %535, %cst_156 {dimension_numbers = #tpu.dot_dimension_numbers<[1], [0], [0], [1], [0, 0, 1, 1], [], []>} : vector<8x32xf32>, vector<32x128xf32>, vector<8x128xf32> -> vector<8x128xf32>
    %537 = vector.extract_strided_slice %0 {offsets = [29, 0], sizes = [1, 128], strides = [1, 1]} : vector<38x128xf32> to vector<1x128xf32>
    %538 = vector.broadcast %537 : vector<1x128xf32> to vector<8x128xf32>
    %539 = arith.addf %536, %538 : vector<8x128xf32>
    %c0_157 = arith.constant 0 : index
    %c0_158 = arith.constant 0 : index
    %540 = vector.load %arg9[%c0_157, %c0_158] : memref<8x128xf32, #tpu.memory_space<vmem>>, vector<8x128xf32>
    tpu.vector_store %arg9[%c0_157, %c0_158], %539 {strides = array<i32>} : memref<8x128xf32, #tpu.memory_space<vmem>>, vector<8x128xf32>,
    %cst_159 = arith.constant dense<0xFF800000> : vector<8xf32>
    %541 = vector.multi_reduction <maximumf>, %539, %cst_159 [1] : vector<8x128xf32> to vector<8xf32>
    %542 = vector.shape_cast %541 : vector<8xf32> to vector<8x1xf32>
    %543 = vector.broadcast %542 : vector<8x1xf32> to vector<8x128xf32>
    %544 = arith.cmpf oeq, %539, %543 : vector<8x128xf32>
    %c128_i32 = arith.constant 128 : i32
    %545 = vector.broadcast %c128_i32 : i32 to vector<8x128xi32>
    %546 = arith.select %544, %4, %545 : vector<8x128xi1>, vector<8x128xi32>
    %cst_160 = arith.constant dense<2147483647> : vector<8xi32>
    %547 = vector.multi_reduction <minsi>, %546, %cst_160 [1] : vector<8x128xi32> to vector<8xi32>
    %548 = vector.shape_cast %547 : vector<8xi32> to vector<8x1xi32>
    %c0_161 = arith.constant 0 : index
    %c0_162 = arith.constant 0 : index
    %549 = vector.load %arg10[%c0_161, %c0_162] : memref<8x1xi32, #tpu.memory_space<vmem>>, vector<8x1xi32>
    tpu.vector_store %arg10[%c0_161, %c0_162], %548 {strides = array<i32>} : memref<8x1xi32, #tpu.memory_space<vmem>>, vector<8x1xi32>,
    %c0_163 = arith.constant 0 : index
    %c0_164 = arith.constant 0 : index
    %550 = vector.load %arg3[%c0_163, %c0_164] : memref<8x1xi32, #tpu.memory_space<vmem>>, vector<8x1xi32>
    %551 = vector.broadcast %542 : vector<8x1xf32> to vector<8x128xf32>
    %552 = arith.subf %539, %551 : vector<8x128xf32>
    %553 = math.exp %552 : vector<8x128xf32>
    %cst_165 = arith.constant dense<0.000000e+00> : vector<8xf32>
    %554 = vector.multi_reduction <add>, %553, %cst_165 [1] : vector<8x128xf32> to vector<8xf32>
    %555 = vector.shape_cast %554 : vector<8xf32> to vector<8x1xf32>
    %556 = math.log %555 : vector<8x1xf32>
    %557 = arith.addf %542, %556 : vector<8x1xf32>
    %c-100_i32 = arith.constant -100 : i32
    %558 = vector.broadcast %c-100_i32 : i32 to vector<8x1xi32>
    %559 = arith.cmpi ne, %550, %558 : vector<8x1xi32>
    %c0_i32 = arith.constant 0 : i32
    %560 = vector.broadcast %c0_i32 : i32 to vector<8x1xi32>
    %561 = arith.select %559, %550, %560 : vector<8x1xi1>, vector<8x1xi32>
    %562 = vector.broadcast %561 : vector<8x1xi32> to vector<8x128xi32>
    %563 = arith.cmpi eq, %4, %562 : vector<8x128xi32>
    %cst_166 = arith.constant 0.000000e+00 : f32
    %564 = vector.broadcast %cst_166 : f32 to vector<8x128xf32>
    %565 = arith.select %563, %539, %564 : vector<8x128xi1>, vector<8x128xf32>
    %cst_167 = arith.constant dense<0.000000e+00> : vector<8xf32>
    %566 = vector.multi_reduction <add>, %565, %cst_167 [1] : vector<8x128xf32> to vector<8xf32>
    %567 = vector.shape_cast %566 : vector<8xf32> to vector<8x1xf32>
    %568 = arith.subf %557, %567 : vector<8x1xf32>
    %cst_168 = arith.constant 0.000000e+00 : f32
    %569 = vector.broadcast %cst_168 : f32 to vector<8x1xf32>
    %570 = arith.select %559, %568, %569 : vector<8x1xi1>, vector<8x1xf32>
    %cst_169 = arith.constant dense<0.000000e+00> : vector<1xf32>
    %571 = vector.multi_reduction <add>, %570, %cst_169 [0] : vector<8x1xf32> to vector<1xf32>
    %572 = vector.shape_cast %571 : vector<1xf32> to vector<1x1xf32>
    %c0_170 = arith.constant 0 : index
    %c0_171 = arith.constant 0 : index
    %c0_172 = arith.constant 0 : index
    %573 = vector.load %arg11[%c0_170, %c0_171, %c0_172] : memref<1x1x1xf32, #tpu.memory_space<vmem>>, vector<1x1x1xf32>
    %574 = vector.shape_cast %573 : vector<1x1x1xf32> to vector<1x1xf32>
    %575 = vector.shape_cast %572 : vector<1x1xf32> to vector<1x1x1xf32>
    tpu.vector_store %arg11[%c0_170, %c0_171, %c0_172], %575 {strides = array<i32>} : memref<1x1x1xf32, #tpu.memory_space<vmem>>, vector<1x1x1xf32>,
    %576 = arith.extui %559 : vector<8x1xi1> to vector<8x1xi32>
    %577 = arith.sitofp %576 : vector<8x1xi32> to vector<8x1xf32>
    %cst_173 = arith.constant dense<0.000000e+00> : vector<1xf32>
    %578 = vector.multi_reduction <add>, %577, %cst_173 [0] : vector<8x1xf32> to vector<1xf32>
    %579 = vector.shape_cast %578 : vector<1xf32> to vector<1x1xf32>
    %c0_174 = arith.constant 0 : index
    %c0_175 = arith.constant 0 : index
    %c0_176 = arith.constant 0 : index
    %580 = vector.load %arg12[%c0_174, %c0_175, %c0_176] : memref<1x1x1xf32, #tpu.memory_space<vmem>>, vector<1x1x1xf32>
    %581 = vector.shape_cast %580 : vector<1x1x1xf32> to vector<1x1xf32>
    %582 = vector.shape_cast %579 : vector<1x1xf32> to vector<1x1x1xf32>
    tpu.vector_store %arg12[%c0_174, %c0_175, %c0_176], %582 {strides = array<i32>} : memref<1x1x1xf32, #tpu.memory_space<vmem>>, vector<1x1x1xf32>,
    return
  }
  func.func @transform_0(%arg0: i32) -> (i32, i32) {
    %c0_i32 = arith.constant 0 : i32
    %c0_i32_0 = arith.constant 0 : i32
    return %arg0, %c0_i32 : i32, i32
  }
  func.func @transform_1(%arg0: i32) -> (i32, i32) {
    %c0_i32 = arith.constant 0 : i32
    %c0_i32_0 = arith.constant 0 : i32
    return %arg0, %c0_i32 : i32, i32
  }
  func.func @transform_2(%arg0: i32) -> (i32, i32) {
    %c0_i32 = arith.constant 0 : i32
    %c0_i32_0 = arith.constant 0 : i32
    return %arg0, %c0_i32 : i32, i32
  }
  func.func @transform_3(%arg0: i32) -> (i32, i32, i32) {
    %c0_i32 = arith.constant 0 : i32
    %c0_i32_0 = arith.constant 0 : i32
    %c0_i32_1 = arith.constant 0 : i32
    return %arg0, %c0_i32, %c0_i32_0 : i32, i32, i32
  }
  func.func @transform_4(%arg0: i32) -> (i32, i32) {
    %c0_i32 = arith.constant 0 : i32
    %c0_i32_0 = arith.constant 0 : i32
    %c0_i32_1 = arith.constant 0 : i32
    return %c0_i32, %c0_i32_0 : i32, i32
  }
  func.func @transform_5(%arg0: i32) -> (i32, i32, i32) {
    %c0_i32 = arith.constant 0 : i32
    %c0_i32_0 = arith.constant 0 : i32
    %c0_i32_1 = arith.constant 0 : i32
    %c0_i32_2 = arith.constant 0 : i32
    return %c0_i32, %c0_i32_0, %c0_i32_1 : i32, i32, i32
  }
  func.func @transform_6(%arg0: i32) -> (i32, i32, i32) {
    %c0_i32 = arith.constant 0 : i32
    %c0_i32_0 = arith.constant 0 : i32
    %c0_i32_1 = arith.constant 0 : i32
    %c0_i32_2 = arith.constant 0 : i32
    return %c0_i32, %c0_i32_0, %c0_i32_1 : i32, i32, i32
  }
  func.func @transform_7(%arg0: i32) -> (i32, i32) {
    %c0_i32 = arith.constant 0 : i32
    %c0_i32_0 = arith.constant 0 : i32
    %c0_i32_1 = arith.constant 0 : i32
    return %c0_i32, %c0_i32_0 : i32, i32
  }
  func.func @transform_8(%arg0: i32) -> (i32, i32) {
    %c0_i32 = arith.constant 0 : i32
    %c0_i32_0 = arith.constant 0 : i32
    return %arg0, %c0_i32 : i32, i32
  }
  func.func @transform_9(%arg0: i32) -> (i32, i32) {
    %c0_i32 = arith.constant 0 : i32
    %c0_i32_0 = arith.constant 0 : i32
    return %arg0, %c0_i32 : i32, i32
  }
  func.func @transform_10(%arg0: i32) -> (i32, i32, i32) {
    %c0_i32 = arith.constant 0 : i32
    %c0_i32_0 = arith.constant 0 : i32
    %c0_i32_1 = arith.constant 0 : i32
    return %arg0, %c0_i32, %c0_i32_0 : i32, i32, i32
  }
  func.func @transform_11(%arg0: i32) -> (i32, i32, i32) {
    %c0_i32 = arith.constant 0 : i32
    %c0_i32_0 = arith.constant 0 : i32
    %c0_i32_1 = arith.constant 0 : i32
    return %arg0, %c0_i32, %c0_i32_0 : i32, i32, i32
  }
}

</mosaic_0001>

<llo_original>
// kernel: transformer_with_tr_forward.1
$region0: #{transformer_with_tr_forward.1}
  #allocation0 [shape = 'u32[]', space=smem, size = 0x4, offset = 0x4, fixed_abs, tag = 'smem constant byte address 0x4 - core index']
  #allocation1 [shape = 'u32[72,128]{1,0:T(1,128)}', space=vmem, size = 0x9000, scoped, tag = 'internal scratch']
  %s0 = inlined_call_operand.vmem [shape: s32[16,1], index: 0, kind: input, shape index: {}]
  %s1 = inlined_call_operand.vmem [shape: s32[16,1], index: 1, kind: input, shape index: {}]
  %s2 = inlined_call_operand.vmem [shape: s32[16,1], index: 2, kind: input, shape index: {}]
  %s3 = inlined_call_operand.vmem [shape: f32[2,1,8], index: 3, kind: input, shape index: {}]
  %s4 = inlined_call_operand.vmem [shape: f32[128,32], index: 4, kind: input, shape index: {}]
  %s5 = inlined_call_operand.vmem [shape: f32[10,32,128], index: 5, kind: input, shape index: {}]
  %s6 = inlined_call_operand.vmem [shape: f32[2,64,32], index: 6, kind: input, shape index: {}]
  %s7 = inlined_call_operand.vmem [shape: f32[38,128], index: 7, kind: input, shape index: {}]
  %s8 = inlined_call_operand.hbm [shape: f32[16,128], index: 8, kind: output, shape index: {0}]
  %s9 = inlined_call_operand.vmem [shape: s32[16,1], index: 9, kind: output, shape index: {1}]
  %s10 = inlined_call_operand.vmem [shape: f32[2,1,1], index: 10, kind: output, shape index: {2}]
  %s11 = inlined_call_operand.vmem [shape: f32[2,1,1], index: 11, kind: output, shape index: {3}]
  %12 = xla_tuple %s8, %s9, %s10, %s11
  %s13 = sld [smem:[#allocation0]]
  $region89: #{transformer_with_tr_forward.1} parent=0
    _
  %s15 = ssub.s32 1, %s13
  %s16 = scalar_select 0, %s15, %s13
  $region1: #{transformer_with_tr_forward.1} parent=0
    #allocation2 [shape = 'u8[8192]{0}', space=vmem, size = 0x2000, scoped, tag = 'output window, operand 0']
    #allocation3 [shape = 's32[2]{0}', space=sflag, size = 0x8, scoped, tag = 'scoped memory for transformer_with_tr_forward.1']
    %17 = vsyncpa [#allocation3], 0
    %s18 = scalar_lea.sflag [#allocation3], 1
    %19 = vsyncpa %s18, 0
    loop: start=0, step=1, limit=4
    $region2: #{transformer_with_tr_forward.1} parent=1 // loop_pre_header
      _
    $region3: #{transformer_with_tr_forward.1} parent=1 // loop_header
      %s21 = sphi 0, %s25
      %p22 = scmp.ge.s32.totalorder %s21, 4
      %s31 = sphi 0, %s33
      %s34 = sphi 0, %s31
      %s35 = sphi 0, %s34
      %s51 = sphi 0, %s35
      %s57 = sphi 0, %s59
      %s60 = sphi 0, %s57
      %s61 = sphi 0, %s60
      %s77 = sphi 0, %s61
      %s83 = sphi 0, %s85
      %s86 = sphi 0, %s83
      %s87 = sphi 0, %s86
      %s103 = sphi 0, %s87
      %s109 = sphi 0, %s111
      %s112 = sphi 0, %s109
      %s113 = sphi 0, %s112
      %s129 = sphi 0, %s113
      %s133 = sphi 0, %s133
      %s135 = sphi 0, %s133
      %s136 = sphi 0, %s135
      %s150 = sphi 0, %s136
      %s154 = sphi 0, %s154
      %s156 = sphi 0, %s154
      %s157 = sphi 0, %s156
      %s171 = sphi 0, %s157
      %s175 = sphi 0, %s175
      %s177 = sphi 0, %s175
      %s178 = sphi 0, %s177
      %s192 = sphi 0, %s178
      %s196 = sphi 0, %s196
      %s198 = sphi 0, %s196
      %s199 = sphi 0, %s198
      %s213 = sphi 0, %s199
      %s219 = sphi 0, %s221
      %s222 = sphi 0, %s219
      %s223 = sphi 0, %s222
      %s239 = sphi 0, %s223
      %s245 = sphi 0, %s247
      %s248 = sphi 0, %s245
      %s249 = sphi 0, %s248
      %s265 = sphi 0, %s249
      %s271 = sphi 0, %s273
      %s274 = sphi 0, %s271
      %s275 = sphi 0, %s274
      %s291 = sphi 0, %s275
      %s297 = sphi 0, %s299
      %s300 = sphi 0, %s297
      %s301 = sphi 0, %s300
      %s317 = sphi 0, %s301
    $region4: #{transformer_with_tr_forward.1} parent=1 // loop_header_branch
      %24 = sbr.rel (%p22) target = $region8
    $region5: #{transformer_with_tr_forward.1} parent=1 // loop_body
      %s26 = ssub.s32 %s21, 1
      %s27 = ssub.s32 %s21, 2
      %s28 = sadd.s32 %s21, 1
      %s29 = ssub.s32 %s21, %s28
      %p30 = scmp.eq.s32.totalorder %s29, 0
      %s32 = sadd.s32 %s31, 1
      %s33 = scalar_select %p30, %s31, %s32
      %p36 = pneg %p30
      %p37 = scmp.eq.s32.totalorder %s21, 1
      %p38 = por %p36, %p37
      %p39 = scmp.ne.s32.totalorder %s31, %s34
      %p40 = scmp.eq.s32.totalorder %s21, 0
      %p41 = por %p39, %p40
      %p42 = scmp.ne.s32.totalorder %s31, %s34
      %p43 = scmp.eq.s32.totalorder %s26, 1
      %p44 = por %p42, %p43
      %p45 = scmp.ne.s32.totalorder %s34, %s35
      %p46 = scmp.eq.s32.totalorder %s26, 0
      %p47 = por %p45, %p46
      %p48 = scmp.ne.s32.totalorder %s34, %s35
      %p49 = scmp.eq.s32.totalorder %s27, 1
      %p50 = por %p48, %p49
      %p52 = scmp.ne.s32.totalorder %s35, %s51
      %p53 = scmp.eq.s32.totalorder %s27, 0
      %p54 = por %p52, %p53
      %s55 = ssub.s32 %s21, %s28
      %p56 = scmp.eq.s32.totalorder %s55, 0
      %s58 = sadd.s32 %s57, 1
      %s59 = scalar_select %p56, %s57, %s58
      %p62 = pneg %p56
      %p63 = scmp.eq.s32.totalorder %s21, 1
      %p64 = por %p62, %p63
      %p65 = scmp.ne.s32.totalorder %s57, %s60
      %p66 = scmp.eq.s32.totalorder %s21, 0
      %p67 = por %p65, %p66
      %p68 = scmp.ne.s32.totalorder %s57, %s60
      %p69 = scmp.eq.s32.totalorder %s26, 1
      %p70 = por %p68, %p69
      %p71 = scmp.ne.s32.totalorder %s60, %s61
      %p72 = scmp.eq.s32.totalorder %s26, 0
      %p73 = por %p71, %p72
      %p74 = scmp.ne.s32.totalorder %s60, %s61
      %p75 = scmp.eq.s32.totalorder %s27, 1
      %p76 = por %p74, %p75
      %p78 = scmp.ne.s32.totalorder %s61, %s77
      %p79 = scmp.eq.s32.totalorder %s27, 0
      %p80 = por %p78, %p79
      %s81 = ssub.s32 %s21, %s28
      %p82 = scmp.eq.s32.totalorder %s81, 0
      %s84 = sadd.s32 %s83, 1
      %s85 = scalar_select %p82, %s83, %s84
      %p88 = pneg %p82
      %p89 = scmp.eq.s32.totalorder %s21, 1
      %p90 = por %p88, %p89
      %p91 = scmp.ne.s32.totalorder %s83, %s86
      %p92 = scmp.eq.s32.totalorder %s21, 0
      %p93 = por %p91, %p92
      %p94 = scmp.ne.s32.totalorder %s83, %s86
      %p95 = scmp.eq.s32.totalorder %s26, 1
      %p96 = por %p94, %p95
      %p97 = scmp.ne.s32.totalorder %s86, %s87
      %p98 = scmp.eq.s32.totalorder %s26, 0
      %p99 = por %p97, %p98
      %p100 = scmp.ne.s32.totalorder %s86, %s87
      %p101 = scmp.eq.s32.totalorder %s27, 1
      %p102 = por %p100, %p101
      %p104 = scmp.ne.s32.totalorder %s87, %s103
      %p105 = scmp.eq.s32.totalorder %s27, 0
      %p106 = por %p104, %p105
      %s107 = ssub.s32 %s21, %s28
      %p108 = scmp.eq.s32.totalorder %s107, 0
      %s110 = sadd.s32 %s109, 1
      %s111 = scalar_select %p108, %s109, %s110
      %p114 = pneg %p108
      %p115 = scmp.eq.s32.totalorder %s21, 1
      %p116 = por %p114, %p115
      %p117 = scmp.ne.s32.totalorder %s109, %s112
      %p118 = scmp.eq.s32.totalorder %s21, 0
      %p119 = por %p117, %p118
      %p120 = scmp.ne.s32.totalorder %s109, %s112
      %p121 = scmp.eq.s32.totalorder %s26, 1
      %p122 = por %p120, %p121
      %p123 = scmp.ne.s32.totalorder %s112, %s113
      %p124 = scmp.eq.s32.totalorder %s26, 0
      %p125 = por %p123, %p124
      %p126 = scmp.ne.s32.totalorder %s112, %s113
      %p127 = scmp.eq.s32.totalorder %s27, 1
      %p128 = por %p126, %p127
      %p130 = scmp.ne.s32.totalorder %s113, %s129
      %p131 = scmp.eq.s32.totalorder %s27, 0
      %p132 = por %p130, %p131
      %s134 = sadd.s32 %s133, 1
      %p137 = scmp.eq.s32.totalorder %s21, 1
      %p138 = scmp.ne.s32.totalorder %s133, %s135
      %p139 = scmp.eq.s32.totalorder %s21, 0
      %p140 = por %p138, %p139
      %p141 = scmp.ne.s32.totalorder %s133, %s135
      %p142 = scmp.eq.s32.totalorder %s26, 1
      %p143 = por %p141, %p142
      %p144 = scmp.ne.s32.totalorder %s135, %s136
      %p145 = scmp.eq.s32.totalorder %s26, 0
      %p146 = por %p144, %p145
      %p147 = scmp.ne.s32.totalorder %s135, %s136
      %p148 = scmp.eq.s32.totalorder %s27, 1
      %p149 = por %p147, %p148
      %p151 = scmp.ne.s32.totalorder %s136, %s150
      %p152 = scmp.eq.s32.totalorder %s27, 0
      %p153 = por %p151, %p152
      %s155 = sadd.s32 %s154, 1
      %p158 = scmp.eq.s32.totalorder %s21, 1
      %p159 = scmp.ne.s32.totalorder %s154, %s156
      %p160 = scmp.eq.s32.totalorder %s21, 0
      %p161 = por %p159, %p160
      %p162 = scmp.ne.s32.totalorder %s154, %s156
      %p163 = scmp.eq.s32.totalorder %s26, 1
      %p164 = por %p162, %p163
      %p165 = scmp.ne.s32.totalorder %s156, %s157
      %p166 = scmp.eq.s32.totalorder %s26, 0
      %p167 = por %p165, %p166
      %p168 = scmp.ne.s32.totalorder %s156, %s157
      %p169 = scmp.eq.s32.totalorder %s27, 1
      %p170 = por %p168, %p169
      %p172 = scmp.ne.s32.totalorder %s157, %s171
      %p173 = scmp.eq.s32.totalorder %s27, 0
      %p174 = por %p172, %p173
      %s176 = sadd.s32 %s175, 1
      %p179 = scmp.eq.s32.totalorder %s21, 1
      %p180 = scmp.ne.s32.totalorder %s175, %s177
      %p181 = scmp.eq.s32.totalorder %s21, 0
      %p182 = por %p180, %p181
      %p183 = scmp.ne.s32.totalorder %s175, %s177
      %p184 = scmp.eq.s32.totalorder %s26, 1
      %p185 = por %p183, %p184
      %p186 = scmp.ne.s32.totalorder %s177, %s178
      %p187 = scmp.eq.s32.totalorder %s26, 0
      %p188 = por %p186, %p187
      %p189 = scmp.ne.s32.totalorder %s177, %s178
      %p190 = scmp.eq.s32.totalorder %s27, 1
      %p191 = por %p189, %p190
      %p193 = scmp.ne.s32.totalorder %s178, %s192
      %p194 = scmp.eq.s32.totalorder %s27, 0
      %p195 = por %p193, %p194
      %s197 = sadd.s32 %s196, 1
      %p200 = scmp.eq.s32.totalorder %s21, 1
      %p201 = scmp.ne.s32.totalorder %s196, %s198
      %p202 = scmp.eq.s32.totalorder %s21, 0
      %p203 = por %p201, %p202
      %p204 = scmp.ne.s32.totalorder %s196, %s198
      %p205 = scmp.eq.s32.totalorder %s26, 1
      %p206 = por %p204, %p205
      %p207 = scmp.ne.s32.totalorder %s198, %s199
      %p208 = scmp.eq.s32.totalorder %s26, 0
      %p209 = por %p207, %p208
      %p210 = scmp.ne.s32.totalorder %s198, %s199
      %p211 = scmp.eq.s32.totalorder %s27, 1
      %p212 = por %p210, %p211
      %p214 = scmp.ne.s32.totalorder %s199, %s213
      %p215 = scmp.eq.s32.totalorder %s27, 0
      %p216 = por %p214, %p215
      %s217 = ssub.s32 %s21, %s28
      %p218 = scmp.eq.s32.totalorder %s217, 0
      %s220 = sadd.s32 %s219, 1
      %s221 = scalar_select %p218, %s219, %s220
      %p224 = pneg %p218
      %p225 = scmp.eq.s32.totalorder %s21, 1
      %p226 = por %p224, %p225
      %p227 = scmp.ne.s32.totalorder %s219, %s222
      %p228 = scmp.eq.s32.totalorder %s21, 0
      %p229 = por %p227, %p228
      %p230 = scmp.ne.s32.totalorder %s219, %s222
      %p231 = scmp.eq.s32.totalorder %s26, 1
      %p232 = por %p230, %p231
      %p233 = scmp.ne.s32.totalorder %s222, %s223
      %p234 = scmp.eq.s32.totalorder %s26, 0
      %p235 = por %p233, %p234
      %p236 = scmp.ne.s32.totalorder %s222, %s223
      %p237 = scmp.eq.s32.totalorder %s27, 1
      %p238 = por %p236, %p237
      %p240 = scmp.ne.s32.totalorder %s223, %s239
      %p241 = scmp.eq.s32.totalorder %s27, 0
      %p242 = por %p240, %p241
      %s243 = ssub.s32 %s21, %s28
      %p244 = scmp.eq.s32.totalorder %s243, 0
      %s246 = sadd.s32 %s245, 1
      %s247 = scalar_select %p244, %s245, %s246
      %p250 = pneg %p244
      %p251 = scmp.eq.s32.totalorder %s21, 1
      %p252 = por %p250, %p251
      %p253 = scmp.ne.s32.totalorder %s245, %s248
      %p254 = scmp.eq.s32.totalorder %s21, 0
      %p255 = por %p253, %p254
      %p256 = scmp.ne.s32.totalorder %s245, %s248
      %p257 = scmp.eq.s32.totalorder %s26, 1
      %p258 = por %p256, %p257
      %p259 = scmp.ne.s32.totalorder %s248, %s249
      %p260 = scmp.eq.s32.totalorder %s26, 0
      %p261 = por %p259, %p260
      %p262 = scmp.ne.s32.totalorder %s248, %s249
      %p263 = scmp.eq.s32.totalorder %s27, 1
      %p264 = por %p262, %p263
      %p266 = scmp.ne.s32.totalorder %s249, %s265
      %p267 = scmp.eq.s32.totalorder %s27, 0
      %p268 = por %p266, %p267
      %s269 = ssub.s32 %s21, %s28
      %p270 = scmp.eq.s32.totalorder %s269, 0
      %s272 = sadd.s32 %s271, 1
      %s273 = scalar_select %p270, %s271, %s272
      %p276 = pneg %p270
      %p277 = scmp.eq.s32.totalorder %s21, 1
      %p278 = por %p276, %p277
      %p279 = scmp.ne.s32.totalorder %s271, %s274
      %p280 = scmp.eq.s32.totalorder %s21, 0
      %p281 = por %p279, %p280
      %p282 = scmp.ne.s32.totalorder %s271, %s274
      %p283 = scmp.eq.s32.totalorder %s26, 1
      %p284 = por %p282, %p283
      %p285 = scmp.ne.s32.totalorder %s274, %s275
      %p286 = scmp.eq.s32.totalorder %s26, 0
      %p287 = por %p285, %p286
      %p288 = scmp.ne.s32.totalorder %s274, %s275
      %p289 = scmp.eq.s32.totalorder %s27, 1
      %p290 = por %p288, %p289
      %p292 = scmp.ne.s32.totalorder %s275, %s291
      %p293 = scmp.eq.s32.totalorder %s27, 0
      %p294 = por %p292, %p293
      %s295 = ssub.s32 %s21, %s28
      %p296 = scmp.eq.s32.totalorder %s295, 0
      %s298 = sadd.s32 %s297, 1
      %s299 = scalar_select %p296, %s297, %s298
      %p302 = pneg %p296
      %p303 = scmp.eq.s32.totalorder %s21, 1
      %p304 = por %p302, %p303
      %p305 = scmp.ne.s32.totalorder %s297, %s300
      %p306 = scmp.eq.s32.totalorder %s21, 0
      %p307 = por %p305, %p306
      %p308 = scmp.ne.s32.totalorder %s297, %s300
      %p309 = scmp.eq.s32.totalorder %s26, 1
      %p310 = por %p308, %p309
      %p311 = scmp.ne.s32.totalorder %s300, %s301
      %p312 = scmp.eq.s32.totalorder %s26, 0
      %p313 = por %p311, %p312
      %p314 = scmp.ne.s32.totalorder %s300, %s301
      %p315 = scmp.eq.s32.totalorder %s27, 1
      %p316 = por %p314, %p315
      %p318 = scmp.ne.s32.totalorder %s301, %s317
      %p319 = scmp.eq.s32.totalorder %s27, 0
      %p320 = por %p318, %p319
      %p321 = scmp.le.s32.totalorder 1, %s21
      %p322 = scmp.lt.s32.totalorder %s21, 3
      %p323 = pnand %p321, %p322
      %p324 = pneg %p323
      // Predicated region
      $region9: #{transformer_with_tr_forward.1} parent=5 // pred_check
        _
      $region10: #{transformer_with_tr_forward.1} parent=5 // pred_check_branch
        %326 = sbr.rel (%p323) target = $region12
      $region11: #{transformer_with_tr_forward.1} parent=5 // pred_region
        %s327 = ssub.s32 %s21, 1
        // Predicated region
        $region13: #{transformer_with_tr_forward.1} parent=11 // pred_check
          %p328 = pneg %p146
        $region14: #{transformer_with_tr_forward.1} parent=11 // pred_check_branch
          %330 = sbr.rel (%p328) target = $region16
        $region15: #{transformer_with_tr_forward.1} parent=11 // pred_region
          _
        $region16: #{transformer_with_tr_forward.1} parent=11 // pred_fallthru
          _
        // Predicated region
        $region17: #{transformer_with_tr_forward.1} parent=11 // pred_check
          %p331 = pneg %p167
        $region18: #{transformer_with_tr_forward.1} parent=11 // pred_check_branch
          %333 = sbr.rel (%p331) target = $region20
        $region19: #{transformer_with_tr_forward.1} parent=11 // pred_region
          _
        $region20: #{transformer_with_tr_forward.1} parent=11 // pred_fallthru
          _
        // Predicated region
        $region21: #{transformer_with_tr_forward.1} parent=11 // pred_check
          %p334 = pneg %p188
        $region22: #{transformer_with_tr_forward.1} parent=11 // pred_check_branch
          %336 = sbr.rel (%p334) target = $region24
        $region23: #{transformer_with_tr_forward.1} parent=11 // pred_region
          _
        $region24: #{transformer_with_tr_forward.1} parent=11 // pred_fallthru
          _
        // Predicated region
        $region25: #{transformer_with_tr_forward.1} parent=11 // pred_check
          %p337 = pneg %p209
        $region26: #{transformer_with_tr_forward.1} parent=11 // pred_check_branch
          %339 = sbr.rel (%p337) target = $region28
        $region27: #{transformer_with_tr_forward.1} parent=11 // pred_region
          _
        $region28: #{transformer_with_tr_forward.1} parent=11 // pred_fallthru
          _
      $region12: #{transformer_with_tr_forward.1} parent=5 // pred_fallthru
        _
      %p340 = scmp.lt.s32.totalorder %s21, 2
      // Predicated region
      $region29: #{transformer_with_tr_forward.1} parent=5 // pred_check
        %p341 = pneg %p340
      $region30: #{transformer_with_tr_forward.1} parent=5 // pred_check_branch
        %343 = sbr.rel (%p341) target = $region32
      $region31: #{transformer_with_tr_forward.1} parent=5 // pred_region
        // Predicated region
        $region33: #{transformer_with_tr_forward.1} parent=31 // pred_check
          %p344 = pneg %p41
        $region34: #{transformer_with_tr_forward.1} parent=31 // pred_check_branch
          %346 = sbr.rel (%p344) target = $region36
        $region35: #{transformer_with_tr_forward.1} parent=31 // pred_region
          %p347 = scmp.lt.s32.totalorder %s21, 1
          %s348 = scalar_select %p347, %s21, 1
          %s349 = smul.addr %s348, 8
          %s350 = scalar_lea.vmem %s0, %s349
        $region36: #{transformer_with_tr_forward.1} parent=31 // pred_fallthru
          _
        // Predicated region
        $region37: #{transformer_with_tr_forward.1} parent=31 // pred_check
          %p351 = pneg %p67
        $region38: #{transformer_with_tr_forward.1} parent=31 // pred_check_branch
          %353 = sbr.rel (%p351) target = $region40
        $region39: #{transformer_with_tr_forward.1} parent=31 // pred_region
          %p354 = scmp.lt.s32.totalorder %s21, 1
          %s355 = scalar_select %p354, %s21, 1
          %s356 = smul.addr %s355, 8
          %s357 = scalar_lea.vmem %s1, %s356
        $region40: #{transformer_with_tr_forward.1} parent=31 // pred_fallthru
          _
        // Predicated region
        $region41: #{transformer_with_tr_forward.1} parent=31 // pred_check
          %p358 = pneg %p93
        $region42: #{transformer_with_tr_forward.1} parent=31 // pred_check_branch
          %360 = sbr.rel (%p358) target = $region44
        $region43: #{transformer_with_tr_forward.1} parent=31 // pred_region
          %p361 = scmp.lt.s32.totalorder %s21, 1
          %s362 = scalar_select %p361, %s21, 1
          %s363 = smul.addr %s362, 8
          %s364 = scalar_lea.vmem %s2, %s363
        $region44: #{transformer_with_tr_forward.1} parent=31 // pred_fallthru
          _
        // Predicated region
        $region45: #{transformer_with_tr_forward.1} parent=31 // pred_check
          %p365 = pneg %p119
        $region46: #{transformer_with_tr_forward.1} parent=31 // pred_check_branch
          %367 = sbr.rel (%p365) target = $region48
        $region47: #{transformer_with_tr_forward.1} parent=31 // pred_region
          %p368 = scmp.lt.s32.totalorder %s21, 1
          %s369 = scalar_select %p368, %s21, 1
          %s370 = scalar_lea.vmem %s3, %s369
        $region48: #{transformer_with_tr_forward.1} parent=31 // pred_fallthru
          _
      $region32: #{transformer_with_tr_forward.1} parent=5 // pred_fallthru
        _
      %p371 = scmp.le.s32.totalorder 1, %s21
      %p372 = scmp.lt.s32.totalorder %s21, 3
      %p373 = pnand %p371, %p372
      %p374 = pneg %p373
      // Predicated region
      $region49: #{transformer_with_tr_forward.1} parent=5 // pred_check
        _
      $region50: #{transformer_with_tr_forward.1} parent=5 // pred_check_branch
        %376 = sbr.rel (%p373) target = $region52
      $region51: #{transformer_with_tr_forward.1} parent=5 // pred_region
        %s377 = ssub.s32 %s21, 1
        %p378 = scmp.lt.s32.totalorder %s26, 1
        %s379 = scalar_select %p378, %s26, 1
        %s380 = smul.addr %s379, 8
        %s381 = scalar_lea.vmem %s0, %s380
        %p382 = pneg %p47
        %p383 = pneg %p44
        %p384 = scmp.lt.s32.totalorder %s26, 1
        %s385 = scalar_select %p384, %s26, 1
        %s386 = smul.addr %s385, 8
        %s387 = scalar_lea.vmem %s1, %s386
        %p388 = pneg %p73
        %p389 = pneg %p70
        %p390 = scmp.lt.s32.totalorder %s26, 1
        %s391 = scalar_select %p390, %s26, 1
        %s392 = smul.addr %s391, 8
        %s393 = scalar_lea.vmem %s2, %s392
        %p394 = pneg %p99
        %p395 = pneg %p96
        %p396 = scmp.lt.s32.totalorder %s26, 1
        %s397 = scalar_select %p396, %s26, 1
        %s398 = scalar_lea.vmem %s3, %s397
        %p399 = pneg %p125
        %p400 = pneg %p122
        %p401 = pneg %p146
        %p402 = pneg %p143
        %p403 = pneg %p167
        %p404 = pneg %p164
        %p405 = pneg %p188
        %p406 = pneg %p185
        %p407 = pneg %p209
        %p408 = pneg %p206
        %p409 = pneg %p235
        %p410 = pneg %p232
        %s411 = sand.u32 %s222, 1
        %s412 = scalar_lea.sflag [#allocation3], %s411
        %s413 = sand.u32 %s222, 1
        %s414 = smul.addr %s413, 8
        %s415 = scalar_lea.vmem [#allocation2], %s414
        %p416 = pneg %p261
        %p417 = pneg %p258
        %p418 = scmp.lt.s32.totalorder %s26, 1
        %s419 = scalar_select %p418, %s26, 1
        %s420 = smul.addr %s419, 8
        %s421 = scalar_lea.vmem %s9, %s420
        %p422 = pneg %p287
        %p423 = pneg %p284
        %p424 = scmp.lt.s32.totalorder %s26, 1
        %s425 = scalar_select %p424, %s26, 1
        %s426 = scalar_lea.vmem %s10, %s425
        %p427 = pneg %p313
        %p428 = pneg %p310
        %p429 = scmp.lt.s32.totalorder %s26, 1
        %s430 = scalar_select %p429, %s26, 1
        %s431 = scalar_lea.vmem %s11, %s430
        %p432 = scmp.lt.s32.totalorder %s26, 1
        %s433 = scalar_select %p432, %s26, 1
        %s434 = smul.addr %s433, 8
        %s435 = scalar_lea.vmem %s0, %s434
        %p436 = scmp.lt.s32.totalorder %s26, 1
        %s437 = scalar_select %p436, %s26, 1
        %s438 = smul.addr %s437, 8
        %s439 = scalar_lea.vmem %s1, %s438
        %p440 = scmp.lt.s32.totalorder %s26, 1
        %s441 = scalar_select %p440, %s26, 1
        %s442 = smul.addr %s441, 8
        %s443 = scalar_lea.vmem %s2, %s442
        %p444 = scmp.lt.s32.totalorder %s26, 1
        %s445 = scalar_select %p444, %s26, 1
        %s446 = scalar_lea.vmem %s3, %s445
        %p447 = scmp.lt.s32.totalorder %s26, 1
        %s448 = scalar_select %p447, %s26, 1
        %s449 = smul.addr %s448, 8
        %s450 = scalar_lea.vmem %s9, %s449
        %p451 = scmp.lt.s32.totalorder %s26, 1
        %s452 = scalar_select %p451, %s26, 1
        %s453 = scalar_lea.vmem %s10, %s452
        %p454 = scmp.lt.s32.totalorder %s26, 1
        %s455 = scalar_select %p454, %s26, 1
        %s456 = scalar_lea.vmem %s11, %s455
        %v457 = vld [vmem:[%s7] sm:$0xff]
        %v458 = vld [vmem:[%s7 + $0x8] sm:$0xff]
        %v459 = vld [vmem:[%s7 + $0x10] sm:$0xff]
        %v460 = vld [vmem:[%s7 + $0x18] sm:$0xff]
        %v461 = vld [vmem:[%s7 + $0x20] sm:$0x3f]
        %v462 = vld [vmem:[%s446] sm:$0x1]
        %v463 = vlaneseq
        %v464 = vand.u32 %v463, 127
        %v465 = vld [vmem:[%s4] sm:$0xff]
        %v466 = vld [vmem:[%s4 + $0x8] sm:$0xff]
        %v467 = vld [vmem:[%s4 + $0x10] sm:$0xff]
        %v468 = vld [vmem:[%s4 + $0x18] sm:$0xff]
        %v469 = vld [vmem:[%s4 + $0x20] sm:$0xff]
        %v470 = vld [vmem:[%s4 + $0x28] sm:$0xff]
        %v471 = vld [vmem:[%s4 + $0x30] sm:$0xff]
        %v472 = vld [vmem:[%s4 + $0x38] sm:$0xff]
        %v473 = vld [vmem:[%s4 + $0x40] sm:$0xff]
        %v474 = vld [vmem:[%s4 + $0x48] sm:$0xff]
        %v475 = vld [vmem:[%s4 + $0x50] sm:$0xff]
        %v476 = vld [vmem:[%s4 + $0x58] sm:$0xff]
        %v477 = vld [vmem:[%s4 + $0x60] sm:$0xff]
        %v478 = vld [vmem:[%s4 + $0x68] sm:$0xff]
        %v479 = vld [vmem:[%s4 + $0x70] sm:$0xff]
        %v480 = vld [vmem:[%s4 + $0x78] sm:$0xff]
        %v481 = vld [vmem:[%s435] sm:$0xff]
        %482 = vset.pattern.permute.xlu0 0
        %483 = vperm.xlu0 %482, %v481
        %v484 = vpop.permute.xlu0 %483
        %vm485 = vcmp.eq.s32.totalorder %v464, %v484
        %v486 = vsel %vm485, 5.656854, 0.0
        %vm489 = vcmask 1041408
        %v490 = vrot.slane %v460, 6
        %v491 = vrot.slane %v461, 6
        %v492 = vsel %vm489, %v490, %v491
        %494 = vmatpush.msra.mxu0 %v480
        %495 = vmatpush.msra.mxu0 %v479
        %496 = vmatpush.msra.mxu0 %v478
        %497 = vmatpush.msra.mxu0 %v477
        %498 = vmatpush.msra.mxu0 %v476
        %499 = vmatpush.msra.mxu0 %v475
        %500 = vmatpush.msra.mxu0 %v474
        %501 = vmatpush.msra.mxu0 %v473
        %502 = vmatpush.msra.mxu0 %v472
        %503 = vmatpush.msra.mxu0 %v471
        %504 = vmatpush.msra.mxu0 %v470
        %505 = vmatpush.msra.mxu0 %v469
        %506 = vmatpush.msra.mxu0 %v468
        %507 = vmatpush.msra.mxu0 %v467
        %508 = vmatpush.msra.mxu0 %v466
        %509 = vmatpush.msra.mxu0 %v465
        %510 = vmatmul.f32.gmra.mxu0 %v486
        %v511 = vpop.f32.mrf.mxu0
        %v512 = vadd.f32 %v492, %v511
        %513 = vdwg.mxu0
        %vm514 = vcmask 261120
        %v515 = vsel %vm514, %v512, 0.0
        %516 = vadd.xlane.f32.xlu0 %v515
        %v517 = vpop.xlane.xlu0 %516
        %v518 = vrcp.pop 32.0
        %v519 = vmul.f32 32.0, %v518
        %v520 = vsub.f32 1.0, %v519
        %v521 = vmul.f32 %v518, %v520
        %v522 = vadd.f32 %v518, %v521
        %vm523 = vweird.f32 %v518
        %v524 = vsel %vm523, %v518, %v522
        %v525 = vmul.f32 %v517, %v524
        %v526 = vsub.f32 %v512, %v525
        %v527 = vmul.f32 %v526, %v526
        %v528 = vsel %vm514, %v527, 0.0
        %529 = vadd.xlane.f32.xlu0 %v528
        %v530 = vpop.xlane.xlu0 %529
        %v531 = vmul.f32 %v530, %v524
        %v532 = vadd.f32 %v531, 1e-05
        %v533 = vrsqrt.pop %v532
        %v534 = vmul.f32 %v533, %v532
        %v535 = vmul.f32 %v534, %v533
        %v536 = vmul.f32 0.5, %v535
        %v537 = vsub.f32 1.5, %v536
        %v538 = vmul.f32 %v533, %v537
        %vm539 = vweird.f32 %v532
        %vm540 = vweird.f32 %v533
        %vm541 = vmor %vm539, %vm540
        %v542 = vsel %vm541, %v533, %v538
        %v543 = vmul.f32 %v526, %v542
        %v544 = vperm.slane %v457, 0
        %v545 = vmul.f32 %v543, %v544
        %v546 = vperm.slane %v457, 4
        %v547 = vadd.f32 %v545, %v546
        %v548 = vsel %vm514, %v547, 0.0
        %549 = vadd.xlane.f32.xlu0 %v548
        %v550 = vpop.xlane.xlu0 %549
        %v551 = vmul.f32 %v550, %v524
        %v552 = vsub.f32 %v547, %v551
        %v553 = vmul.f32 %v552, %v552
        %v554 = vsel %vm514, %v553, 0.0
        %555 = vadd.xlane.f32.xlu0 %v554
        %v556 = vpop.xlane.xlu0 %555
        %v557 = vmul.f32 %v556, %v524
        %v558 = vadd.f32 %v557, 1e-05
        %v559 = vrsqrt.pop %v558
        %v560 = vmul.f32 %v559, %v558
        %v561 = vmul.f32 %v560, %v559
        %v562 = vmul.f32 0.5, %v561
        %v563 = vsub.f32 1.5, %v562
        %v564 = vmul.f32 %v559, %v563
        %vm565 = vweird.f32 %v558
        %vm566 = vweird.f32 %v559
        %vm567 = vmor %vm565, %vm566
        %v568 = vsel %vm567, %v559, %v564
        %v569 = vmul.f32 %v552, %v568
        %v570 = vperm.slane %v457, 1
        %v571 = vmul.f32 %v569, %v570
        %v572 = vperm.slane %v457, 5
        %v573 = vadd.f32 %v571, %v572
        %v574 = vld [vmem:[%s5] sm:$0xff]
        %v575 = vld [vmem:[%s5 + $0x8] sm:$0xff]
        %v576 = vld [vmem:[%s5 + $0x10] sm:$0xff]
        %v577 = vld [vmem:[%s5 + $0x18] sm:$0xff]
        %v578 = vperm.slane %v459, 2
        %v580 = vsel %vm514, %v573, 0
        %582 = vmatpush.msra.mxu0 0.0
        %583 = vmatpush.msra.mxu0 0.0
        %584 = vmatpush.msra.mxu0 0.0
        %585 = vmatpush.msra.mxu0 0.0
        %586 = vmatpush.msra.mxu0 0.0
        %587 = vmatpush.msra.mxu0 0.0
        %588 = vmatpush.msra.mxu0 0.0
        %589 = vmatpush.msra.mxu0 0.0
        %590 = vmatpush.msra.mxu0 0.0
        %591 = vmatpush.msra.mxu0 0.0
        %592 = vmatpush.msra.mxu0 0.0
        %593 = vmatpush.msra.mxu0 0.0
        %594 = vmatpush.msra.mxu0 %v577
        %595 = vmatpush.msra.mxu0 %v576
        %596 = vmatpush.msra.mxu0 %v575
        %597 = vmatpush.msra.mxu0 %v574
        %598 = vmatmul.f32.gmra.mxu0 %v580
        %v599 = vpop.f32.mrf.mxu0
        %v600 = vadd.f32 %v578, %v599
        %601 = vdwg.mxu0
        %s602 = scalar_lea.vmem %s5, 32
        %v603 = vld [vmem:[%s602] sm:$0xff]
        %v604 = vld [vmem:[%s602 + $0x8] sm:$0xff]
        %v605 = vld [vmem:[%s602 + $0x10] sm:$0xff]
        %v606 = vld [vmem:[%s602 + $0x18] sm:$0xff]
        %v608 = vperm.slane %v462, 0
        %611 = vrot.lane.b32.xlu0 %v600, 96
        %v612 = vpop.permute.xlu0 %611
        %vm613 = vcmask 64512
        %v614 = vsel %vm613, %v600, 0
        %v616 = vsel %vm613, %v612, 0
        %618 = vmatpush.xpose.msra.mxu0 0.0
        %619 = vmatpush.xpose.msra.mxu0 0.0
        %620 = vmatpush.xpose.msra.mxu0 0.0
        %621 = vmatpush.xpose.msra.mxu0 0.0
        %622 = vmatpush.xpose.msra.mxu0 0.0
        %623 = vmatpush.xpose.msra.mxu0 0.0
        %624 = vmatpush.xpose.msra.mxu0 0.0
        %625 = vmatpush.xpose.msra.mxu0 0.0
        %626 = vmatpush.xpose.msra.mxu0 0.0
        %627 = vmatpush.xpose.msra.mxu0 0.0
        %628 = vmatpush.xpose.msra.mxu0 0.0
        %629 = vmatpush.xpose.msra.mxu0 0.0
        %630 = vmatpush.xpose.msra.mxu0 0.0
        %631 = vmatpush.xpose.msra.mxu0 0.0
        %632 = vmatpush.xpose.msra.mxu0 0.0
        %633 = vmatpush.xpose.msra.mxu0 %v616
        %634 = vmatmul.f32.gmra.mxu0 %v614
        %v635 = vpop.f32.mrf.mxu0
        %v636 = vadd.f32 %v608, %v635
        %637 = vdwg.mxu0
        %v638 = vsel %vm613, %v636, -inf
        %639 = vmax.xlane.f32.xlu0 %v638
        %v640 = vpop.xlane.xlu0 %639
        %v641 = vsub.f32 %v636, %v640
        %v642 = vmul.f32 %v641, 1.442695
        %v643 = vpow.pop %v642
        %v644 = vsel %vm613, %v643, 0.0
        %645 = vadd.xlane.f32.xlu0 %v644
        %v646 = vpop.xlane.xlu0 %645
        %v647 = vrcp.pop %v646
        %v648 = vmul.f32 %v643, %v647
        %649 = vrot.lane.b32.xlu0 %v600, 64
        %v650 = vpop.permute.xlu0 %649
        %v653 = vsel %vm613, %v648, 0
        %655 = vmatpush.msra.mxu0 0.0
        %656 = vmatpush.msra.mxu0 0.0
        %657 = vmatpush.msra.mxu0 0.0
        %658 = vmatpush.msra.mxu0 0.0
        %659 = vmatpush.msra.mxu0 0.0
        %660 = vmatpush.msra.mxu0 0.0
        %661 = vmatpush.msra.mxu0 0.0
        %662 = vmatpush.msra.mxu0 0.0
        %663 = vmatpush.msra.mxu0 0.0
        %664 = vmatpush.msra.mxu0 0.0
        %665 = vmatpush.msra.mxu0 0.0
        %666 = vmatpush.msra.mxu0 0.0
        %667 = vmatpush.msra.mxu0 0.0
        %668 = vmatpush.msra.mxu0 0.0
        %669 = vmatpush.msra.mxu0 0.0
        %670 = vmatpush.msra.mxu0 %v650
        %671 = vmatmul.f32.gmra.mxu0 %v653
        %v672 = vpop.f32.mrf.mxu0
        %v673 = vadd.f32 0.0, %v672
        %674 = vdwg.mxu0
        %675 = vrot.lane.b32.xlu0 %v600, 120
        %v676 = vpop.permute.xlu0 %675
        %677 = vrot.lane.b32.xlu0 %v600, 88
        %v678 = vpop.permute.xlu0 %677
        %v679 = vsel %vm613, %v676, 0
        %v681 = vsel %vm613, %v678, 0
        %683 = vmatpush.xpose.msra.mxu0 0.0
        %684 = vmatpush.xpose.msra.mxu0 0.0
        %685 = vmatpush.xpose.msra.mxu0 0.0
        %686 = vmatpush.xpose.msra.mxu0 0.0
        %687 = vmatpush.xpose.msra.mxu0 0.0
        %688 = vmatpush.xpose.msra.mxu0 0.0
        %689 = vmatpush.xpose.msra.mxu0 0.0
        %690 = vmatpush.xpose.msra.mxu0 0.0
        %691 = vmatpush.xpose.msra.mxu0 0.0
        %692 = vmatpush.xpose.msra.mxu0 0.0
        %693 = vmatpush.xpose.msra.mxu0 0.0
        %694 = vmatpush.xpose.msra.mxu0 0.0
        %695 = vmatpush.xpose.msra.mxu0 0.0
        %696 = vmatpush.xpose.msra.mxu0 0.0
        %697 = vmatpush.xpose.msra.mxu0 0.0
        %698 = vmatpush.xpose.msra.mxu0 %v681
        %699 = vmatmul.f32.gmra.mxu0 %v679
        %v700 = vpop.f32.mrf.mxu0
        %v701 = vadd.f32 %v608, %v700
        %702 = vdwg.mxu0
        %v703 = vsel %vm613, %v701, -inf
        %704 = vmax.xlane.f32.xlu0 %v703
        %v705 = vpop.xlane.xlu0 %704
        %v706 = vsub.f32 %v701, %v705
        %v707 = vmul.f32 %v706, 1.442695
        %v708 = vpow.pop %v707
        %v709 = vsel %vm613, %v708, 0.0
        %710 = vadd.xlane.f32.xlu0 %v709
        %v711 = vpop.xlane.xlu0 %710
        %v712 = vrcp.pop %v711
        %v713 = vmul.f32 %v708, %v712
        %714 = vrot.lane.b32.xlu0 %v600, 56
        %v715 = vpop.permute.xlu0 %714
        %v718 = vsel %vm613, %v713, 0
        %720 = vmatpush.msra.mxu0 0.0
        %721 = vmatpush.msra.mxu0 0.0
        %722 = vmatpush.msra.mxu0 0.0
        %723 = vmatpush.msra.mxu0 0.0
        %724 = vmatpush.msra.mxu0 0.0
        %725 = vmatpush.msra.mxu0 0.0
        %726 = vmatpush.msra.mxu0 0.0
        %727 = vmatpush.msra.mxu0 0.0
        %728 = vmatpush.msra.mxu0 0.0
        %729 = vmatpush.msra.mxu0 0.0
        %730 = vmatpush.msra.mxu0 0.0
        %731 = vmatpush.msra.mxu0 0.0
        %732 = vmatpush.msra.mxu0 0.0
        %733 = vmatpush.msra.mxu0 0.0
        %734 = vmatpush.msra.mxu0 0.0
        %735 = vmatpush.msra.mxu0 %v715
        %736 = vmatmul.f32.gmra.mxu0 %v718
        %v737 = vpop.f32.mrf.mxu0
        %v738 = vadd.f32 0.0, %v737
        %739 = vdwg.mxu0
        %740 = vrot.lane.b32.xlu0 %v600, 112
        %v741 = vpop.permute.xlu0 %740
        %742 = vrot.lane.b32.xlu0 %v600, 80
        %v743 = vpop.permute.xlu0 %742
        %v744 = vsel %vm613, %v741, 0
        %v746 = vsel %vm613, %v743, 0
        %748 = vmatpush.xpose.msra.mxu0 0.0
        %749 = vmatpush.xpose.msra.mxu0 0.0
        %750 = vmatpush.xpose.msra.mxu0 0.0
        %751 = vmatpush.xpose.msra.mxu0 0.0
        %752 = vmatpush.xpose.msra.mxu0 0.0
        %753 = vmatpush.xpose.msra.mxu0 0.0
        %754 = vmatpush.xpose.msra.mxu0 0.0
        %755 = vmatpush.xpose.msra.mxu0 0.0
        %756 = vmatpush.xpose.msra.mxu0 0.0
        %757 = vmatpush.xpose.msra.mxu0 0.0
        %758 = vmatpush.xpose.msra.mxu0 0.0
        %759 = vmatpush.xpose.msra.mxu0 0.0
        %760 = vmatpush.xpose.msra.mxu0 0.0
        %761 = vmatpush.xpose.msra.mxu0 0.0
        %762 = vmatpush.xpose.msra.mxu0 0.0
        %763 = vmatpush.xpose.msra.mxu0 %v746
        %764 = vmatmul.f32.gmra.mxu0 %v744
        %v765 = vpop.f32.mrf.mxu0
        %v766 = vadd.f32 %v608, %v765
        %767 = vdwg.mxu0
        %v768 = vsel %vm613, %v766, -inf
        %769 = vmax.xlane.f32.xlu0 %v768
        %v770 = vpop.xlane.xlu0 %769
        %v771 = vsub.f32 %v766, %v770
        %v772 = vmul.f32 %v771, 1.442695
        %v773 = vpow.pop %v772
        %v774 = vsel %vm613, %v773, 0.0
        %775 = vadd.xlane.f32.xlu0 %v774
        %v776 = vpop.xlane.xlu0 %775
        %v777 = vrcp.pop %v776
        %v778 = vmul.f32 %v773, %v777
        %779 = vrot.lane.b32.xlu0 %v600, 48
        %v780 = vpop.permute.xlu0 %779
        %v783 = vsel %vm613, %v778, 0
        %785 = vmatpush.msra.mxu0 0.0
        %786 = vmatpush.msra.mxu0 0.0
        %787 = vmatpush.msra.mxu0 0.0
        %788 = vmatpush.msra.mxu0 0.0
        %789 = vmatpush.msra.mxu0 0.0
        %790 = vmatpush.msra.mxu0 0.0
        %791 = vmatpush.msra.mxu0 0.0
        %792 = vmatpush.msra.mxu0 0.0
        %793 = vmatpush.msra.mxu0 0.0
        %794 = vmatpush.msra.mxu0 0.0
        %795 = vmatpush.msra.mxu0 0.0
        %796 = vmatpush.msra.mxu0 0.0
        %797 = vmatpush.msra.mxu0 0.0
        %798 = vmatpush.msra.mxu0 0.0
        %799 = vmatpush.msra.mxu0 0.0
        %800 = vmatpush.msra.mxu0 %v780
        %801 = vmatmul.f32.gmra.mxu0 %v783
        %v802 = vpop.f32.mrf.mxu0
        %v803 = vadd.f32 0.0, %v802
        %804 = vdwg.mxu0
        %805 = vrot.lane.b32.xlu0 %v600, 104
        %v806 = vpop.permute.xlu0 %805
        %807 = vrot.lane.b32.xlu0 %v600, 72
        %v808 = vpop.permute.xlu0 %807
        %v809 = vsel %vm613, %v806, 0
        %v811 = vsel %vm613, %v808, 0
        %813 = vmatpush.xpose.msra.mxu0 0.0
        %814 = vmatpush.xpose.msra.mxu0 0.0
        %815 = vmatpush.xpose.msra.mxu0 0.0
        %816 = vmatpush.xpose.msra.mxu0 0.0
        %817 = vmatpush.xpose.msra.mxu0 0.0
        %818 = vmatpush.xpose.msra.mxu0 0.0
        %819 = vmatpush.xpose.msra.mxu0 0.0
        %820 = vmatpush.xpose.msra.mxu0 0.0
        %821 = vmatpush.xpose.msra.mxu0 0.0
        %822 = vmatpush.xpose.msra.mxu0 0.0
        %823 = vmatpush.xpose.msra.mxu0 0.0
        %824 = vmatpush.xpose.msra.mxu0 0.0
        %825 = vmatpush.xpose.msra.mxu0 0.0
        %826 = vmatpush.xpose.msra.mxu0 0.0
        %827 = vmatpush.xpose.msra.mxu0 0.0
        %828 = vmatpush.xpose.msra.mxu0 %v811
        %829 = vmatmul.f32.gmra.mxu0 %v809
        %v830 = vpop.f32.mrf.mxu0
        %v831 = vadd.f32 %v608, %v830
        %832 = vdwg.mxu0
        %v833 = vsel %vm613, %v831, -inf
        %834 = vmax.xlane.f32.xlu0 %v833
        %v835 = vpop.xlane.xlu0 %834
        %v836 = vsub.f32 %v831, %v835
        %v837 = vmul.f32 %v836, 1.442695
        %v838 = vpow.pop %v837
        %v839 = vsel %vm613, %v838, 0.0
        %840 = vadd.xlane.f32.xlu0 %v839
        %v841 = vpop.xlane.xlu0 %840
        %v842 = vrcp.pop %v841
        %v843 = vmul.f32 %v838, %v842
        %844 = vrot.lane.b32.xlu0 %v600, 40
        %v845 = vpop.permute.xlu0 %844
        %v848 = vsel %vm613, %v843, 0
        %850 = vmatpush.msra.mxu0 0.0
        %851 = vmatpush.msra.mxu0 0.0
        %852 = vmatpush.msra.mxu0 0.0
        %853 = vmatpush.msra.mxu0 0.0
        %854 = vmatpush.msra.mxu0 0.0
        %855 = vmatpush.msra.mxu0 0.0
        %856 = vmatpush.msra.mxu0 0.0
        %857 = vmatpush.msra.mxu0 0.0
        %858 = vmatpush.msra.mxu0 0.0
        %859 = vmatpush.msra.mxu0 0.0
        %860 = vmatpush.msra.mxu0 0.0
        %861 = vmatpush.msra.mxu0 0.0
        %862 = vmatpush.msra.mxu0 0.0
        %863 = vmatpush.msra.mxu0 0.0
        %864 = vmatpush.msra.mxu0 0.0
        %865 = vmatpush.msra.mxu0 %v845
        %866 = vmatmul.f32.gmra.mxu0 %v848
        %v867 = vpop.f32.mrf.mxu0
        %v868 = vadd.f32 0.0, %v867
        %869 = vdwg.mxu0
        %871 = vrot.lane.b32.xlu0 %v738, 8
        %v872 = vpop.permute.xlu0 %871
        %875 = vrot.lane.b32.xlu0 %v803, 16
        %v876 = vpop.permute.xlu0 %875
        %879 = vrot.lane.b32.xlu0 %v868, 24
        %v880 = vpop.permute.xlu0 %879
        %v882 = vsel %vm613, %v673, %v872
        %vm883 = vcmask 130048
        %v884 = vsel %vm883, %v882, %v876
        %vm885 = vcmask 195584
        %v886 = vsel %vm885, %v884, %v880
        %v888 = vsel %vm514, %v886, 0
        %890 = vmatpush.msra.mxu0 0.0
        %891 = vmatpush.msra.mxu0 0.0
        %892 = vmatpush.msra.mxu0 0.0
        %893 = vmatpush.msra.mxu0 0.0
        %894 = vmatpush.msra.mxu0 0.0
        %895 = vmatpush.msra.mxu0 0.0
        %896 = vmatpush.msra.mxu0 0.0
        %897 = vmatpush.msra.mxu0 0.0
        %898 = vmatpush.msra.mxu0 0.0
        %899 = vmatpush.msra.mxu0 0.0
        %900 = vmatpush.msra.mxu0 0.0
        %901 = vmatpush.msra.mxu0 0.0
        %902 = vmatpush.msra.mxu0 %v606
        %903 = vmatpush.msra.mxu0 %v605
        %904 = vmatpush.msra.mxu0 %v604
        %905 = vmatpush.msra.mxu0 %v603
        %906 = vmatmul.f32.gmra.mxu0 %v888
        %v907 = vpop.f32.mrf.mxu0
        %v908 = vadd.f32 0.0, %v907
        %909 = vdwg.mxu0
        %v910 = vadd.f32 %v547, %v908
        %v911 = vperm.slane %v459, 3
        %v912 = vadd.f32 %v910, %v911
        %v913 = vsel %vm514, %v912, 0.0
        %914 = vadd.xlane.f32.xlu0 %v913
        %v915 = vpop.xlane.xlu0 %914
        %v916 = vmul.f32 %v915, %v524
        %v917 = vsub.f32 %v912, %v916
        %v918 = vmul.f32 %v917, %v917
        %v919 = vsel %vm514, %v918, 0.0
        %920 = vadd.xlane.f32.xlu0 %v919
        %v921 = vpop.xlane.xlu0 %920
        %v922 = vmul.f32 %v921, %v524
        %v923 = vadd.f32 %v922, 1e-05
        %v924 = vrsqrt.pop %v923
        %v925 = vmul.f32 %v924, %v923
        %v926 = vmul.f32 %v925, %v924
        %v927 = vmul.f32 0.5, %v926
        %v928 = vsub.f32 1.5, %v927
        %v929 = vmul.f32 %v924, %v928
        %vm930 = vweird.f32 %v923
        %vm931 = vweird.f32 %v924
        %vm932 = vmor %vm930, %vm931
        %v933 = vsel %vm932, %v924, %v929
        %v934 = vmul.f32 %v917, %v933
        %v935 = vperm.slane %v457, 2
        %v936 = vmul.f32 %v934, %v935
        %v937 = vperm.slane %v457, 6
        %v938 = vadd.f32 %v936, %v937
        %s939 = scalar_lea.vmem %s5, 64
        %v940 = vld [vmem:[%s939] sm:$0xff]
        %v941 = vld [vmem:[%s939 + $0x8] sm:$0xff]
        %v942 = vld [vmem:[%s939 + $0x10] sm:$0xff]
        %v943 = vld [vmem:[%s939 + $0x18] sm:$0xff]
        %v944 = vperm.slane %v459, 4
        %v946 = vsel %vm514, %v938, 0
        %948 = vmatpush.msra.mxu0 0.0
        %949 = vmatpush.msra.mxu0 0.0
        %950 = vmatpush.msra.mxu0 0.0
        %951 = vmatpush.msra.mxu0 0.0
        %952 = vmatpush.msra.mxu0 0.0
        %953 = vmatpush.msra.mxu0 0.0
        %954 = vmatpush.msra.mxu0 0.0
        %955 = vmatpush.msra.mxu0 0.0
        %956 = vmatpush.msra.mxu0 0.0
        %957 = vmatpush.msra.mxu0 0.0
        %958 = vmatpush.msra.mxu0 0.0
        %959 = vmatpush.msra.mxu0 0.0
        %960 = vmatpush.msra.mxu0 %v943
        %961 = vmatpush.msra.mxu0 %v942
        %962 = vmatpush.msra.mxu0 %v941
        %963 = vmatpush.msra.mxu0 %v940
        %964 = vmatmul.f32.gmra.mxu0 %v946
        %v965 = vpop.f32.mrf.mxu0
        %v966 = vadd.f32 %v944, %v965
        %967 = vdwg.mxu0
        %v968 = vmul.f32 %v966, %v966
        %v969 = vmul.f32 %v966, %v968
        %v970 = vmul.f32 %v969, 0.044715
        %v971 = vadd.f32 %v966, %v970
        %v972 = vmul.f32 %v971, 0.7978846
        %v973 = vtanh.pop %v972
        %v974 = vadd.f32 %v973, 1.0
        %v975 = vmul.f32 %v974, 0.5
        %v976 = vmul.f32 %v966, %v975
        %v977 = vld [vmem:[%s6] sm:$0xff]
        %v978 = vld [vmem:[%s6 + $0x8] sm:$0xff]
        %v979 = vld [vmem:[%s6 + $0x10] sm:$0xff]
        %v980 = vld [vmem:[%s6 + $0x18] sm:$0xff]
        %v981 = vld [vmem:[%s6 + $0x20] sm:$0xff]
        %v982 = vld [vmem:[%s6 + $0x28] sm:$0xff]
        %v983 = vld [vmem:[%s6 + $0x30] sm:$0xff]
        %v984 = vld [vmem:[%s6 + $0x38] sm:$0xff]
        %vm985 = vcmask 523264
        %v987 = vsel %vm985, %v976, 0
        %989 = vmatpush.msra.mxu0 0.0
        %990 = vmatpush.msra.mxu0 0.0
        %991 = vmatpush.msra.mxu0 0.0
        %992 = vmatpush.msra.mxu0 0.0
        %993 = vmatpush.msra.mxu0 0.0
        %994 = vmatpush.msra.mxu0 0.0
        %995 = vmatpush.msra.mxu0 0.0
        %996 = vmatpush.msra.mxu0 0.0
        %997 = vmatpush.msra.mxu0 %v984
        %998 = vmatpush.msra.mxu0 %v983
        %999 = vmatpush.msra.mxu0 %v982
        %1000 = vmatpush.msra.mxu0 %v981
        %1001 = vmatpush.msra.mxu0 %v980
        %1002 = vmatpush.msra.mxu0 %v979
        %1003 = vmatpush.msra.mxu0 %v978
        %1004 = vmatpush.msra.mxu0 %v977
        %1005 = vmatmul.f32.gmra.mxu0 %v987
        %v1006 = vpop.f32.mrf.mxu0
        %v1007 = vadd.f32 0.0, %v1006
        %1008 = vdwg.mxu0
        %v1009 = vadd.f32 %v912, %v1007
        %v1010 = vperm.slane %v459, 5
        %v1011 = vadd.f32 %v1009, %v1010
        %v1012 = vsel %vm514, %v1011, 0.0
        %1013 = vadd.xlane.f32.xlu0 %v1012
        %v1014 = vpop.xlane.xlu0 %1013
        %v1015 = vmul.f32 %v1014, %v524
        %v1016 = vsub.f32 %v1011, %v1015
        %v1017 = vmul.f32 %v1016, %v1016
        %v1018 = vsel %vm514, %v1017, 0.0
        %1019 = vadd.xlane.f32.xlu0 %v1018
        %v1020 = vpop.xlane.xlu0 %1019
        %v1021 = vmul.f32 %v1020, %v524
        %v1022 = vadd.f32 %v1021, 1e-05
        %v1023 = vrsqrt.pop %v1022
        %v1024 = vmul.f32 %v1023, %v1022
        %v1025 = vmul.f32 %v1024, %v1023
        %v1026 = vmul.f32 0.5, %v1025
        %v1027 = vsub.f32 1.5, %v1026
        %v1028 = vmul.f32 %v1023, %v1027
        %vm1029 = vweird.f32 %v1022
        %vm1030 = vweird.f32 %v1023
        %vm1031 = vmor %vm1029, %vm1030
        %v1032 = vsel %vm1031, %v1023, %v1028
        %v1033 = vmul.f32 %v1016, %v1032
        %v1034 = vperm.slane %v457, 3
        %v1035 = vmul.f32 %v1033, %v1034
        %v1036 = vperm.slane %v457, 7
        %v1037 = vadd.f32 %v1035, %v1036
        %v1038 = vlaneseq
        %v1039 = vshrl.u32 %v1038, 7
        %vm1040 = vcmp.le.s32.totalorder %v464, %v1039
        %v1041 = vsel %vm1040, 0.0, -1e+09
        %v1042 = vld [vmem:[%s439] sm:$0xff]
        %1043 = vset.pattern.permute.xlu0 0
        %1044 = vperm.xlu0 %1043, %v1042
        %v1045 = vpop.permute.xlu0 %1044
        %vm1046 = vcmp.eq.s32.totalorder %v464, %v1045
        %v1047 = vsel %vm1046, 5.656854, 0.0
        %1048 = vmatpush.msra.mxu0 %v480
        %1049 = vmatpush.msra.mxu0 %v479
        %1050 = vmatpush.msra.mxu0 %v478
        %1051 = vmatpush.msra.mxu0 %v477
        %1052 = vmatpush.msra.mxu0 %v476
        %1053 = vmatpush.msra.mxu0 %v475
        %1054 = vmatpush.msra.mxu0 %v474
        %1055 = vmatpush.msra.mxu0 %v473
        %1056 = vmatpush.msra.mxu0 %v472
        %1057 = vmatpush.msra.mxu0 %v471
        %1058 = vmatpush.msra.mxu0 %v470
        %1059 = vmatpush.msra.mxu0 %v469
        %1060 = vmatpush.msra.mxu0 %v468
        %1061 = vmatpush.msra.mxu0 %v467
        %1062 = vmatpush.msra.mxu0 %v466
        %1063 = vmatpush.msra.mxu0 %v465
        %1064 = vmatmul.f32.gmra.mxu0 %v1047
        %v1065 = vpop.f32.mrf.mxu0
        %v1066 = vadd.f32 %v492, %v1065
        %1067 = vdwg.mxu0
        %v1068 = vsel %vm514, %v1066, 0.0
        %1069 = vadd.xlane.f32.xlu0 %v1068
        %v1070 = vpop.xlane.xlu0 %1069
        %v1071 = vmul.f32 %v1070, %v524
        %v1072 = vsub.f32 %v1066, %v1071
        %v1073 = vmul.f32 %v1072, %v1072
        %v1074 = vsel %vm514, %v1073, 0.0
        %1075 = vadd.xlane.f32.xlu0 %v1074
        %v1076 = vpop.xlane.xlu0 %1075
        %v1077 = vmul.f32 %v1076, %v524
        %v1078 = vadd.f32 %v1077, 1e-05
        %v1079 = vrsqrt.pop %v1078
        %v1080 = vmul.f32 %v1079, %v1078
        %v1081 = vmul.f32 %v1080, %v1079
        %v1082 = vmul.f32 0.5, %v1081
        %v1083 = vsub.f32 1.5, %v1082
        %v1084 = vmul.f32 %v1079, %v1083
        %vm1085 = vweird.f32 %v1078
        %vm1086 = vweird.f32 %v1079
        %vm1087 = vmor %vm1085, %vm1086
        %v1088 = vsel %vm1087, %v1079, %v1084
        %v1089 = vmul.f32 %v1072, %v1088
        %v1090 = vperm.slane %v458, 0
        %v1091 = vmul.f32 %v1089, %v1090
        %v1092 = vperm.slane %v458, 5
        %v1093 = vadd.f32 %v1091, %v1092
        %v1094 = vsel %vm514, %v1093, 0.0
        %1095 = vadd.xlane.f32.xlu0 %v1094
        %v1096 = vpop.xlane.xlu0 %1095
        %v1097 = vmul.f32 %v1096, %v524
        %v1098 = vsub.f32 %v1093, %v1097
        %v1099 = vmul.f32 %v1098, %v1098
        %v1100 = vsel %vm514, %v1099, 0.0
        %1101 = vadd.xlane.f32.xlu0 %v1100
        %v1102 = vpop.xlane.xlu0 %1101
        %v1103 = vmul.f32 %v1102, %v524
        %v1104 = vadd.f32 %v1103, 1e-05
        %v1105 = vrsqrt.pop %v1104
        %v1106 = vmul.f32 %v1105, %v1104
        %v1107 = vmul.f32 %v1106, %v1105
        %v1108 = vmul.f32 0.5, %v1107
        %v1109 = vsub.f32 1.5, %v1108
        %v1110 = vmul.f32 %v1105, %v1109
        %vm1111 = vweird.f32 %v1104
        %vm1112 = vweird.f32 %v1105
        %vm1113 = vmor %vm1111, %vm1112
        %v1114 = vsel %vm1113, %v1105, %v1110
        %v1115 = vmul.f32 %v1098, %v1114
        %v1116 = vperm.slane %v458, 1
        %v1117 = vmul.f32 %v1115, %v1116
        %v1118 = vperm.slane %v458, 6
        %v1119 = vadd.f32 %v1117, %v1118
        %s1120 = scalar_lea.vmem %s5, 96
        %v1121 = vld [vmem:[%s1120] sm:$0xff]
        %v1122 = vld [vmem:[%s1120 + $0x8] sm:$0xff]
        %v1123 = vld [vmem:[%s1120 + $0x10] sm:$0xff]
        %v1124 = vld [vmem:[%s1120 + $0x18] sm:$0xff]
        %v1125 = vperm.slane %v459, 6
        %v1127 = vsel %vm514, %v1119, 0
        %1129 = vmatpush.msra.mxu0 0.0
        %1130 = vmatpush.msra.mxu0 0.0
        %1131 = vmatpush.msra.mxu0 0.0
        %1132 = vmatpush.msra.mxu0 0.0
        %1133 = vmatpush.msra.mxu0 0.0
        %1134 = vmatpush.msra.mxu0 0.0
        %1135 = vmatpush.msra.mxu0 0.0
        %1136 = vmatpush.msra.mxu0 0.0
        %1137 = vmatpush.msra.mxu0 0.0
        %1138 = vmatpush.msra.mxu0 0.0
        %1139 = vmatpush.msra.mxu0 0.0
        %1140 = vmatpush.msra.mxu0 0.0
        %1141 = vmatpush.msra.mxu0 %v1124
        %1142 = vmatpush.msra.mxu0 %v1123
        %1143 = vmatpush.msra.mxu0 %v1122
        %1144 = vmatpush.msra.mxu0 %v1121
        %1145 = vmatmul.f32.gmra.mxu0 %v1127
        %v1146 = vpop.f32.mrf.mxu0
        %v1147 = vadd.f32 %v1125, %v1146
        %1148 = vdwg.mxu0
        %s1149 = scalar_lea.vmem %s5, 128
        %v1150 = vld [vmem:[%s1149] sm:$0xff]
        %v1151 = vld [vmem:[%s1149 + $0x8] sm:$0xff]
        %v1152 = vld [vmem:[%s1149 + $0x10] sm:$0xff]
        %v1153 = vld [vmem:[%s1149 + $0x18] sm:$0xff]
        %1155 = vrot.lane.b32.xlu0 %v1147, 96
        %v1156 = vpop.permute.xlu0 %1155
        %v1157 = vsel %vm613, %v1147, 0
        %v1159 = vsel %vm613, %v1156, 0
        %1161 = vmatpush.xpose.msra.mxu0 0.0
        %1162 = vmatpush.xpose.msra.mxu0 0.0
        %1163 = vmatpush.xpose.msra.mxu0 0.0
        %1164 = vmatpush.xpose.msra.mxu0 0.0
        %1165 = vmatpush.xpose.msra.mxu0 0.0
        %1166 = vmatpush.xpose.msra.mxu0 0.0
        %1167 = vmatpush.xpose.msra.mxu0 0.0
        %1168 = vmatpush.xpose.msra.mxu0 0.0
        %1169 = vmatpush.xpose.msra.mxu0 0.0
        %1170 = vmatpush.xpose.msra.mxu0 0.0
        %1171 = vmatpush.xpose.msra.mxu0 0.0
        %1172 = vmatpush.xpose.msra.mxu0 0.0
        %1173 = vmatpush.xpose.msra.mxu0 0.0
        %1174 = vmatpush.xpose.msra.mxu0 0.0
        %1175 = vmatpush.xpose.msra.mxu0 0.0
        %1176 = vmatpush.xpose.msra.mxu0 %v1159
        %1177 = vmatmul.f32.gmra.mxu0 %v1157
        %v1178 = vpop.f32.mrf.mxu0
        %v1179 = vadd.f32 %v1041, %v1178
        %1180 = vdwg.mxu0
        %v1181 = vsel %vm613, %v1179, -inf
        %1182 = vmax.xlane.f32.xlu0 %v1181
        %v1183 = vpop.xlane.xlu0 %1182
        %v1184 = vsub.f32 %v1179, %v1183
        %v1185 = vmul.f32 %v1184, 1.442695
        %v1186 = vpow.pop %v1185
        %v1187 = vsel %vm613, %v1186, 0.0
        %1188 = vadd.xlane.f32.xlu0 %v1187
        %v1189 = vpop.xlane.xlu0 %1188
        %v1190 = vrcp.pop %v1189
        %v1191 = vmul.f32 %v1186, %v1190
        %1192 = vrot.lane.b32.xlu0 %v1147, 64
        %v1193 = vpop.permute.xlu0 %1192
        %v1196 = vsel %vm613, %v1191, 0
        %1198 = vmatpush.msra.mxu0 0.0
        %1199 = vmatpush.msra.mxu0 0.0
        %1200 = vmatpush.msra.mxu0 0.0
        %1201 = vmatpush.msra.mxu0 0.0
        %1202 = vmatpush.msra.mxu0 0.0
        %1203 = vmatpush.msra.mxu0 0.0
        %1204 = vmatpush.msra.mxu0 0.0
        %1205 = vmatpush.msra.mxu0 0.0
        %1206 = vmatpush.msra.mxu0 0.0
        %1207 = vmatpush.msra.mxu0 0.0
        %1208 = vmatpush.msra.mxu0 0.0
        %1209 = vmatpush.msra.mxu0 0.0
        %1210 = vmatpush.msra.mxu0 0.0
        %1211 = vmatpush.msra.mxu0 0.0
        %1212 = vmatpush.msra.mxu0 0.0
        %1213 = vmatpush.msra.mxu0 %v1193
        %1214 = vmatmul.f32.gmra.mxu0 %v1196
        %v1215 = vpop.f32.mrf.mxu0
        %v1216 = vadd.f32 0.0, %v1215
        %1217 = vdwg.mxu0
        %1218 = vrot.lane.b32.xlu0 %v1147, 120
        %v1219 = vpop.permute.xlu0 %1218
        %1220 = vrot.lane.b32.xlu0 %v1147, 88
        %v1221 = vpop.permute.xlu0 %1220
        %v1222 = vsel %vm613, %v1219, 0
        %v1224 = vsel %vm613, %v1221, 0
        %1226 = vmatpush.xpose.msra.mxu0 0.0
        %1227 = vmatpush.xpose.msra.mxu0 0.0
        %1228 = vmatpush.xpose.msra.mxu0 0.0
        %1229 = vmatpush.xpose.msra.mxu0 0.0
        %1230 = vmatpush.xpose.msra.mxu0 0.0
        %1231 = vmatpush.xpose.msra.mxu0 0.0
        %1232 = vmatpush.xpose.msra.mxu0 0.0
        %1233 = vmatpush.xpose.msra.mxu0 0.0
        %1234 = vmatpush.xpose.msra.mxu0 0.0
        %1235 = vmatpush.xpose.msra.mxu0 0.0
        %1236 = vmatpush.xpose.msra.mxu0 0.0
        %1237 = vmatpush.xpose.msra.mxu0 0.0
        %1238 = vmatpush.xpose.msra.mxu0 0.0
        %1239 = vmatpush.xpose.msra.mxu0 0.0
        %1240 = vmatpush.xpose.msra.mxu0 0.0
        %1241 = vmatpush.xpose.msra.mxu0 %v1224
        %1242 = vmatmul.f32.gmra.mxu0 %v1222
        %v1243 = vpop.f32.mrf.mxu0
        %v1244 = vadd.f32 %v1041, %v1243
        %1245 = vdwg.mxu0
        %v1246 = vsel %vm613, %v1244, -inf
        %1247 = vmax.xlane.f32.xlu0 %v1246
        %v1248 = vpop.xlane.xlu0 %1247
        %v1249 = vsub.f32 %v1244, %v1248
        %v1250 = vmul.f32 %v1249, 1.442695
        %v1251 = vpow.pop %v1250
        %v1252 = vsel %vm613, %v1251, 0.0
        %1253 = vadd.xlane.f32.xlu0 %v1252
        %v1254 = vpop.xlane.xlu0 %1253
        %v1255 = vrcp.pop %v1254
        %v1256 = vmul.f32 %v1251, %v1255
        %1257 = vrot.lane.b32.xlu0 %v1147, 56
        %v1258 = vpop.permute.xlu0 %1257
        %v1261 = vsel %vm613, %v1256, 0
        %1263 = vmatpush.msra.mxu0 0.0
        %1264 = vmatpush.msra.mxu0 0.0
        %1265 = vmatpush.msra.mxu0 0.0
        %1266 = vmatpush.msra.mxu0 0.0
        %1267 = vmatpush.msra.mxu0 0.0
        %1268 = vmatpush.msra.mxu0 0.0
        %1269 = vmatpush.msra.mxu0 0.0
        %1270 = vmatpush.msra.mxu0 0.0
        %1271 = vmatpush.msra.mxu0 0.0
        %1272 = vmatpush.msra.mxu0 0.0
        %1273 = vmatpush.msra.mxu0 0.0
        %1274 = vmatpush.msra.mxu0 0.0
        %1275 = vmatpush.msra.mxu0 0.0
        %1276 = vmatpush.msra.mxu0 0.0
        %1277 = vmatpush.msra.mxu0 0.0
        %1278 = vmatpush.msra.mxu0 %v1258
        %1279 = vmatmul.f32.gmra.mxu0 %v1261
        %v1280 = vpop.f32.mrf.mxu0
        %v1281 = vadd.f32 0.0, %v1280
        %1282 = vdwg.mxu0
        %1283 = vrot.lane.b32.xlu0 %v1147, 112
        %v1284 = vpop.permute.xlu0 %1283
        %1285 = vrot.lane.b32.xlu0 %v1147, 80
        %v1286 = vpop.permute.xlu0 %1285
        %v1287 = vsel %vm613, %v1284, 0
        %v1289 = vsel %vm613, %v1286, 0
        %1291 = vmatpush.xpose.msra.mxu0 0.0
        %1292 = vmatpush.xpose.msra.mxu0 0.0
        %1293 = vmatpush.xpose.msra.mxu0 0.0
        %1294 = vmatpush.xpose.msra.mxu0 0.0
        %1295 = vmatpush.xpose.msra.mxu0 0.0
        %1296 = vmatpush.xpose.msra.mxu0 0.0
        %1297 = vmatpush.xpose.msra.mxu0 0.0
        %1298 = vmatpush.xpose.msra.mxu0 0.0
        %1299 = vmatpush.xpose.msra.mxu0 0.0
        %1300 = vmatpush.xpose.msra.mxu0 0.0
        %1301 = vmatpush.xpose.msra.mxu0 0.0
        %1302 = vmatpush.xpose.msra.mxu0 0.0
        %1303 = vmatpush.xpose.msra.mxu0 0.0
        %1304 = vmatpush.xpose.msra.mxu0 0.0
        %1305 = vmatpush.xpose.msra.mxu0 0.0
        %1306 = vmatpush.xpose.msra.mxu0 %v1289
        %1307 = vmatmul.f32.gmra.mxu0 %v1287
        %v1308 = vpop.f32.mrf.mxu0
        %v1309 = vadd.f32 %v1041, %v1308
        %1310 = vdwg.mxu0
        %v1311 = vsel %vm613, %v1309, -inf
        %1312 = vmax.xlane.f32.xlu0 %v1311
        %v1313 = vpop.xlane.xlu0 %1312
        %v1314 = vsub.f32 %v1309, %v1313
        %v1315 = vmul.f32 %v1314, 1.442695
        %v1316 = vpow.pop %v1315
        %v1317 = vsel %vm613, %v1316, 0.0
        %1318 = vadd.xlane.f32.xlu0 %v1317
        %v1319 = vpop.xlane.xlu0 %1318
        %v1320 = vrcp.pop %v1319
        %v1321 = vmul.f32 %v1316, %v1320
        %1322 = vrot.lane.b32.xlu0 %v1147, 48
        %v1323 = vpop.permute.xlu0 %1322
        %v1326 = vsel %vm613, %v1321, 0
        %1328 = vmatpush.msra.mxu0 0.0
        %1329 = vmatpush.msra.mxu0 0.0
        %1330 = vmatpush.msra.mxu0 0.0
        %1331 = vmatpush.msra.mxu0 0.0
        %1332 = vmatpush.msra.mxu0 0.0
        %1333 = vmatpush.msra.mxu0 0.0
        %1334 = vmatpush.msra.mxu0 0.0
        %1335 = vmatpush.msra.mxu0 0.0
        %1336 = vmatpush.msra.mxu0 0.0
        %1337 = vmatpush.msra.mxu0 0.0
        %1338 = vmatpush.msra.mxu0 0.0
        %1339 = vmatpush.msra.mxu0 0.0
        %1340 = vmatpush.msra.mxu0 0.0
        %1341 = vmatpush.msra.mxu0 0.0
        %1342 = vmatpush.msra.mxu0 0.0
        %1343 = vmatpush.msra.mxu0 %v1323
        %1344 = vmatmul.f32.gmra.mxu0 %v1326
        %v1345 = vpop.f32.mrf.mxu0
        %v1346 = vadd.f32 0.0, %v1345
        %1347 = vdwg.mxu0
        %1348 = vrot.lane.b32.xlu0 %v1147, 104
        %v1349 = vpop.permute.xlu0 %1348
        %1350 = vrot.lane.b32.xlu0 %v1147, 72
        %v1351 = vpop.permute.xlu0 %1350
        %v1352 = vsel %vm613, %v1349, 0
        %v1354 = vsel %vm613, %v1351, 0
        %1356 = vmatpush.xpose.msra.mxu0 0.0
        %1357 = vmatpush.xpose.msra.mxu0 0.0
        %1358 = vmatpush.xpose.msra.mxu0 0.0
        %1359 = vmatpush.xpose.msra.mxu0 0.0
        %1360 = vmatpush.xpose.msra.mxu0 0.0
        %1361 = vmatpush.xpose.msra.mxu0 0.0
        %1362 = vmatpush.xpose.msra.mxu0 0.0
        %1363 = vmatpush.xpose.msra.mxu0 0.0
        %1364 = vmatpush.xpose.msra.mxu0 0.0
        %1365 = vmatpush.xpose.msra.mxu0 0.0
        %1366 = vmatpush.xpose.msra.mxu0 0.0
        %1367 = vmatpush.xpose.msra.mxu0 0.0
        %1368 = vmatpush.xpose.msra.mxu0 0.0
        %1369 = vmatpush.xpose.msra.mxu0 0.0
        %1370 = vmatpush.xpose.msra.mxu0 0.0
        %1371 = vmatpush.xpose.msra.mxu0 %v1354
        %1372 = vmatmul.f32.gmra.mxu0 %v1352
        %v1373 = vpop.f32.mrf.mxu0
        %v1374 = vadd.f32 %v1041, %v1373
        %1375 = vdwg.mxu0
        %v1376 = vsel %vm613, %v1374, -inf
        %1377 = vmax.xlane.f32.xlu0 %v1376
        %v1378 = vpop.xlane.xlu0 %1377
        %v1379 = vsub.f32 %v1374, %v1378
        %v1380 = vmul.f32 %v1379, 1.442695
        %v1381 = vpow.pop %v1380
        %v1382 = vsel %vm613, %v1381, 0.0
        %1383 = vadd.xlane.f32.xlu0 %v1382
        %v1384 = vpop.xlane.xlu0 %1383
        %v1385 = vrcp.pop %v1384
        %v1386 = vmul.f32 %v1381, %v1385
        %1387 = vrot.lane.b32.xlu0 %v1147, 40
        %v1388 = vpop.permute.xlu0 %1387
        %v1391 = vsel %vm613, %v1386, 0
        %1393 = vmatpush.msra.mxu0 0.0
        %1394 = vmatpush.msra.mxu0 0.0
        %1395 = vmatpush.msra.mxu0 0.0
        %1396 = vmatpush.msra.mxu0 0.0
        %1397 = vmatpush.msra.mxu0 0.0
        %1398 = vmatpush.msra.mxu0 0.0
        %1399 = vmatpush.msra.mxu0 0.0
        %1400 = vmatpush.msra.mxu0 0.0
        %1401 = vmatpush.msra.mxu0 0.0
        %1402 = vmatpush.msra.mxu0 0.0
        %1403 = vmatpush.msra.mxu0 0.0
        %1404 = vmatpush.msra.mxu0 0.0
        %1405 = vmatpush.msra.mxu0 0.0
        %1406 = vmatpush.msra.mxu0 0.0
        %1407 = vmatpush.msra.mxu0 0.0
        %1408 = vmatpush.msra.mxu0 %v1388
        %1409 = vmatmul.f32.gmra.mxu0 %v1391
        %v1410 = vpop.f32.mrf.mxu0
        %v1411 = vadd.f32 0.0, %v1410
        %1412 = vdwg.mxu0
        %1414 = vrot.lane.b32.xlu0 %v1281, 8
        %v1415 = vpop.permute.xlu0 %1414
        %1418 = vrot.lane.b32.xlu0 %v1346, 16
        %v1419 = vpop.permute.xlu0 %1418
        %1422 = vrot.lane.b32.xlu0 %v1411, 24
        %v1423 = vpop.permute.xlu0 %1422
        %v1425 = vsel %vm613, %v1216, %v1415
        %v1426 = vsel %vm883, %v1425, %v1419
        %v1427 = vsel %vm885, %v1426, %v1423
        %v1429 = vsel %vm514, %v1427, 0
        %1431 = vmatpush.msra.mxu0 0.0
        %1432 = vmatpush.msra.mxu0 0.0
        %1433 = vmatpush.msra.mxu0 0.0
        %1434 = vmatpush.msra.mxu0 0.0
        %1435 = vmatpush.msra.mxu0 0.0
        %1436 = vmatpush.msra.mxu0 0.0
        %1437 = vmatpush.msra.mxu0 0.0
        %1438 = vmatpush.msra.mxu0 0.0
        %1439 = vmatpush.msra.mxu0 0.0
        %1440 = vmatpush.msra.mxu0 0.0
        %1441 = vmatpush.msra.mxu0 0.0
        %1442 = vmatpush.msra.mxu0 0.0
        %1443 = vmatpush.msra.mxu0 %v1153
        %1444 = vmatpush.msra.mxu0 %v1152
        %1445 = vmatpush.msra.mxu0 %v1151
        %1446 = vmatpush.msra.mxu0 %v1150
        %1447 = vmatmul.f32.gmra.mxu0 %v1429
        %v1448 = vpop.f32.mrf.mxu0
        %v1449 = vadd.f32 0.0, %v1448
        %1450 = vdwg.mxu0
        %v1451 = vadd.f32 %v1093, %v1449
        %v1452 = vperm.slane %v459, 7
        %v1453 = vadd.f32 %v1451, %v1452
        %v1454 = vsel %vm514, %v1453, 0.0
        %1455 = vadd.xlane.f32.xlu0 %v1454
        %v1456 = vpop.xlane.xlu0 %1455
        %v1457 = vmul.f32 %v1456, %v524
        %v1458 = vsub.f32 %v1453, %v1457
        %v1459 = vmul.f32 %v1458, %v1458
        %v1460 = vsel %vm514, %v1459, 0.0
        %1461 = vadd.xlane.f32.xlu0 %v1460
        %v1462 = vpop.xlane.xlu0 %1461
        %v1463 = vmul.f32 %v1462, %v524
        %v1464 = vadd.f32 %v1463, 1e-05
        %v1465 = vrsqrt.pop %v1464
        %v1466 = vmul.f32 %v1465, %v1464
        %v1467 = vmul.f32 %v1466, %v1465
        %v1468 = vmul.f32 0.5, %v1467
        %v1469 = vsub.f32 1.5, %v1468
        %v1470 = vmul.f32 %v1465, %v1469
        %vm1471 = vweird.f32 %v1464
        %vm1472 = vweird.f32 %v1465
        %vm1473 = vmor %vm1471, %vm1472
        %v1474 = vsel %vm1473, %v1465, %v1470
        %v1475 = vmul.f32 %v1458, %v1474
        %v1476 = vperm.slane %v458, 2
        %v1477 = vmul.f32 %v1475, %v1476
        %v1478 = vperm.slane %v458, 7
        %v1479 = vadd.f32 %v1477, %v1478
        %s1480 = scalar_lea.vmem %s5, 160
        %v1481 = vld [vmem:[%s1480] sm:$0xff]
        %v1482 = vld [vmem:[%s1480 + $0x8] sm:$0xff]
        %v1483 = vld [vmem:[%s1480 + $0x10] sm:$0xff]
        %v1484 = vld [vmem:[%s1480 + $0x18] sm:$0xff]
        %v1485 = vperm.slane %v460, 0
        %v1487 = vsel %vm514, %v1479, 0
        %1489 = vmatpush.msra.mxu0 0.0
        %1490 = vmatpush.msra.mxu0 0.0
        %1491 = vmatpush.msra.mxu0 0.0
        %1492 = vmatpush.msra.mxu0 0.0
        %1493 = vmatpush.msra.mxu0 0.0
        %1494 = vmatpush.msra.mxu0 0.0
        %1495 = vmatpush.msra.mxu0 0.0
        %1496 = vmatpush.msra.mxu0 0.0
        %1497 = vmatpush.msra.mxu0 0.0
        %1498 = vmatpush.msra.mxu0 0.0
        %1499 = vmatpush.msra.mxu0 0.0
        %1500 = vmatpush.msra.mxu0 0.0
        %1501 = vmatpush.msra.mxu0 %v1484
        %1502 = vmatpush.msra.mxu0 %v1483
        %1503 = vmatpush.msra.mxu0 %v1482
        %1504 = vmatpush.msra.mxu0 %v1481
        %1505 = vmatmul.f32.gmra.mxu0 %v1487
        %v1506 = vpop.f32.mrf.mxu0
        %v1507 = vadd.f32 %v1485, %v1506
        %1508 = vdwg.mxu0
        %s1509 = scalar_lea.vmem %s5, 192
        %v1510 = vld [vmem:[%s1509] sm:$0xff]
        %v1511 = vld [vmem:[%s1509 + $0x8] sm:$0xff]
        %v1512 = vld [vmem:[%s1509 + $0x10] sm:$0xff]
        %v1513 = vld [vmem:[%s1509 + $0x18] sm:$0xff]
        %v1514 = vperm.slane %v460, 1
        %v1516 = vsel %vm514, %v1037, 0
        %1518 = vmatpush.msra.mxu0 0.0
        %1519 = vmatpush.msra.mxu0 0.0
        %1520 = vmatpush.msra.mxu0 0.0
        %1521 = vmatpush.msra.mxu0 0.0
        %1522 = vmatpush.msra.mxu0 0.0
        %1523 = vmatpush.msra.mxu0 0.0
        %1524 = vmatpush.msra.mxu0 0.0
        %1525 = vmatpush.msra.mxu0 0.0
        %1526 = vmatpush.msra.mxu0 0.0
        %1527 = vmatpush.msra.mxu0 0.0
        %1528 = vmatpush.msra.mxu0 0.0
        %1529 = vmatpush.msra.mxu0 0.0
        %1530 = vmatpush.msra.mxu0 %v1513
        %1531 = vmatpush.msra.mxu0 %v1512
        %1532 = vmatpush.msra.mxu0 %v1511
        %1533 = vmatpush.msra.mxu0 %v1510
        %1534 = vmatmul.f32.gmra.mxu0 %v1516
        %v1535 = vpop.f32.mrf.mxu0
        %v1536 = vadd.f32 %v1514, %v1535
        %1537 = vdwg.mxu0
        %s1538 = scalar_lea.vmem %s5, 224
        %v1539 = vld [vmem:[%s1538] sm:$0xff]
        %v1540 = vld [vmem:[%s1538 + $0x8] sm:$0xff]
        %v1541 = vld [vmem:[%s1538 + $0x10] sm:$0xff]
        %v1542 = vld [vmem:[%s1538 + $0x18] sm:$0xff]
        %v1544 = vsel %vm613, %v1507, 0
        %v1547 = vsel %vm613, %v1536, 0
        %1549 = vmatpush.xpose.msra.mxu0 0.0
        %1550 = vmatpush.xpose.msra.mxu0 0.0
        %1551 = vmatpush.xpose.msra.mxu0 0.0
        %1552 = vmatpush.xpose.msra.mxu0 0.0
        %1553 = vmatpush.xpose.msra.mxu0 0.0
        %1554 = vmatpush.xpose.msra.mxu0 0.0
        %1555 = vmatpush.xpose.msra.mxu0 0.0
        %1556 = vmatpush.xpose.msra.mxu0 0.0
        %1557 = vmatpush.xpose.msra.mxu0 0.0
        %1558 = vmatpush.xpose.msra.mxu0 0.0
        %1559 = vmatpush.xpose.msra.mxu0 0.0
        %1560 = vmatpush.xpose.msra.mxu0 0.0
        %1561 = vmatpush.xpose.msra.mxu0 0.0
        %1562 = vmatpush.xpose.msra.mxu0 0.0
        %1563 = vmatpush.xpose.msra.mxu0 0.0
        %1564 = vmatpush.xpose.msra.mxu0 %v1547
        %1565 = vmatmul.f32.gmra.mxu0 %v1544
        %v1566 = vpop.f32.mrf.mxu0
        %v1567 = vadd.f32 %v608, %v1566
        %1568 = vdwg.mxu0
        %v1569 = vsel %vm613, %v1567, -inf
        %1570 = vmax.xlane.f32.xlu0 %v1569
        %v1571 = vpop.xlane.xlu0 %1570
        %v1572 = vsub.f32 %v1567, %v1571
        %v1573 = vmul.f32 %v1572, 1.442695
        %v1574 = vpow.pop %v1573
        %v1575 = vsel %vm613, %v1574, 0.0
        %1576 = vadd.xlane.f32.xlu0 %v1575
        %v1577 = vpop.xlane.xlu0 %1576
        %v1578 = vrcp.pop %v1577
        %v1579 = vmul.f32 %v1574, %v1578
        %1580 = vrot.lane.b32.xlu0 %v1536, 96
        %v1581 = vpop.permute.xlu0 %1580
        %v1584 = vsel %vm613, %v1579, 0
        %1586 = vmatpush.msra.mxu0 0.0
        %1587 = vmatpush.msra.mxu0 0.0
        %1588 = vmatpush.msra.mxu0 0.0
        %1589 = vmatpush.msra.mxu0 0.0
        %1590 = vmatpush.msra.mxu0 0.0
        %1591 = vmatpush.msra.mxu0 0.0
        %1592 = vmatpush.msra.mxu0 0.0
        %1593 = vmatpush.msra.mxu0 0.0
        %1594 = vmatpush.msra.mxu0 0.0
        %1595 = vmatpush.msra.mxu0 0.0
        %1596 = vmatpush.msra.mxu0 0.0
        %1597 = vmatpush.msra.mxu0 0.0
        %1598 = vmatpush.msra.mxu0 0.0
        %1599 = vmatpush.msra.mxu0 0.0
        %1600 = vmatpush.msra.mxu0 0.0
        %1601 = vmatpush.msra.mxu0 %v1581
        %1602 = vmatmul.f32.gmra.mxu0 %v1584
        %v1603 = vpop.f32.mrf.mxu0
        %v1604 = vadd.f32 0.0, %v1603
        %1605 = vdwg.mxu0
        %1606 = vrot.lane.b32.xlu0 %v1507, 120
        %v1607 = vpop.permute.xlu0 %1606
        %1608 = vrot.lane.b32.xlu0 %v1536, 120
        %v1609 = vpop.permute.xlu0 %1608
        %v1610 = vsel %vm613, %v1607, 0
        %v1612 = vsel %vm613, %v1609, 0
        %1614 = vmatpush.xpose.msra.mxu0 0.0
        %1615 = vmatpush.xpose.msra.mxu0 0.0
        %1616 = vmatpush.xpose.msra.mxu0 0.0
        %1617 = vmatpush.xpose.msra.mxu0 0.0
        %1618 = vmatpush.xpose.msra.mxu0 0.0
        %1619 = vmatpush.xpose.msra.mxu0 0.0
        %1620 = vmatpush.xpose.msra.mxu0 0.0
        %1621 = vmatpush.xpose.msra.mxu0 0.0
        %1622 = vmatpush.xpose.msra.mxu0 0.0
        %1623 = vmatpush.xpose.msra.mxu0 0.0
        %1624 = vmatpush.xpose.msra.mxu0 0.0
        %1625 = vmatpush.xpose.msra.mxu0 0.0
        %1626 = vmatpush.xpose.msra.mxu0 0.0
        %1627 = vmatpush.xpose.msra.mxu0 0.0
        %1628 = vmatpush.xpose.msra.mxu0 0.0
        %1629 = vmatpush.xpose.msra.mxu0 %v1612
        %1630 = vmatmul.f32.gmra.mxu0 %v1610
        %v1631 = vpop.f32.mrf.mxu0
        %v1632 = vadd.f32 %v608, %v1631
        %1633 = vdwg.mxu0
        %v1634 = vsel %vm613, %v1632, -inf
        %1635 = vmax.xlane.f32.xlu0 %v1634
        %v1636 = vpop.xlane.xlu0 %1635
        %v1637 = vsub.f32 %v1632, %v1636
        %v1638 = vmul.f32 %v1637, 1.442695
        %v1639 = vpow.pop %v1638
        %v1640 = vsel %vm613, %v1639, 0.0
        %1641 = vadd.xlane.f32.xlu0 %v1640
        %v1642 = vpop.xlane.xlu0 %1641
        %v1643 = vrcp.pop %v1642
        %v1644 = vmul.f32 %v1639, %v1643
        %1645 = vrot.lane.b32.xlu0 %v1536, 88
        %v1646 = vpop.permute.xlu0 %1645
        %v1649 = vsel %vm613, %v1644, 0
        %1651 = vmatpush.msra.mxu0 0.0
        %1652 = vmatpush.msra.mxu0 0.0
        %1653 = vmatpush.msra.mxu0 0.0
        %1654 = vmatpush.msra.mxu0 0.0
        %1655 = vmatpush.msra.mxu0 0.0
        %1656 = vmatpush.msra.mxu0 0.0
        %1657 = vmatpush.msra.mxu0 0.0
        %1658 = vmatpush.msra.mxu0 0.0
        %1659 = vmatpush.msra.mxu0 0.0
        %1660 = vmatpush.msra.mxu0 0.0
        %1661 = vmatpush.msra.mxu0 0.0
        %1662 = vmatpush.msra.mxu0 0.0
        %1663 = vmatpush.msra.mxu0 0.0
        %1664 = vmatpush.msra.mxu0 0.0
        %1665 = vmatpush.msra.mxu0 0.0
        %1666 = vmatpush.msra.mxu0 %v1646
        %1667 = vmatmul.f32.gmra.mxu0 %v1649
        %v1668 = vpop.f32.mrf.mxu0
        %v1669 = vadd.f32 0.0, %v1668
        %1670 = vdwg.mxu0
        %1671 = vrot.lane.b32.xlu0 %v1507, 112
        %v1672 = vpop.permute.xlu0 %1671
        %1673 = vrot.lane.b32.xlu0 %v1536, 112
        %v1674 = vpop.permute.xlu0 %1673
        %v1675 = vsel %vm613, %v1672, 0
        %v1677 = vsel %vm613, %v1674, 0
        %1679 = vmatpush.xpose.msra.mxu0 0.0
        %1680 = vmatpush.xpose.msra.mxu0 0.0
        %1681 = vmatpush.xpose.msra.mxu0 0.0
        %1682 = vmatpush.xpose.msra.mxu0 0.0
        %1683 = vmatpush.xpose.msra.mxu0 0.0
        %1684 = vmatpush.xpose.msra.mxu0 0.0
        %1685 = vmatpush.xpose.msra.mxu0 0.0
        %1686 = vmatpush.xpose.msra.mxu0 0.0
        %1687 = vmatpush.xpose.msra.mxu0 0.0
        %1688 = vmatpush.xpose.msra.mxu0 0.0
        %1689 = vmatpush.xpose.msra.mxu0 0.0
        %1690 = vmatpush.xpose.msra.mxu0 0.0
        %1691 = vmatpush.xpose.msra.mxu0 0.0
        %1692 = vmatpush.xpose.msra.mxu0 0.0
        %1693 = vmatpush.xpose.msra.mxu0 0.0
        %1694 = vmatpush.xpose.msra.mxu0 %v1677
        %1695 = vmatmul.f32.gmra.mxu0 %v1675
        %v1696 = vpop.f32.mrf.mxu0
        %v1697 = vadd.f32 %v608, %v1696
        %1698 = vdwg.mxu0
        %v1699 = vsel %vm613, %v1697, -inf
        %1700 = vmax.xlane.f32.xlu0 %v1699
        %v1701 = vpop.xlane.xlu0 %1700
        %v1702 = vsub.f32 %v1697, %v1701
        %v1703 = vmul.f32 %v1702, 1.442695
        %v1704 = vpow.pop %v1703
        %v1705 = vsel %vm613, %v1704, 0.0
        %1706 = vadd.xlane.f32.xlu0 %v1705
        %v1707 = vpop.xlane.xlu0 %1706
        %v1708 = vrcp.pop %v1707
        %v1709 = vmul.f32 %v1704, %v1708
        %1710 = vrot.lane.b32.xlu0 %v1536, 80
        %v1711 = vpop.permute.xlu0 %1710
        %v1714 = vsel %vm613, %v1709, 0
        %1716 = vmatpush.msra.mxu0 0.0
        %1717 = vmatpush.msra.mxu0 0.0
        %1718 = vmatpush.msra.mxu0 0.0
        %1719 = vmatpush.msra.mxu0 0.0
        %1720 = vmatpush.msra.mxu0 0.0
        %1721 = vmatpush.msra.mxu0 0.0
        %1722 = vmatpush.msra.mxu0 0.0
        %1723 = vmatpush.msra.mxu0 0.0
        %1724 = vmatpush.msra.mxu0 0.0
        %1725 = vmatpush.msra.mxu0 0.0
        %1726 = vmatpush.msra.mxu0 0.0
        %1727 = vmatpush.msra.mxu0 0.0
        %1728 = vmatpush.msra.mxu0 0.0
        %1729 = vmatpush.msra.mxu0 0.0
        %1730 = vmatpush.msra.mxu0 0.0
        %1731 = vmatpush.msra.mxu0 %v1711
        %1732 = vmatmul.f32.gmra.mxu0 %v1714
        %v1733 = vpop.f32.mrf.mxu0
        %v1734 = vadd.f32 0.0, %v1733
        %1735 = vdwg.mxu0
        %1736 = vrot.lane.b32.xlu0 %v1507, 104
        %v1737 = vpop.permute.xlu0 %1736
        %1738 = vrot.lane.b32.xlu0 %v1536, 104
        %v1739 = vpop.permute.xlu0 %1738
        %v1740 = vsel %vm613, %v1737, 0
        %v1742 = vsel %vm613, %v1739, 0
        %1744 = vmatpush.xpose.msra.mxu0 0.0
        %1745 = vmatpush.xpose.msra.mxu0 0.0
        %1746 = vmatpush.xpose.msra.mxu0 0.0
        %1747 = vmatpush.xpose.msra.mxu0 0.0
        %1748 = vmatpush.xpose.msra.mxu0 0.0
        %1749 = vmatpush.xpose.msra.mxu0 0.0
        %1750 = vmatpush.xpose.msra.mxu0 0.0
        %1751 = vmatpush.xpose.msra.mxu0 0.0
        %1752 = vmatpush.xpose.msra.mxu0 0.0
        %1753 = vmatpush.xpose.msra.mxu0 0.0
        %1754 = vmatpush.xpose.msra.mxu0 0.0
        %1755 = vmatpush.xpose.msra.mxu0 0.0
        %1756 = vmatpush.xpose.msra.mxu0 0.0
        %1757 = vmatpush.xpose.msra.mxu0 0.0
        %1758 = vmatpush.xpose.msra.mxu0 0.0
        %1759 = vmatpush.xpose.msra.mxu0 %v1742
        %1760 = vmatmul.f32.gmra.mxu0 %v1740
        %v1761 = vpop.f32.mrf.mxu0
        %v1762 = vadd.f32 %v608, %v1761
        %1763 = vdwg.mxu0
        %v1764 = vsel %vm613, %v1762, -inf
        %1765 = vmax.xlane.f32.xlu0 %v1764
        %v1766 = vpop.xlane.xlu0 %1765
        %v1767 = vsub.f32 %v1762, %v1766
        %v1768 = vmul.f32 %v1767, 1.442695
        %v1769 = vpow.pop %v1768
        %v1770 = vsel %vm613, %v1769, 0.0
        %1771 = vadd.xlane.f32.xlu0 %v1770
        %v1772 = vpop.xlane.xlu0 %1771
        %v1773 = vrcp.pop %v1772
        %v1774 = vmul.f32 %v1769, %v1773
        %1775 = vrot.lane.b32.xlu0 %v1536, 72
        %v1776 = vpop.permute.xlu0 %1775
        %v1779 = vsel %vm613, %v1774, 0
        %1781 = vmatpush.msra.mxu0 0.0
        %1782 = vmatpush.msra.mxu0 0.0
        %1783 = vmatpush.msra.mxu0 0.0
        %1784 = vmatpush.msra.mxu0 0.0
        %1785 = vmatpush.msra.mxu0 0.0
        %1786 = vmatpush.msra.mxu0 0.0
        %1787 = vmatpush.msra.mxu0 0.0
        %1788 = vmatpush.msra.mxu0 0.0
        %1789 = vmatpush.msra.mxu0 0.0
        %1790 = vmatpush.msra.mxu0 0.0
        %1791 = vmatpush.msra.mxu0 0.0
        %1792 = vmatpush.msra.mxu0 0.0
        %1793 = vmatpush.msra.mxu0 0.0
        %1794 = vmatpush.msra.mxu0 0.0
        %1795 = vmatpush.msra.mxu0 0.0
        %1796 = vmatpush.msra.mxu0 %v1776
        %1797 = vmatmul.f32.gmra.mxu0 %v1779
        %v1798 = vpop.f32.mrf.mxu0
        %v1799 = vadd.f32 0.0, %v1798
        %1800 = vdwg.mxu0
        %1802 = vrot.lane.b32.xlu0 %v1669, 8
        %v1803 = vpop.permute.xlu0 %1802
        %1806 = vrot.lane.b32.xlu0 %v1734, 16
        %v1807 = vpop.permute.xlu0 %1806
        %1810 = vrot.lane.b32.xlu0 %v1799, 24
        %v1811 = vpop.permute.xlu0 %1810
        %v1813 = vsel %vm613, %v1604, %v1803
        %v1814 = vsel %vm883, %v1813, %v1807
        %v1815 = vsel %vm885, %v1814, %v1811
        %v1817 = vsel %vm514, %v1815, 0
        %1819 = vmatpush.msra.mxu0 0.0
        %1820 = vmatpush.msra.mxu0 0.0
        %1821 = vmatpush.msra.mxu0 0.0
        %1822 = vmatpush.msra.mxu0 0.0
        %1823 = vmatpush.msra.mxu0 0.0
        %1824 = vmatpush.msra.mxu0 0.0
        %1825 = vmatpush.msra.mxu0 0.0
        %1826 = vmatpush.msra.mxu0 0.0
        %1827 = vmatpush.msra.mxu0 0.0
        %1828 = vmatpush.msra.mxu0 0.0
        %1829 = vmatpush.msra.mxu0 0.0
        %1830 = vmatpush.msra.mxu0 0.0
        %1831 = vmatpush.msra.mxu0 %v1542
        %1832 = vmatpush.msra.mxu0 %v1541
        %1833 = vmatpush.msra.mxu0 %v1540
        %1834 = vmatpush.msra.mxu0 %v1539
        %1835 = vmatmul.f32.gmra.mxu0 %v1817
        %v1836 = vpop.f32.mrf.mxu0
        %v1837 = vadd.f32 0.0, %v1836
        %1838 = vdwg.mxu0
        %v1839 = vadd.f32 %v1453, %v1837
        %v1840 = vperm.slane %v460, 2
        %v1841 = vadd.f32 %v1839, %v1840
        %v1842 = vsel %vm514, %v1841, 0.0
        %1843 = vadd.xlane.f32.xlu0 %v1842
        %v1844 = vpop.xlane.xlu0 %1843
        %v1845 = vmul.f32 %v1844, %v524
        %v1846 = vsub.f32 %v1841, %v1845
        %v1847 = vmul.f32 %v1846, %v1846
        %v1848 = vsel %vm514, %v1847, 0.0
        %1849 = vadd.xlane.f32.xlu0 %v1848
        %v1850 = vpop.xlane.xlu0 %1849
        %v1851 = vmul.f32 %v1850, %v524
        %v1852 = vadd.f32 %v1851, 1e-05
        %v1853 = vrsqrt.pop %v1852
        %v1854 = vmul.f32 %v1853, %v1852
        %v1855 = vmul.f32 %v1854, %v1853
        %v1856 = vmul.f32 0.5, %v1855
        %v1857 = vsub.f32 1.5, %v1856
        %v1858 = vmul.f32 %v1853, %v1857
        %vm1859 = vweird.f32 %v1852
        %vm1860 = vweird.f32 %v1853
        %vm1861 = vmor %vm1859, %vm1860
        %v1862 = vsel %vm1861, %v1853, %v1858
        %v1863 = vmul.f32 %v1846, %v1862
        %v1864 = vperm.slane %v458, 3
        %v1865 = vmul.f32 %v1863, %v1864
        %v1866 = vperm.slane %v459, 0
        %v1867 = vadd.f32 %v1865, %v1866
        %s1868 = scalar_lea.vmem %s5, 256
        %v1869 = vld [vmem:[%s1868] sm:$0xff]
        %v1870 = vld [vmem:[%s1868 + $0x8] sm:$0xff]
        %v1871 = vld [vmem:[%s1868 + $0x10] sm:$0xff]
        %v1872 = vld [vmem:[%s1868 + $0x18] sm:$0xff]
        %v1873 = vperm.slane %v460, 3
        %v1875 = vsel %vm514, %v1867, 0
        %1877 = vmatpush.msra.mxu0 0.0
        %1878 = vmatpush.msra.mxu0 0.0
        %1879 = vmatpush.msra.mxu0 0.0
        %1880 = vmatpush.msra.mxu0 0.0
        %1881 = vmatpush.msra.mxu0 0.0
        %1882 = vmatpush.msra.mxu0 0.0
        %1883 = vmatpush.msra.mxu0 0.0
        %1884 = vmatpush.msra.mxu0 0.0
        %1885 = vmatpush.msra.mxu0 0.0
        %1886 = vmatpush.msra.mxu0 0.0
        %1887 = vmatpush.msra.mxu0 0.0
        %1888 = vmatpush.msra.mxu0 0.0
        %1889 = vmatpush.msra.mxu0 %v1872
        %1890 = vmatpush.msra.mxu0 %v1871
        %1891 = vmatpush.msra.mxu0 %v1870
        %1892 = vmatpush.msra.mxu0 %v1869
        %1893 = vmatmul.f32.gmra.mxu0 %v1875
        %v1894 = vpop.f32.mrf.mxu0
        %v1895 = vadd.f32 %v1873, %v1894
        %1896 = vdwg.mxu0
        %v1897 = vmul.f32 %v1895, %v1895
        %v1898 = vmul.f32 %v1895, %v1897
        %v1899 = vmul.f32 %v1898, 0.044715
        %v1900 = vadd.f32 %v1895, %v1899
        %v1901 = vmul.f32 %v1900, 0.7978846
        %v1902 = vtanh.pop %v1901
        %v1903 = vadd.f32 %v1902, 1.0
        %v1904 = vmul.f32 %v1903, 0.5
        %v1905 = vmul.f32 %v1895, %v1904
        %s1906 = scalar_lea.vmem %s6, 64
        %v1907 = vld [vmem:[%s1906] sm:$0xff]
        %v1908 = vld [vmem:[%s1906 + $0x8] sm:$0xff]
        %v1909 = vld [vmem:[%s1906 + $0x10] sm:$0xff]
        %v1910 = vld [vmem:[%s1906 + $0x18] sm:$0xff]
        %v1911 = vld [vmem:[%s1906 + $0x20] sm:$0xff]
        %v1912 = vld [vmem:[%s1906 + $0x28] sm:$0xff]
        %v1913 = vld [vmem:[%s1906 + $0x30] sm:$0xff]
        %v1914 = vld [vmem:[%s1906 + $0x38] sm:$0xff]
        %v1916 = vsel %vm985, %v1905, 0
        %1918 = vmatpush.msra.mxu0 0.0
        %1919 = vmatpush.msra.mxu0 0.0
        %1920 = vmatpush.msra.mxu0 0.0
        %1921 = vmatpush.msra.mxu0 0.0
        %1922 = vmatpush.msra.mxu0 0.0
        %1923 = vmatpush.msra.mxu0 0.0
        %1924 = vmatpush.msra.mxu0 0.0
        %1925 = vmatpush.msra.mxu0 0.0
        %1926 = vmatpush.msra.mxu0 %v1914
        %1927 = vmatpush.msra.mxu0 %v1913
        %1928 = vmatpush.msra.mxu0 %v1912
        %1929 = vmatpush.msra.mxu0 %v1911
        %1930 = vmatpush.msra.mxu0 %v1910
        %1931 = vmatpush.msra.mxu0 %v1909
        %1932 = vmatpush.msra.mxu0 %v1908
        %1933 = vmatpush.msra.mxu0 %v1907
        %1934 = vmatmul.f32.gmra.mxu0 %v1916
        %v1935 = vpop.f32.mrf.mxu0
        %v1936 = vadd.f32 0.0, %v1935
        %1937 = vdwg.mxu0
        %v1938 = vadd.f32 %v1841, %v1936
        %v1939 = vperm.slane %v460, 4
        %v1940 = vadd.f32 %v1938, %v1939
        %v1941 = vsel %vm514, %v1940, 0.0
        %1942 = vadd.xlane.f32.xlu0 %v1941
        %v1943 = vpop.xlane.xlu0 %1942
        %v1944 = vmul.f32 %v1943, %v524
        %v1945 = vsub.f32 %v1940, %v1944
        %v1946 = vmul.f32 %v1945, %v1945
        %v1947 = vsel %vm514, %v1946, 0.0
        %1948 = vadd.xlane.f32.xlu0 %v1947
        %v1949 = vpop.xlane.xlu0 %1948
        %v1950 = vmul.f32 %v1949, %v524
        %v1951 = vadd.f32 %v1950, 1e-05
        %v1952 = vrsqrt.pop %v1951
        %v1953 = vmul.f32 %v1952, %v1951
        %v1954 = vmul.f32 %v1953, %v1952
        %v1955 = vmul.f32 0.5, %v1954
        %v1956 = vsub.f32 1.5, %v1955
        %v1957 = vmul.f32 %v1952, %v1956
        %vm1958 = vweird.f32 %v1951
        %vm1959 = vweird.f32 %v1952
        %vm1960 = vmor %vm1958, %vm1959
        %v1961 = vsel %vm1960, %v1952, %v1957
        %v1962 = vmul.f32 %v1945, %v1961
        %v1963 = vperm.slane %v458, 4
        %v1964 = vmul.f32 %v1962, %v1963
        %v1965 = vperm.slane %v459, 1
        %v1966 = vadd.f32 %v1964, %v1965
        %s1967 = scalar_lea.vmem %s5, 288
        %v1968 = vld [vmem:[%s1967] sm:$0xff]
        %v1969 = vld [vmem:[%s1967 + $0x8] sm:$0xff]
        %v1970 = vld [vmem:[%s1967 + $0x10] sm:$0xff]
        %v1971 = vld [vmem:[%s1967 + $0x18] sm:$0xff]
        %v1972 = vperm.slane %v460, 5
        %v1974 = vsel %vm514, %v1966, 0
        %1976 = vmatpush.msra.mxu0 0.0
        %1977 = vmatpush.msra.mxu0 0.0
        %1978 = vmatpush.msra.mxu0 0.0
        %1979 = vmatpush.msra.mxu0 0.0
        %1980 = vmatpush.msra.mxu0 0.0
        %1981 = vmatpush.msra.mxu0 0.0
        %1982 = vmatpush.msra.mxu0 0.0
        %1983 = vmatpush.msra.mxu0 0.0
        %1984 = vmatpush.msra.mxu0 0.0
        %1985 = vmatpush.msra.mxu0 0.0
        %1986 = vmatpush.msra.mxu0 0.0
        %1987 = vmatpush.msra.mxu0 0.0
        %1988 = vmatpush.msra.mxu0 %v1971
        %1989 = vmatpush.msra.mxu0 %v1970
        %1990 = vmatpush.msra.mxu0 %v1969
        %1991 = vmatpush.msra.mxu0 %v1968
        %1992 = vmatmul.f32.gmra.mxu0 %v1974
        %v1993 = vpop.f32.mrf.mxu0
        %v1994 = vadd.f32 %v1972, %v1993
        %1995 = vdwg.mxu0
        %1996 = vst [vmem:[%s415] sm:$0xff] %v1994
        %1997 = vmax.xlane.f32.xlu0 %v1994
        %v1998 = vpop.xlane.xlu0 %1997
        %vm1999 = vcmp.eq.f32.partialorder %v1994, %v1998
        %v2000 = vsel %vm1999, %v464, 128
        %v2001 = vand.u32 %v2000, 65535
        %v2002 = vshra.s32 %v2000, 16
        %v2003 = vcvt.s32.f32 %v2001
        %v2004 = vcvt.s32.f32 %v2002
        %2005 = vmin.xlane.f32.xlu0 %v2004
        %v2006 = vpop.xlane.xlu0 %2005
        %vm2007 = vcmp.eq.f32.partialorder %v2004, %v2006
        %v2008 = vsel %vm2007, %v2003, inf
        %2009 = vmin.xlane.f32.xlu0 %v2008
        %v2010 = vpop.xlane.xlu0 %2009
        %v2011 = vcvt.f32.s32 %v2010
        %v2012 = vcvt.f32.s32 %v2006
        %v2013 = vshll.u32 %v2012, 16
        %v2014 = vadd.s32 %v2013, %v2011
        %vm2015 = vcmask 7168
        %2016 = vst.msk [vmem:[%s450] sm:$0xff] %vm2015, %v2014
        %v2017 = vld [vmem:[%s443] sm:$0xff]
        %v2018 = vsub.f32 %v1994, %v1998
        %v2019 = vmul.f32 %v2018, 1.442695
        %v2020 = vpow.pop %v2019
        %2021 = vadd.xlane.f32.xlu0 %v2020
        %v2022 = vpop.xlane.xlu0 %2021
        %v2023 = vlog2.pop %v2022
        %v2024 = vmul.f32 %v2023, 0.6931472
        %v2025 = vadd.f32 %v1998, %v2024
        %vm2026 = vcmp.ne.s32.totalorder %v2017, 4294967196
        %v2027 = vsel %vm2026, %v2017, 0
        %2028 = vset.pattern.permute.xlu0 0
        %2029 = vperm.xlu0 %2028, %v2027
        %v2030 = vpop.permute.xlu0 %2029
        %vm2031 = vcmp.eq.s32.totalorder %v464, %v2030
        %v2032 = vsel %vm2031, %v1994, 0.0
        %2033 = vadd.xlane.f32.xlu0 %v2032
        %v2034 = vpop.xlane.xlu0 %2033
        %v2035 = vsub.f32 %v2025, %v2034
        %v2036 = vsel %vm2026, %v2035, 0.0
        %v2037 = vsel %vm2015, %v2036, 0.0
        %v2038 = vrot.slane %v2037, 4
        %v2039 = vadd.f32 %v2037, %v2038
        %v2040 = vrot.slane %v2039, 2
        %v2041 = vadd.f32 %v2039, %v2040
        %v2042 = vrot.slane %v2041, 1
        %v2043 = vadd.f32 %v2041, %v2042
        %vm2044 = vcmask 0
        %2045 = vst.msk [vmem:[%s453] sm:$0x1] %vm2044, %v2043
        %v2046 = vsel %vm2026, 1, 0
        %v2047 = vcvt.s32.f32 %v2046
        %v2048 = vsel %vm2015, %v2047, 0.0
        %v2049 = vrot.slane %v2048, 4
        %v2050 = vadd.f32 %v2048, %v2049
        %v2051 = vrot.slane %v2050, 2
        %v2052 = vadd.f32 %v2050, %v2051
        %v2053 = vrot.slane %v2052, 1
        %v2054 = vadd.f32 %v2052, %v2053
        %2055 = vst.msk [vmem:[%s456] sm:$0x1] %vm2044, %v2054
        %s2056 = sand.u32 %s222, 1
        %s2057 = scalar_lea.sflag [#allocation3], %s2056
        %s2058 = sand.u32 %s222, 1
        %s2059 = smul.addr %s2058, 8
        %s2060 = scalar_lea.vmem [#allocation2], %s2059
        %p2061 = scmp.lt.s32.totalorder %s26, 1
        %s2062 = scalar_select %p2061, %s26, 1
        %s2063 = smul.addr %s2062, 8
        %s2064 = scalar_lea.vmem %s9, %s2063
        %p2065 = scmp.lt.s32.totalorder %s26, 1
        %s2066 = scalar_select %p2065, %s26, 1
        %s2067 = scalar_lea.vmem %s10, %s2066
        %p2068 = scmp.lt.s32.totalorder %s26, 1
        %s2069 = scalar_select %p2068, %s26, 1
        %s2070 = scalar_lea.vmem %s11, %s2069
        // Predicated region
        $region53: #{transformer_with_tr_forward.1} parent=51 // pred_check
          %p2071 = pneg %p232
        $region54: #{transformer_with_tr_forward.1} parent=51 // pred_check_branch
          %2073 = sbr.rel (%p2071) target = $region56
        $region55: #{transformer_with_tr_forward.1} parent=51 // pred_region
          %2075 = vsyncadd %s2057, 0
          %s2076 = smul.addr %s26, 8
          %s2077 = scalar_lea.hbm %s8, %s2076
          %s2079 = sshll.u32 %s2060, 4
          %s2080 = int_to_ptr.vmem [resolvable:$true] %s2079
          %s2081 = sshll.u32 %s2077, 4
          %s2082 = int_to_ptr.hbm [resolvable:$true] %s2081
          %2084 = dma.vmem_to_hbm [thread:$0]  %s2080, 128, %s2082, %s2057
        $region56: #{transformer_with_tr_forward.1} parent=51 // pred_fallthru
          _
        // Predicated region
        $region57: #{transformer_with_tr_forward.1} parent=51 // pred_check
          %p2085 = pneg %p258
        $region58: #{transformer_with_tr_forward.1} parent=51 // pred_check_branch
          %2087 = sbr.rel (%p2085) target = $region60
        $region59: #{transformer_with_tr_forward.1} parent=51 // pred_region
          _
        $region60: #{transformer_with_tr_forward.1} parent=51 // pred_fallthru
          _
        // Predicated region
        $region61: #{transformer_with_tr_forward.1} parent=51 // pred_check
          %p2088 = pneg %p284
        $region62: #{transformer_with_tr_forward.1} parent=51 // pred_check_branch
          %2090 = sbr.rel (%p2088) target = $region64
        $region63: #{transformer_with_tr_forward.1} parent=51 // pred_region
          _
        $region64: #{transformer_with_tr_forward.1} parent=51 // pred_fallthru
          _
        // Predicated region
        $region65: #{transformer_with_tr_forward.1} parent=51 // pred_check
          %p2091 = pneg %p310
        $region66: #{transformer_with_tr_forward.1} parent=51 // pred_check_branch
          %2093 = sbr.rel (%p2091) target = $region68
        $region67: #{transformer_with_tr_forward.1} parent=51 // pred_region
          _
        $region68: #{transformer_with_tr_forward.1} parent=51 // pred_fallthru
          _
      $region52: #{transformer_with_tr_forward.1} parent=5 // pred_fallthru
        _
      %p2094 = scmp.le.s32.totalorder 2, %s21
      // Predicated region
      $region69: #{transformer_with_tr_forward.1} parent=5 // pred_check
        %p2095 = pneg %p2094
      $region70: #{transformer_with_tr_forward.1} parent=5 // pred_check_branch
        %2097 = sbr.rel (%p2095) target = $region72
      $region71: #{transformer_with_tr_forward.1} parent=5 // pred_region
        %s2098 = ssub.s32 %s21, 2
        // Predicated region
        $region73: #{transformer_with_tr_forward.1} parent=71 // pred_check
          %p2099 = pneg %p238
        $region74: #{transformer_with_tr_forward.1} parent=71 // pred_check_branch
          %2101 = sbr.rel (%p2099) target = $region76
        $region75: #{transformer_with_tr_forward.1} parent=71 // pred_region
          %s2102 = sand.u32 %s223, 1
          %s2103 = scalar_lea.sflag [#allocation3], %s2102
          %s2104 = sand.u32 %s223, 1
          %s2105 = smul.addr %s2104, 8
          %s2106 = scalar_lea.vmem [#allocation2], %s2105
          %2108 = dma.done %s2103, 128
        $region76: #{transformer_with_tr_forward.1} parent=71 // pred_fallthru
          _
        // Predicated region
        $region77: #{transformer_with_tr_forward.1} parent=71 // pred_check
          %p2109 = pneg %p264
        $region78: #{transformer_with_tr_forward.1} parent=71 // pred_check_branch
          %2111 = sbr.rel (%p2109) target = $region80
        $region79: #{transformer_with_tr_forward.1} parent=71 // pred_region
          %p2112 = scmp.lt.s32.totalorder %s27, 1
          %s2113 = scalar_select %p2112, %s27, 1
          %s2114 = smul.addr %s2113, 8
          %s2115 = scalar_lea.vmem %s9, %s2114
        $region80: #{transformer_with_tr_forward.1} parent=71 // pred_fallthru
          _
        // Predicated region
        $region81: #{transformer_with_tr_forward.1} parent=71 // pred_check
          %p2116 = pneg %p290
        $region82: #{transformer_with_tr_forward.1} parent=71 // pred_check_branch
          %2118 = sbr.rel (%p2116) target = $region84
        $region83: #{transformer_with_tr_forward.1} parent=71 // pred_region
          %p2119 = scmp.lt.s32.totalorder %s27, 1
          %s2120 = scalar_select %p2119, %s27, 1
          %s2121 = scalar_lea.vmem %s10, %s2120
        $region84: #{transformer_with_tr_forward.1} parent=71 // pred_fallthru
          _
        // Predicated region
        $region85: #{transformer_with_tr_forward.1} parent=71 // pred_check
          %p2122 = pneg %p316
        $region86: #{transformer_with_tr_forward.1} parent=71 // pred_check_branch
          %2124 = sbr.rel (%p2122) target = $region88
        $region87: #{transformer_with_tr_forward.1} parent=71 // pred_region
          %p2125 = scmp.lt.s32.totalorder %s27, 1
          %s2126 = scalar_select %p2125, %s27, 1
          %s2127 = scalar_lea.vmem %s11, %s2126
        $region88: #{transformer_with_tr_forward.1} parent=71 // pred_fallthru
          _
      $region72: #{transformer_with_tr_forward.1} parent=5 // pred_fallthru
        _
    $region6: #{transformer_with_tr_forward.1} parent=1 // loop_footer
      %s25 = sadd.s32 1, %s21
    $region7: #{transformer_with_tr_forward.1} parent=1 // loop_footer_branch
      %20 = sbr.rel target = $region3
    $region8: #{transformer_with_tr_forward.1} parent=1 // loop_exit
      _
    %2128 = vsyncpa [#allocation3], 1
    %s2129 = scalar_lea.sflag [#allocation3], 1
    %2130 = vsyncpa %s2129, 1

</llo_original>
